<compile_context>
chip_gen: v7x
topology: tpu7x:2x2x1
jax: 0.10.0
libtpu: 0.0.40
codegen_flags: <defaults>
</compile_context>

<pallas_src>
import functools

import jax
import jax.numpy as jnp
from jax import lax
from jax.experimental import pallas as pl
from jax.experimental.pallas import tpu as pltpu

_VMEM_LIMIT = 48 * 1024 * 1024   # above the 16/32 MiB scoped default, safe on v7x


def _compiler_params(dimension_semantics):
    return pltpu.CompilerParams(dimension_semantics=dimension_semantics,
                                vmem_limit_bytes=_VMEM_LIMIT)


# ------------------------------ tiling helper ------------------------------

def _pick_tile(dim, pref, align):
    """Largest multiple of `align` that is <= pref and divides `dim`, else full dim."""
    if dim <= pref or dim % align != 0:
        return dim
    t = (pref // align) * align
    while t >= align:
        if dim % t == 0:
            return t
        t -= align
    return dim


# ----------------- kernel 1: fused QKV projection (matmul+bias) -------------

def _matmul_bias_kernel(x_ref, w_ref, b_ref, o_ref, acc_ref):
    @pl.when(pl.program_id(2) == 0)
    def _():
        acc_ref[...] = jnp.zeros_like(acc_ref)

    # bf16 MXU operands, f32 accumulation.
    acc_ref[...] += jnp.dot(x_ref[...].astype(jnp.bfloat16),
                            w_ref[...].astype(jnp.bfloat16),
                            preferred_element_type=jnp.float32)

    @pl.when(pl.program_id(2) == pl.num_programs(2) - 1)
    def _():
        o_ref[...] = (acc_ref[...] + b_ref[...]).astype(o_ref.dtype)


def linear_pallas(x, w, b, *, bm=None, bn=None, bk=None):
    M, K = x.shape
    N = w.shape[1]
    bm = bm or _pick_tile(M, 512, 16)
    bn = bn or _pick_tile(N, 1024, 128)
    bk = bk or _pick_tile(K, 512, 128)
    assert M % bm == 0 and N % bn == 0 and K % bk == 0
    grid = (pl.cdiv(M, bm), pl.cdiv(N, bn), pl.cdiv(K, bk))
    return pl.pallas_call(
        _matmul_bias_kernel,
        out_shape=jax.ShapeDtypeStruct((M, N), jnp.float32),
        grid_spec=pltpu.PrefetchScalarGridSpec(
            num_scalar_prefetch=0,
            grid=grid,
            in_specs=[
                pl.BlockSpec((bm, bk), lambda i, j, k: (i, k)),
                pl.BlockSpec((bk, bn), lambda i, j, k: (k, j)),
                pl.BlockSpec((1, bn), lambda i, j, k: (0, j)),
            ],
            out_specs=pl.BlockSpec((bm, bn), lambda i, j, k: (i, j)),
            scratch_shapes=[pltpu.VMEM((bm, bn), jnp.float32)],
        ),
        compiler_params=_compiler_params(("parallel", "parallel", "arbitrary")),
    )(x, w, b)


# --- kernel 2: flash attention + out-projection + residual + LayerNorm0 -----

def _attn_block_kernel(q_ref, k_ref, v_ref, mask_ref, r_ref, wo_ref, bo_ref,
                       g_ref, beta_ref, o_ref,
                       qh_sc, m_sc, l_sc, acc_sc, *, num_heads, eps):
    kv = pl.program_id(2)
    H = num_heads
    tq, E = q_ref.shape
    tk = k_ref.shape[0]
    Dh = E // H

    @pl.when(kv == 0)
    def _():
        m_sc[...] = jnp.full(m_sc.shape, -jnp.inf, jnp.float32)
        l_sc[...] = jnp.zeros(l_sc.shape, jnp.float32)
        acc_sc[...] = jnp.zeros(acc_sc.shape, jnp.float32)
        # Hoist the head-split relayout of the resident q tile out of the kv
        # loop: done once per q tile, stored as bf16 (MXU-native).
        qh_sc[...] = q_ref[...].reshape(tq, H, Dh).astype(jnp.bfloat16)

    k = k_ref[...].reshape(tk, H, Dh).astype(jnp.bfloat16)
    v = v_ref[...].reshape(tk, H, Dh).astype(jnp.bfloat16)

    # Per-head scores (H, tq, tk); 1/sqrt(Dh) already folded into the q weights.
    s = jnp.einsum("qhd,khd->hqk", qh_sc[...], k,
                   preferred_element_type=jnp.float32)
    s = s + mask_ref[...]                      # additive 0 / -1e30 key-padding mask

    m_prev = m_sc[...]
    m_new = jnp.maximum(m_prev, jnp.max(s, axis=-1, keepdims=True))
    alpha = jnp.exp(m_prev - m_new)
    p = jnp.exp(s - m_new)                     # f32 (safe on v5e; stats stay f32)
    l_sc[...] = alpha * l_sc[...] + jnp.sum(p, axis=-1, keepdims=True)
    acc_sc[...] = alpha * acc_sc[...] + jnp.einsum(
        "hqk,khd->hqd", p.astype(jnp.bfloat16), v,
        preferred_element_type=jnp.float32)
    m_sc[...] = m_new

    @pl.when(kv == pl.num_programs(2) - 1)
    def _():
        l = l_sc[...]
        inv = pl.reciprocal(l, approx=True)    # EUP fast path ...
        inv = inv * (2.0 - l * inv)            # ... + one Newton step for f32 accuracy
        # Fused out-projection (per-head slices of the resident bf16 w_out),
        # residual add and LayerNorm0 — no HBM round-trip of the attention
        # activation and no (H, tq, Dh) -> (tq, E) transpose.
        y = bo_ref[...] + r_ref[...].astype(jnp.float32)        # (tq, E)
        for h in range(H):                                       # static loop
            ah = (acc_sc[h] * inv[h]).astype(jnp.bfloat16)       # (tq, Dh)
            y = y + jnp.dot(ah, wo_ref[h * Dh:(h + 1) * Dh, :],
                            preferred_element_type=jnp.float32)
        mu = jnp.mean(y, axis=-1, keepdims=True)
        var = jnp.mean(jnp.square(y - mu), axis=-1, keepdims=True)
        yn = (y - mu) * lax.rsqrt(var + eps)
        o_ref[...] = (yn * g_ref[...] + beta_ref[...]).astype(o_ref.dtype)


def attention_block_pallas(qkv, residual, add_mask, w_out, b_out, gamma, beta,
                           *, num_heads, seq_len, eps=1e-5, bq=None, bkv=None):
    """qkv: (B*T, 3E) b-major rows; residual: (B*T, E); add_mask: (B, 1, T)."""
    M, threeE = qkv.shape
    E = threeE // 3
    T = seq_len
    B = M // T
    assert M == B * T and E % num_heads == 0
    Dh = E // num_heads
    bq = bq or _pick_tile(T, 256, 16)
    bkv = bkv or _pick_tile(T, 512, 128)
    assert T % bq == 0 and T % bkv == 0
    nq, nkv = T // bq, T // bkv
    grid = (B, nq, nkv)
    return pl.pallas_call(
        functools.partial(_attn_block_kernel, num_heads=num_heads, eps=eps),
        out_shape=jax.ShapeDtypeStruct((M, E), jnp.float32),
        grid_spec=pltpu.PrefetchScalarGridSpec(
            num_scalar_prefetch=0,
            grid=grid,
            in_specs=[
                # q / k / v are column slices of the fused (M, 3E) projection.
                pl.BlockSpec((bq, E), lambda b, qi, ki: (b * nq + qi, 0)),
                pl.BlockSpec((bkv, E), lambda b, qi, ki: (b * nkv + ki, 1)),
                pl.BlockSpec((bkv, E), lambda b, qi, ki: (b * nkv + ki, 2)),
                pl.BlockSpec((1, 1, bkv), lambda b, qi, ki: (b, 0, ki)),
                pl.BlockSpec((bq, E), lambda b, qi, ki: (b * nq + qi, 0)),   # residual
                pl.BlockSpec((E, E), lambda b, qi, ki: (0, 0)),              # w_out (resident)
                pl.BlockSpec((1, E), lambda b, qi, ki: (0, 0)),
                pl.BlockSpec((1, E), lambda b, qi, ki: (0, 0)),
                pl.BlockSpec((1, E), lambda b, qi, ki: (0, 0)),
            ],
            out_specs=pl.BlockSpec((bq, E), lambda b, qi, ki: (b * nq + qi, 0)),
            scratch_shapes=[
                pltpu.VMEM((bq, num_heads, Dh), jnp.bfloat16),   # hoisted q heads
                pltpu.VMEM((num_heads, bq, 1), jnp.float32),     # m
                pltpu.VMEM((num_heads, bq, 1), jnp.float32),     # l
                pltpu.VMEM((num_heads, bq, Dh), jnp.float32),    # acc
            ],
        ),
        compiler_params=_compiler_params(("parallel", "parallel", "arbitrary")),
    )(qkv, qkv, qkv, add_mask, residual, w_out, b_out, gamma, beta)


# ------- kernel 3: fc1 + ReLU + fc2 + residual + LayerNorm (fused FFN) -------

def _ffn_kernel(y_ref, w1_ref, b1_ref, w2_ref, b2_ref, g_ref, beta_ref,
                o_ref, acc_ref, *, eps):
    f = pl.program_id(1)

    @pl.when(f == 0)
    def _():
        acc_ref[...] = jnp.zeros_like(acc_ref)

    # Hidden (bm, bf) tile lives only in VMEM/registers: no HBM round-trip of
    # the F-wide activation between fc1 and fc2.  bf16 MXU operands throughout.
    h = jnp.dot(y_ref[...].astype(jnp.bfloat16), w1_ref[...].astype(jnp.bfloat16),
                preferred_element_type=jnp.float32) + b1_ref[...]
    h = jnp.maximum(h, 0.0)
    acc_ref[...] += jnp.dot(h.astype(jnp.bfloat16), w2_ref[...].astype(jnp.bfloat16),
                            preferred_element_type=jnp.float32)

    @pl.when(f == pl.num_programs(1) - 1)
    def _():
        y = acc_ref[...] + b2_ref[...] + y_ref[...].astype(jnp.float32)
        mu = jnp.mean(y, axis=-1, keepdims=True)
        var = jnp.mean(jnp.square(y - mu), axis=-1, keepdims=True)
        yn = (y - mu) * lax.rsqrt(var + eps)
        o_ref[...] = (yn * g_ref[...] + beta_ref[...]).astype(o_ref.dtype)


def ffn_residual_ln_pallas(y, w1, b1, w2, b2, gamma, beta, *,
                           eps=1e-5, bm=None, bf=None):
    M, E = y.shape
    F = w1.shape[1]
    bm = bm or _pick_tile(M, 256, 16)   # keep bm modest: the (bm, bf) hidden tile scales VMEM
    bf = bf or _pick_tile(F, 512, 128)
    assert M % bm == 0 and F % bf == 0
    grid = (pl.cdiv(M, bm), pl.cdiv(F, bf))
    return pl.pallas_call(
        functools.partial(_ffn_kernel, eps=eps),
        out_shape=jax.ShapeDtypeStruct((M, E), jnp.float32),
        grid_spec=pltpu.PrefetchScalarGridSpec(
            num_scalar_prefetch=0,
            grid=grid,
            in_specs=[
                pl.BlockSpec((bm, E), lambda i, f: (i, 0)),
                pl.BlockSpec((E, bf), lambda i, f: (0, f)),
                pl.BlockSpec((1, bf), lambda i, f: (0, f)),
                pl.BlockSpec((bf, E), lambda i, f: (f, 0)),
                pl.BlockSpec((1, E), lambda i, f: (0, 0)),
                pl.BlockSpec((1, E), lambda i, f: (0, 0)),
                pl.BlockSpec((1, E), lambda i, f: (0, 0)),
            ],
            out_specs=pl.BlockSpec((bm, E), lambda i, f: (i, 0)),
            scratch_shapes=[pltpu.VMEM((bm, E), jnp.float32)],
        ),
        compiler_params=_compiler_params(("parallel", "arbitrary")),
    )(y, w1, b1, w2, b2, gamma, beta)


# ------------------------------ layer forward -------------------------------

def transformer_encoder_layer(x, encoder_padding_mask, params, num_heads,
                              blocks=None):
    """x: (T, B, E); encoder_padding_mask: (B, T) with 1 at padded keys."""
    blocks = blocks or {}
    T, B, E = x.shape

    # Weights pre-cast ONCE to the MXU-native dtype (halves weight HBM traffic).
    w_qkv = params["w_qkv"].astype(jnp.bfloat16)
    w_out = params["w_out"].astype(jnp.bfloat16)
    w_fc1 = params["w_fc1"].astype(jnp.bfloat16)
    w_fc2 = params["w_fc2"].astype(jnp.bfloat16)

    # (T, B, E) -> (B*T, E): per-batch attention slabs become contiguous and
    # lane-dense.  TODO(synk): fold this relayout (and the inverse at the end)
    # into the QKV / FFN BlockSpec index maps to drop two XLA transposes.
    xf = jnp.transpose(x, (1, 0, 2)).reshape(B * T, E)

    # --- fused Q/K/V projection: one pass over xf, 3E-wide MXU N dimension ---
    qkv = linear_pallas(xf, w_qkv, params["b_qkv"],
                        bm=blocks.get("bm"), bn=blocks.get("bn"),
                        bk=blocks.get("bk"))                          # (B*T, 3E)

    # Additive key-padding mask: 0 for valid keys, -1e30 for padded (finite, so
    # fully-padded rows never produce NaN like -inf masking would).
    # NOTE: rows with length 0 produce finite garbage instead of PyTorch's NaN.
    add_mask = jnp.where(encoder_padding_mask.astype(bool), -1e30, 0.0)
    add_mask = add_mask.astype(jnp.float32)[:, None, :]               # (B, 1, T)

    # --- flash attention + out-proj + residual + LayerNorm0, fully fused ---
    y = attention_block_pallas(qkv, xf, add_mask, w_out, params["b_out"],
                               params["ln0_g"], params["ln0_b"],
                               num_heads=num_heads, seq_len=T,
                               bq=blocks.get("bq"), bkv=blocks.get("bkv"))

    # --- fc1 + ReLU + fc2 + residual + LayerNorm1, hidden kept in VMEM ---
    out = ffn_residual_ln_pallas(y, w_fc1, params["b_fc1"],
                                 w_fc2, params["b_fc2"],
                                 params["ln1_g"], params["ln1_b"],
                                 bm=blocks.get("bm_ffn"), bf=blocks.get("bf"))

    out = jnp.transpose(out.reshape(B, T, E), (1, 0, 2))              # back to (T, B, E)
    # TODO(synk): training-mode dropout and need_attn attention-weight return
    # are not implemented (module defaults: eval mode, need_attn=False).
    return out, None


# --------------------------- params & pure-JAX ref ---------------------------

def _xavier_uniform(key, fan_in, fan_out):
    limit = (6.0 / (fan_in + fan_out)) ** 0.5
    return jax.random.uniform(key, (fan_in, fan_out), jnp.float32, -limit, limit)


def init_params(key, E, F, num_heads):
    Dh = E // num_heads
    scaling = float(Dh) ** -0.5
    ks = jax.random.split(key, 6)
    z = lambda n: jnp.zeros((1, n), jnp.float32)
    # attention 1/sqrt(Dh) constant-folded into the q projection weights/bias
    w_q = _xavier_uniform(ks[0], E, E) * scaling
    w_k = _xavier_uniform(ks[1], E, E)
    w_v = _xavier_uniform(ks[2], E, E)
    return dict(
        w_qkv=jnp.concatenate([w_q, w_k, w_v], axis=1),   # fused (E, 3E)
        b_qkv=jnp.zeros((1, 3 * E), jnp.float32),          # q bias scaling is moot (zeros)
        w_out=_xavier_uniform(ks[3], E, E), b_out=z(E),
        w_fc1=_xavier_uniform(ks[4], E, F), b_fc1=z(F),
        w_fc2=_xavier_uniform(ks[5], F, E), b_fc2=z(E),
        ln0_g=jnp.ones((1, E), jnp.float32), ln0_b=z(E),
        ln1_g=jnp.ones((1, E), jnp.float32), ln1_b=z(E),
    )


def reference_forward(x, pad_mask, params, num_heads):
    """Pure-JAX mirror of the PyTorch forward (eval mode, post-norm), using the
    same bf16-operand / f32-accumulate matmul convention as the kernels."""
    bf16 = jnp.bfloat16

    def mdot(a, b):
        return jnp.dot(a.astype(bf16), b.astype(bf16),
                       preferred_element_type=jnp.float32)

    T, B, E = x.shape
    H = num_heads
    Dh = E // H
    xf = jnp.transpose(x, (1, 0, 2)).reshape(B * T, E)    # (B*T, E), b-major
    qkv = mdot(xf, params["w_qkv"]) + params["b_qkv"]
    q, k, v = qkv[:, :E], qkv[:, E:2 * E], qkv[:, 2 * E:]

    def heads(z):                                          # (B*T, E) -> (B, H, T, Dh)
        return z.reshape(B, T, H, Dh).transpose(0, 2, 1, 3)

    qh, kh, vh = heads(q), heads(k), heads(v)
    s = jnp.einsum("bhqd,bhkd->bhqk", qh.astype(bf16), kh.astype(bf16),
                   preferred_element_type=jnp.float32)
    s = s + jnp.where(pad_mask.astype(bool), -1e30, 0.0)[:, None, None, :]
    m = jnp.max(s, axis=-1, keepdims=True)
    p = jnp.exp(s - m)
    l = jnp.sum(p, axis=-1, keepdims=True)
    o = jnp.einsum("bhqk,bhkd->bhqd", p.astype(bf16), vh.astype(bf16),
                   preferred_element_type=jnp.float32) / l
    o = o.transpose(0, 2, 1, 3).reshape(B * T, E)

    def ln(y, g, b):
        mu = y.mean(-1, keepdims=True)
        var = ((y - mu) ** 2).mean(-1, keepdims=True)
        return (y - mu) / jnp.sqrt(var + 1e-5) * g + b

    y = ln(xf + mdot(o, params["w_out"]) + params["b_out"],
           params["ln0_g"], params["ln0_b"])
    h = jax.nn.relu(mdot(y, params["w_fc1"]) + params["b_fc1"])
    z = ln(y + mdot(h, params["w_fc2"]) + params["b_fc2"],
           params["ln1_g"], params["ln1_b"])
    return z.reshape(B, T, E).transpose(1, 0, 2)


# ----------------------------------- main ------------------------------------

if __name__ == "__main__":
    T, B, E, H, F = 1024, 2, 256, 4, 1024     # seq, batch, embed, heads, ffn
    key = jax.random.PRNGKey(0)
    kx, kp = jax.random.split(key)
    x = jax.random.normal(kx, (T, B, E), jnp.float32)
    lengths = jnp.array([T, T - 100])         # every row has >= 1 valid key
    pad_mask = (jnp.arange(T)[None, :] >= lengths[:, None]).astype(jnp.uint8)  # (B, T)
    params = init_params(kp, E, F, H)

    # Tiles sized so every multi-block path is exercised (QKV K-accumulator,
    # flash online-softmax over 2 kv blocks, FFN F-reduction) while keeping the
    # kv tile fat (>=512) and all parallel grid extents even for v7x.
    blocks = dict(bm=512, bn=768, bk=128,
                  bq=256, bkv=512,
                  bm_ffn=256, bf=512)

    out, attn_weights = transformer_encoder_layer(x, pad_mask, params, H,
                                                  blocks=blocks)
    out = jax.block_until_ready(out)

    ref = reference_forward(x, pad_mask, params, H)
    assert out.shape == (T, B, E)
    err = float(jnp.max(jnp.abs(out - ref)))
    assert err < 1e-2, f"max abs err {err}"
    print("KERNEL_OK")
</pallas_src>

<mosaic_0001>
module attributes {stable_mosaic.version = 11 : i64} {
  func.func @_matmul_bias_kernel(%arg0: i32, %arg1: i32, %arg2: i32, %arg3: memref<512x128xf32, #tpu.memory_space<vmem>>, %arg4: memref<128x768xbf16, #tpu.memory_space<vmem>>, %arg5: memref<1x768xf32, #tpu.memory_space<vmem>>, %arg6: memref<512x768xf32, #tpu.memory_space<vmem>>, %arg7: memref<512x768xf32, #tpu.memory_space<vmem>>) attributes {dimension_semantics = [#tpu.dimension_semantics<parallel>, #tpu.dimension_semantics<parallel>, #tpu.dimension_semantics<arbitrary>], iteration_bounds = array<i64: 4, 1, 2>, scalar_prefetch = 0 : i64, scratch_operands = 1 : i64, tpu.core_type = #tpu.core_type<tc>, window_params = [{transform_indices = @transform_0, window_bounds = array<i64: 512, 128>}, {transform_indices = @transform_1, window_bounds = array<i64: 128, 768>}, {transform_indices = @transform_2, window_bounds = array<i64: 1, 768>}, {transform_indices = @transform_3, window_bounds = array<i64: 512, 768>}]} {
    %c0_i32 = arith.constant 0 : i32
    %0 = arith.cmpi eq, %arg2, %c0_i32 : i32
    %1 = arith.extui %0 : i1 to i32
    %c0_i32_0 = arith.constant 0 : i32
    %2 = arith.cmpi ne, %1, %c0_i32_0 : i32
    scf.if %2 {
      %cst_9 = arith.constant 0.000000e+00 : f32
      %13 = vector.broadcast %cst_9 : f32 to vector<512x768xf32>
      %c0_10 = arith.constant 0 : index
      %c0_11 = arith.constant 0 : index
      %14 = vector.load %arg7[%c0_10, %c0_11] : memref<512x768xf32, #tpu.memory_space<vmem>>, vector<512x768xf32>
      tpu.vector_store %arg7[%c0_10, %c0_11], %13 {strides = array<i32>} : memref<512x768xf32, #tpu.memory_space<vmem>>, vector<512x768xf32>,
    } else {
    }
    %c0 = arith.constant 0 : index
    %c0_1 = arith.constant 0 : index
    %3 = vector.load %arg7[%c0, %c0_1] : memref<512x768xf32, #tpu.memory_space<vmem>>, vector<512x768xf32>
    %c0_2 = arith.constant 0 : index
    %c0_3 = arith.constant 0 : index
    %4 = vector.load %arg3[%c0_2, %c0_3] : memref<512x128xf32, #tpu.memory_space<vmem>>, vector<512x128xf32>
    %5 = arith.truncf %4 : vector<512x128xf32> to vector<512x128xbf16>
    %c0_4 = arith.constant 0 : index
    %c0_5 = arith.constant 0 : index
    %6 = vector.load %arg4[%c0_4, %c0_5] : memref<128x768xbf16, #tpu.memory_space<vmem>>, vector<128x768xbf16>
    %cst = arith.constant dense<0.000000e+00> : vector<512x768xf32>
    %7 = tpu.matmul %5, %6, %cst {dimension_numbers = #tpu.dot_dimension_numbers<[1], [0], [0], [1], [0, 0, 1, 1], [], []>} : vector<512x128xbf16>, vector<128x768xbf16>, vector<512x768xf32> -> vector<512x768xf32>
    %8 = arith.addf %3, %7 : vector<512x768xf32>
    %c0_6 = arith.constant 0 : index
    %c0_7 = arith.constant 0 : index
    %9 = vector.load %arg7[%c0_6, %c0_7] : memref<512x768xf32, #tpu.memory_space<vmem>>, vector<512x768xf32>
    tpu.vector_store %arg7[%c0_6, %c0_7], %8 {strides = array<i32>} : memref<512x768xf32, #tpu.memory_space<vmem>>, vector<512x768xf32>,
    %c1_i32 = arith.constant 1 : i32
    %10 = arith.cmpi eq, %arg2, %c1_i32 : i32
    %11 = arith.extui %10 : i1 to i32
    %c0_i32_8 = arith.constant 0 : i32
    %12 = arith.cmpi ne, %11, %c0_i32_8 : i32
    scf.if %12 {
      %c0_9 = arith.constant 0 : index
      %c0_10 = arith.constant 0 : index
      %13 = vector.load %arg7[%c0_9, %c0_10] : memref<512x768xf32, #tpu.memory_space<vmem>>, vector<512x768xf32>
      %c0_11 = arith.constant 0 : index
      %c0_12 = arith.constant 0 : index
      %14 = vector.load %arg5[%c0_11, %c0_12] : memref<1x768xf32, #tpu.memory_space<vmem>>, vector<1x768xf32>
      %15 = vector.broadcast %14 : vector<1x768xf32> to vector<512x768xf32>
      %16 = arith.addf %13, %15 : vector<512x768xf32>
      %c0_13 = arith.constant 0 : index
      %c0_14 = arith.constant 0 : index
      %17 = vector.load %arg6[%c0_13, %c0_14] : memref<512x768xf32, #tpu.memory_space<vmem>>, vector<512x768xf32>
      tpu.vector_store %arg6[%c0_13, %c0_14], %16 {strides = array<i32>} : memref<512x768xf32, #tpu.memory_space<vmem>>, vector<512x768xf32>,
    } else {
    }
    return
  }
  func.func @transform_0(%arg0: i32, %arg1: i32, %arg2: i32) -> (i32, i32) {
    %c0_i32 = arith.constant 0 : i32
    return %arg0, %arg2 : i32, i32
  }
  func.func @transform_1(%arg0: i32, %arg1: i32, %arg2: i32) -> (i32, i32) {
    %c0_i32 = arith.constant 0 : i32
    return %arg2, %arg1 : i32, i32
  }
  func.func @transform_2(%arg0: i32, %arg1: i32, %arg2: i32) -> (i32, i32) {
    %c0_i32 = arith.constant 0 : i32
    %c0_i32_0 = arith.constant 0 : i32
    return %c0_i32, %arg1 : i32, i32
  }
  func.func @transform_3(%arg0: i32, %arg1: i32, %arg2: i32) -> (i32, i32) {
    %c0_i32 = arith.constant 0 : i32
    return %arg0, %arg1 : i32, i32
  }
}

</mosaic_0001>

<llo_original>
// kernel: tpu_custom_call.1
$region0: #{tpu_custom_call.1}
  #allocation0 [shape = 'u32[]', space=smem, size = 0x4, offset = 0x4, fixed_abs, tag = 'smem constant byte address 0x4 - core index']
  #allocation1 [shape = 'u32[144,128]{1,0:T(1,128)}', space=vmem, size = 0x12000, scoped, tag = 'internal scratch']
  #allocation2 [shape = 'f32[512,768]{1,0:T(8,128)}', space=vmem, size = 0x180000, scoped, tag = 'scratch operand']
  %s0 = inlined_call_operand.hbm [shape: f32[2048,256], index: 0, kind: input, shape index: {}]
  %s1 = inlined_call_operand.hbm [shape: bf16[256,768], index: 1, kind: input, shape index: {}]
  %s2 = inlined_call_operand.hbm [shape: f32[1,768], index: 2, kind: input, shape index: {}]
  %s3 = inlined_call_operand.hbm [shape: f32[2048,768], index: 3, kind: output, shape index: {}]
  %s4 = sld [smem:[#allocation0]]
  $region65: #{tpu_custom_call.1} parent=0
    _
  %s6 = ssub.s32 1, %s4
  %s7 = scalar_select 0, %s6, %s4
  $region1: #{tpu_custom_call.1} parent=0
    #allocation3 [shape = 'u8[524288]{0}', space=vmem, size = 0x80000, scoped, tag = 'input window, operand 0']
    #allocation4 [shape = 's32[2]{0}', space=sflag, size = 0x8, scoped, tag = 'scoped memory for tpu_custom_call.1']
    #allocation5 [shape = 's32[2]{0}', space=sflag, size = 0x8, scoped, tag = 'scoped memory for tpu_custom_call.1']
    #allocation6 [shape = 'u8[393216]{0}', space=vmem, size = 0x60000, scoped, tag = 'input window, operand 1']
    #allocation7 [shape = 's32[2]{0}', space=sflag, size = 0x8, scoped, tag = 'scoped memory for tpu_custom_call.1']
    #allocation8 [shape = 'u8[3072]{0}', space=vmem, size = 0xc00, scoped, tag = 'input window, operand 2, single buffered']
    #allocation9 [shape = 'u8[3145728]{0}', space=vmem, size = 0x300000, scoped, tag = 'output window, operand 0']
    %8 = vsyncpa [#allocation4], 0
    %s9 = scalar_lea.sflag [#allocation4], 1
    %10 = vsyncpa %s9, 0
    %11 = vsyncpa [#allocation7], 0
    %s12 = scalar_lea.sflag [#allocation7], 1
    %13 = vsyncpa %s12, 0
    %14 = vsyncpa [#allocation5], 0
    %s15 = scalar_lea.sflag [#allocation5], 1
    %16 = vsyncpa %s15, 0
    loop: start=0, step=1, limit=10
    $region2: #{tpu_custom_call.1} parent=1 // loop_pre_header
      _
    $region3: #{tpu_custom_call.1} parent=1 // loop_header
      %s18 = sphi 0, %s22
      %p19 = scmp.ge.s32.totalorder %s18, 10
      %s25 = sphi 0, %s44
      %s26 = sphi 0, %s40
      %s27 = sphi 0, %s36
      %s28 = sphi 0, %s25
      %s29 = sphi 0, %s26
      %s30 = sphi 0, %s27
      %s31 = sphi 0, %s28
      %s32 = sphi 0, %s29
      %s33 = sphi 0, %s30
      %s49 = sphi 0, %s51
      %s52 = sphi 0, %s49
      %s53 = sphi 0, %s52
      %s69 = sphi 0, %s53
      %s77 = sphi 0, %s79
      %s80 = sphi 0, %s77
      %s81 = sphi 0, %s80
      %s97 = sphi 0, %s81
      %s103 = sphi 0, %s105
      %s106 = sphi 0, %s103
      %s107 = sphi 0, %s106
      %s123 = sphi 0, %s107
      %s131 = sphi 0, %s133
      %s134 = sphi 0, %s131
      %s135 = sphi 0, %s134
      %s151 = sphi 0, %s135
    $region4: #{tpu_custom_call.1} parent=1 // loop_header_branch
      %21 = sbr.rel (%p19) target = $region8
    $region5: #{tpu_custom_call.1} parent=1 // loop_body
      %s23 = ssub.s32 %s18, 1
      %s24 = ssub.s32 %s18, 2
      %s34 = sadd.s32 1, %s27
      %p35 = scmp.ge.s32.totalorder %s34, 2
      %s36 = scalar_select %p35, 0, %s34
      %s37 = sadd.s32 1, %s26
      %s38 = scalar_select %p35, %s37, %s26
      %p39 = scmp.ge.s32.totalorder %s38, 1
      %s40 = scalar_select %p39, 0, %s38
      %s41 = sadd.s32 1, %s25
      %s42 = scalar_select %p39, %s41, %s25
      %p43 = scmp.ge.s32.totalorder %s42, 4
      %s44 = scalar_select %p43, 0, %s42
      %s45 = ssub.s32 %s25, %s44
      %s46 = ssub.s32 %s27, %s36
      %s47 = sor.u32 %s45, %s46
      %p48 = scmp.eq.s32.totalorder %s47, 0
      %s50 = sadd.s32 %s49, 1
      %s51 = scalar_select %p48, %s49, %s50
      %p54 = pneg %p48
      %p55 = scmp.eq.s32.totalorder %s18, 7
      %p56 = por %p54, %p55
      %p57 = scmp.ne.s32.totalorder %s49, %s52
      %p58 = scmp.eq.s32.totalorder %s18, 0
      %p59 = por %p57, %p58
      %p60 = scmp.ne.s32.totalorder %s49, %s52
      %p61 = scmp.eq.s32.totalorder %s23, 7
      %p62 = por %p60, %p61
      %p63 = scmp.ne.s32.totalorder %s52, %s53
      %p64 = scmp.eq.s32.totalorder %s23, 0
      %p65 = por %p63, %p64
      %p66 = scmp.ne.s32.totalorder %s52, %s53
      %p67 = scmp.eq.s32.totalorder %s24, 7
      %p68 = por %p66, %p67
      %p70 = scmp.ne.s32.totalorder %s53, %s69
      %p71 = scmp.eq.s32.totalorder %s24, 0
      %p72 = por %p70, %p71
      %s73 = ssub.s32 %s27, %s36
      %s74 = ssub.s32 %s26, %s40
      %s75 = sor.u32 %s73, %s74
      %p76 = scmp.eq.s32.totalorder %s75, 0
      %s78 = sadd.s32 %s77, 1
      %s79 = scalar_select %p76, %s77, %s78
      %p82 = pneg %p76
      %p83 = scmp.eq.s32.totalorder %s18, 7
      %p84 = por %p82, %p83
      %p85 = scmp.ne.s32.totalorder %s77, %s80
      %p86 = scmp.eq.s32.totalorder %s18, 0
      %p87 = por %p85, %p86
      %p88 = scmp.ne.s32.totalorder %s77, %s80
      %p89 = scmp.eq.s32.totalorder %s23, 7
      %p90 = por %p88, %p89
      %p91 = scmp.ne.s32.totalorder %s80, %s81
      %p92 = scmp.eq.s32.totalorder %s23, 0
      %p93 = por %p91, %p92
      %p94 = scmp.ne.s32.totalorder %s80, %s81
      %p95 = scmp.eq.s32.totalorder %s24, 7
      %p96 = por %p94, %p95
      %p98 = scmp.ne.s32.totalorder %s81, %s97
      %p99 = scmp.eq.s32.totalorder %s24, 0
      %p100 = por %p98, %p99
      %s101 = ssub.s32 %s26, %s40
      %p102 = scmp.eq.s32.totalorder %s101, 0
      %s104 = sadd.s32 %s103, 1
      %s105 = scalar_select %p102, %s103, %s104
      %p108 = pneg %p102
      %p109 = scmp.eq.s32.totalorder %s18, 7
      %p110 = por %p108, %p109
      %p111 = scmp.ne.s32.totalorder %s103, %s106
      %p112 = scmp.eq.s32.totalorder %s18, 0
      %p113 = por %p111, %p112
      %p114 = scmp.ne.s32.totalorder %s103, %s106
      %p115 = scmp.eq.s32.totalorder %s23, 7
      %p116 = por %p114, %p115
      %p117 = scmp.ne.s32.totalorder %s106, %s107
      %p118 = scmp.eq.s32.totalorder %s23, 0
      %p119 = por %p117, %p118
      %p120 = scmp.ne.s32.totalorder %s106, %s107
      %p121 = scmp.eq.s32.totalorder %s24, 7
      %p122 = por %p120, %p121
      %p124 = scmp.ne.s32.totalorder %s107, %s123
      %p125 = scmp.eq.s32.totalorder %s24, 0
      %p126 = por %p124, %p125
      %s127 = ssub.s32 %s25, %s44
      %s128 = ssub.s32 %s26, %s40
      %s129 = sor.u32 %s127, %s128
      %p130 = scmp.eq.s32.totalorder %s129, 0
      %s132 = sadd.s32 %s131, 1
      %s133 = scalar_select %p130, %s131, %s132
      %p136 = pneg %p130
      %p137 = scmp.eq.s32.totalorder %s18, 7
      %p138 = por %p136, %p137
      %p139 = scmp.ne.s32.totalorder %s131, %s134
      %p140 = scmp.eq.s32.totalorder %s18, 0
      %p141 = por %p139, %p140
      %p142 = scmp.ne.s32.totalorder %s131, %s134
      %p143 = scmp.eq.s32.totalorder %s23, 7
      %p144 = por %p142, %p143
      %p145 = scmp.ne.s32.totalorder %s134, %s135
      %p146 = scmp.eq.s32.totalorder %s23, 0
      %p147 = por %p145, %p146
      %p148 = scmp.ne.s32.totalorder %s134, %s135
      %p149 = scmp.eq.s32.totalorder %s24, 7
      %p150 = por %p148, %p149
      %p152 = scmp.ne.s32.totalorder %s135, %s151
      %p153 = scmp.eq.s32.totalorder %s24, 0
      %p154 = por %p152, %p153
      %p155 = scmp.le.s32.totalorder 1, %s18
      %p156 = scmp.lt.s32.totalorder %s18, 9
      %p157 = pnand %p155, %p156
      %p158 = pneg %p157
      // Predicated region
      $region9: #{tpu_custom_call.1} parent=5 // pred_check
        _
      $region10: #{tpu_custom_call.1} parent=5 // pred_check_branch
        %160 = sbr.rel (%p157) target = $region12
      $region11: #{tpu_custom_call.1} parent=5 // pred_region
        %s161 = ssub.s32 %s18, 1
        // Predicated region
        $region13: #{tpu_custom_call.1} parent=11 // pred_check
          %p162 = pneg %p119
        $region14: #{tpu_custom_call.1} parent=11 // pred_check_branch
          %164 = sbr.rel (%p162) target = $region16
        $region15: #{tpu_custom_call.1} parent=11 // pred_region
          %s165 = smul.u32 6, %s29
          %s167 = ssub.s32 96, 96
          %168 = vsyncadd [#allocation7], %s167
          %s169 = smul.addr %s165, 16
          %s170 = scalar_lea.hbm %s2, %s169
          %s172 = sshll.u32 [#allocation8], 4
          %s173 = int_to_ptr.vmem [resolvable:$true] %s172
          %175 = dma.hbm_to_vmem [thread:$0]  %s170, 96, %s173, [#allocation7]
        $region16: #{tpu_custom_call.1} parent=11 // pred_fallthru
          _
      $region12: #{tpu_custom_call.1} parent=5 // pred_fallthru
        _
      %p176 = scmp.lt.s32.totalorder %s18, 8
      // Predicated region
      $region17: #{tpu_custom_call.1} parent=5 // pred_check
        %p177 = pneg %p176
      $region18: #{tpu_custom_call.1} parent=5 // pred_check_branch
        %179 = sbr.rel (%p177) target = $region20
      $region19: #{tpu_custom_call.1} parent=5 // pred_region
        // Predicated region
        $region21: #{tpu_custom_call.1} parent=19 // pred_check
          %p180 = pneg %p59
        $region22: #{tpu_custom_call.1} parent=19 // pred_check_branch
          %182 = sbr.rel (%p180) target = $region24
        $region23: #{tpu_custom_call.1} parent=19 // pred_region
          %s183 = sand.u32 %s49, 1
          %s184 = scalar_lea.sflag [#allocation4], %s183
          %s185 = sand.u32 %s49, 1
          %s186 = smul.addr %s185, 512
          %s187 = scalar_lea.vmem [#allocation3], %s186
          %s188 = smul.u32 64, %s25
          %s190 = ssub.s32 8192, 8192
          %191 = vsyncadd %s184, %s190
          %s192 = smul.addr %s188, 2
          %s193 = sadd.s32 %s27, %s192
          %s194 = smul.addr %s193, 128
          %s195 = scalar_lea.hbm %s0, %s194
          %s196 = sshll.u32 %s187, 4
          %s197 = int_to_ptr.vmem [resolvable:$true] %s196
          %202 = dma.hbm_to_vmem [thread:$0]  %s195, 8192, %s197, %s184, 256, 128, 8
        $region24: #{tpu_custom_call.1} parent=19 // pred_fallthru
          _
        // Predicated region
        $region25: #{tpu_custom_call.1} parent=19 // pred_check
          %p203 = pneg %p87
        $region26: #{tpu_custom_call.1} parent=19 // pred_check_branch
          %205 = sbr.rel (%p203) target = $region28
        $region27: #{tpu_custom_call.1} parent=19 // pred_region
          %s206 = sand.u32 %s18, 1
          %s207 = scalar_lea.sflag [#allocation7], %s206
          %s208 = sand.u32 %s77, 1
          %s209 = smul.addr %s208, 384
          %s210 = scalar_lea.vmem [#allocation6], %s209
          %s211 = smul.u32 16, %s27
          %s212 = smul.u32 6, %s26
          %s214 = ssub.s32 6144, 6144
          %215 = vsyncadd %s207, %s214
          %s216 = smul.addr %s211, 6
          %s217 = sadd.s32 %s212, %s216
          %s218 = smul.addr %s217, 64
          %s219 = scalar_lea.hbm %s1, %s218
          %s220 = sshll.u32 %s210, 4
          %s221 = int_to_ptr.vmem [resolvable:$true] %s220
          %226 = dma.hbm_to_vmem [thread:$0]  %s219, 6144, %s221, %s207, 384, 384, 24
        $region28: #{tpu_custom_call.1} parent=19 // pred_fallthru
          _
      $region20: #{tpu_custom_call.1} parent=5 // pred_fallthru
        _
      %p227 = scmp.le.s32.totalorder 1, %s18
      %p228 = scmp.lt.s32.totalorder %s18, 9
      %p229 = pnand %p227, %p228
      %p230 = pneg %p229
      // Predicated region
      $region29: #{tpu_custom_call.1} parent=5 // pred_check
        _
      $region30: #{tpu_custom_call.1} parent=5 // pred_check_branch
        %232 = sbr.rel (%p229) target = $region32
      $region31: #{tpu_custom_call.1} parent=5 // pred_region
        %s233 = ssub.s32 %s18, 1
        %s234 = sand.u32 %s52, 1
        %s235 = scalar_lea.sflag [#allocation4], %s234
        %s236 = sand.u32 %s52, 1
        %s237 = smul.addr %s236, 512
        %s238 = scalar_lea.vmem [#allocation3], %s237
        // Predicated region
        $region33: #{tpu_custom_call.1} parent=31 // pred_check
          %p239 = pneg %p65
        $region34: #{tpu_custom_call.1} parent=31 // pred_check_branch
          %241 = sbr.rel (%p239) target = $region36
        $region35: #{tpu_custom_call.1} parent=31 // pred_region
          %242 = dma.done %s235, 8192
        $region36: #{tpu_custom_call.1} parent=31 // pred_fallthru
          _
        %s243 = sand.u32 %s23, 1
        %s244 = scalar_lea.sflag [#allocation7], %s243
        %s245 = sand.u32 %s80, 1
        %s246 = smul.addr %s245, 384
        %s247 = scalar_lea.vmem [#allocation6], %s246
        // Predicated region
        $region37: #{tpu_custom_call.1} parent=31 // pred_check
          %p248 = pneg %p93
        $region38: #{tpu_custom_call.1} parent=31 // pred_check_branch
          %250 = sbr.rel (%p248) target = $region40
        $region39: #{tpu_custom_call.1} parent=31 // pred_region
          %251 = dma.done %s244, 6144
        $region40: #{tpu_custom_call.1} parent=31 // pred_fallthru
          _
        // Predicated region
        $region41: #{tpu_custom_call.1} parent=31 // pred_check
          %p252 = pneg %p119
        $region42: #{tpu_custom_call.1} parent=31 // pred_check_branch
          %254 = sbr.rel (%p252) target = $region44
        $region43: #{tpu_custom_call.1} parent=31 // pred_region
          %255 = dma.done [#allocation7], 96
        $region44: #{tpu_custom_call.1} parent=31 // pred_fallthru
          _
        %s256 = sand.u32 %s52, 1
        %s257 = scalar_lea.sflag [#allocation4], %s256
        %s258 = sand.u32 %s52, 1
        %s259 = smul.addr %s258, 512
        %s260 = scalar_lea.vmem [#allocation3], %s259
        %p261 = pneg %p65
        %p262 = pneg %p62
        %s263 = sand.u32 %s23, 1
        %s264 = scalar_lea.sflag [#allocation7], %s263
        %s265 = sand.u32 %s80, 1
        %s266 = smul.addr %s265, 384
        %s267 = scalar_lea.vmem [#allocation6], %s266
        %p268 = pneg %p93
        %p269 = pneg %p90
        %p270 = pneg %p119
        %p271 = pneg %p116
        %p272 = pneg %p147
        %p273 = pneg %p144
        %s274 = sand.u32 %s134, 1
        %s275 = scalar_lea.sflag [#allocation5], %s274
        %s276 = sand.u32 %s134, 1
        %s277 = smul.addr %s276, 3072
        %s278 = scalar_lea.vmem [#allocation9], %s277
        %s279 = smul.u32 64, %s28
        %s280 = smul.u32 16, %s30
        %s281 = smul.u32 6, %s29
        %s282 = smul.u32 6, %s29
        %s283 = smul.u32 64, %s28
        %s284 = smul.u32 6, %s29
        %p286 = scmp.eq.s32.totalorder %s30, 0
        // Predicated region
        $region45: #{tpu_custom_call.1} parent=31 // pred_check
          %p287 = pneg %p286
        $region46: #{tpu_custom_call.1} parent=31 // pred_check_branch
          %289 = sbr.rel (%p287) target = $region48
        $region47: #{tpu_custom_call.1} parent=31 // pred_region
          %290 = vst [vmem:[#allocation2] sm:$0xff] 0.0
          %291 = vst [vmem:[#allocation2 + $0x8] sm:$0xff] 0.0
          %292 = vst [vmem:[#allocation2 + $0x10] sm:$0xff] 0.0
          %293 = vst [vmem:[#allocation2 + $0x18] sm:$0xff] 0.0
          %294 = vst [vmem:[#allocation2 + $0x20] sm:$0xff] 0.0
          %295 = vst [vmem:[#allocation2 + $0x28] sm:$0xff] 0.0
          %296 = vst [vmem:[#allocation2 + $0x30] sm:$0xff] 0.0
          %297 = vst [vmem:[#allocation2 + $0x38] sm:$0xff] 0.0
          %298 = vst [vmem:[#allocation2 + $0x40] sm:$0xff] 0.0
          %299 = vst [vmem:[#allocation2 + $0x48] sm:$0xff] 0.0
          %300 = vst [vmem:[#allocation2 + $0x50] sm:$0xff] 0.0
          %301 = vst [vmem:[#allocation2 + $0x58] sm:$0xff] 0.0
          %302 = vst [vmem:[#allocation2 + $0x60] sm:$0xff] 0.0
          %303 = vst [vmem:[#allocation2 + $0x68] sm:$0xff] 0.0
          %304 = vst [vmem:[#allocation2 + $0x70] sm:$0xff] 0.0
          %305 = vst [vmem:[#allocation2 + $0x78] sm:$0xff] 0.0
          %306 = vst [vmem:[#allocation2 + $0x80] sm:$0xff] 0.0
          %307 = vst [vmem:[#allocation2 + $0x88] sm:$0xff] 0.0
          %308 = vst [vmem:[#allocation2 + $0x90] sm:$0xff] 0.0
          %309 = vst [vmem:[#allocation2 + $0x98] sm:$0xff] 0.0
          %310 = vst [vmem:[#allocation2 + $0xa0] sm:$0xff] 0.0
          %311 = vst [vmem:[#allocation2 + $0xa8] sm:$0xff] 0.0
          %312 = vst [vmem:[#allocation2 + $0xb0] sm:$0xff] 0.0
          %313 = vst [vmem:[#allocation2 + $0xb8] sm:$0xff] 0.0
          %314 = vst [vmem:[#allocation2 + $0xc0] sm:$0xff] 0.0
          %315 = vst [vmem:[#allocation2 + $0xc8] sm:$0xff] 0.0
          %316 = vst [vmem:[#allocation2 + $0xd0] sm:$0xff] 0.0
          %317 = vst [vmem:[#allocation2 + $0xd8] sm:$0xff] 0.0
          %318 = vst [vmem:[#allocation2 + $0xe0] sm:$0xff] 0.0
          %319 = vst [vmem:[#allocation2 + $0xe8] sm:$0xff] 0.0
          %320 = vst [vmem:[#allocation2 + $0xf0] sm:$0xff] 0.0
          %321 = vst [vmem:[#allocation2 + $0xf8] sm:$0xff] 0.0
          %322 = vst [vmem:[#allocation2 + $0x100] sm:$0xff] 0.0
          %323 = vst [vmem:[#allocation2 + $0x108] sm:$0xff] 0.0
          %324 = vst [vmem:[#allocation2 + $0x110] sm:$0xff] 0.0
          %325 = vst [vmem:[#allocation2 + $0x118] sm:$0xff] 0.0
          %326 = vst [vmem:[#allocation2 + $0x120] sm:$0xff] 0.0
          %327 = vst [vmem:[#allocation2 + $0x128] sm:$0xff] 0.0
          %328 = vst [vmem:[#allocation2 + $0x130] sm:$0xff] 0.0
          %329 = vst [vmem:[#allocation2 + $0x138] sm:$0xff] 0.0
          %330 = vst [vmem:[#allocation2 + $0x140] sm:$0xff] 0.0
          %331 = vst [vmem:[#allocation2 + $0x148] sm:$0xff] 0.0
          %332 = vst [vmem:[#allocation2 + $0x150] sm:$0xff] 0.0
          %333 = vst [vmem:[#allocation2 + $0x158] sm:$0xff] 0.0
          %334 = vst [vmem:[#allocation2 + $0x160] sm:$0xff] 0.0
          %335 = vst [vmem:[#allocation2 + $0x168] sm:$0xff] 0.0
          %336 = vst [vmem:[#allocation2 + $0x170] sm:$0xff] 0.0
          %337 = vst [vmem:[#allocation2 + $0x178] sm:$0xff] 0.0
          %338 = vst [vmem:[#allocation2 + $0x180] sm:$0xff] 0.0
          %339 = vst [vmem:[#allocation2 + $0x188] sm:$0xff] 0.0
          %340 = vst [vmem:[#allocation2 + $0x190] sm:$0xff] 0.0
          %341 = vst [vmem:[#allocation2 + $0x198] sm:$0xff] 0.0
          %342 = vst [vmem:[#allocation2 + $0x1a0] sm:$0xff] 0.0
          %343 = vst [vmem:[#allocation2 + $0x1a8] sm:$0xff] 0.0
          %344 = vst [vmem:[#allocation2 + $0x1b0] sm:$0xff] 0.0
          %345 = vst [vmem:[#allocation2 + $0x1b8] sm:$0xff] 0.0
          %346 = vst [vmem:[#allocation2 + $0x1c0] sm:$0xff] 0.0
          %347 = vst [vmem:[#allocation2 + $0x1c8] sm:$0xff] 0.0
          %348 = vst [vmem:[#allocation2 + $0x1d0] sm:$0xff] 0.0
          %349 = vst [vmem:[#allocation2 + $0x1d8] sm:$0xff] 0.0
          %350 = vst [vmem:[#allocation2 + $0x1e0] sm:$0xff] 0.0
          %351 = vst [vmem:[#allocation2 + $0x1e8] sm:$0xff] 0.0
          %352 = vst [vmem:[#allocation2 + $0x1f0] sm:$0xff] 0.0
          %353 = vst [vmem:[#allocation2 + $0x1f8] sm:$0xff] 0.0
          %354 = vst [vmem:[#allocation2 + $0x200] sm:$0xff] 0.0
          %355 = vst [vmem:[#allocation2 + $0x208] sm:$0xff] 0.0
          %356 = vst [vmem:[#allocation2 + $0x210] sm:$0xff] 0.0
          %357 = vst [vmem:[#allocation2 + $0x218] sm:$0xff] 0.0
          %358 = vst [vmem:[#allocation2 + $0x220] sm:$0xff] 0.0
          %359 = vst [vmem:[#allocation2 + $0x228] sm:$0xff] 0.0
          %360 = vst [vmem:[#allocation2 + $0x230] sm:$0xff] 0.0
          %361 = vst [vmem:[#allocation2 + $0x238] sm:$0xff] 0.0
          %362 = vst [vmem:[#allocation2 + $0x240] sm:$0xff] 0.0
          %363 = vst [vmem:[#allocation2 + $0x248] sm:$0xff] 0.0
          %364 = vst [vmem:[#allocation2 + $0x250] sm:$0xff] 0.0
          %365 = vst [vmem:[#allocation2 + $0x258] sm:$0xff] 0.0
          %366 = vst [vmem:[#allocation2 + $0x260] sm:$0xff] 0.0
          %367 = vst [vmem:[#allocation2 + $0x268] sm:$0xff] 0.0
          %368 = vst [vmem:[#allocation2 + $0x270] sm:$0xff] 0.0
          %369 = vst [vmem:[#allocation2 + $0x278] sm:$0xff] 0.0
          %370 = vst [vmem:[#allocation2 + $0x280] sm:$0xff] 0.0
          %371 = vst [vmem:[#allocation2 + $0x288] sm:$0xff] 0.0
          %372 = vst [vmem:[#allocation2 + $0x290] sm:$0xff] 0.0
          %373 = vst [vmem:[#allocation2 + $0x298] sm:$0xff] 0.0
          %374 = vst [vmem:[#allocation2 + $0x2a0] sm:$0xff] 0.0
          %375 = vst [vmem:[#allocation2 + $0x2a8] sm:$0xff] 0.0
          %376 = vst [vmem:[#allocation2 + $0x2b0] sm:$0xff] 0.0
          %377 = vst [vmem:[#allocation2 + $0x2b8] sm:$0xff] 0.0
          %378 = vst [vmem:[#allocation2 + $0x2c0] sm:$0xff] 0.0
          %379 = vst [vmem:[#allocation2 + $0x2c8] sm:$0xff] 0.0
          %380 = vst [vmem:[#allocation2 + $0x2d0] sm:$0xff] 0.0
          %381 = vst [vmem:[#allocation2 + $0x2d8] sm:$0xff] 0.0
          %382 = vst [vmem:[#allocation2 + $0x2e0] sm:$0xff] 0.0
          %383 = vst [vmem:[#allocation2 + $0x2e8] sm:$0xff] 0.0
          %384 = vst [vmem:[#allocation2 + $0x2f0] sm:$0xff] 0.0
          %385 = vst [vmem:[#allocation2 + $0x2f8] sm:$0xff] 0.0
          %386 = vst [vmem:[#allocation2 + $0x300] sm:$0xff] 0.0
          %387 = vst [vmem:[#allocation2 + $0x308] sm:$0xff] 0.0
          %388 = vst [vmem:[#allocation2 + $0x310] sm:$0xff] 0.0
          %389 = vst [vmem:[#allocation2 + $0x318] sm:$0xff] 0.0
          %390 = vst [vmem:[#allocation2 + $0x320] sm:$0xff] 0.0
          %391 = vst [vmem:[#allocation2 + $0x328] sm:$0xff] 0.0
          %392 = vst [vmem:[#allocation2 + $0x330] sm:$0xff] 0.0
          %393 = vst [vmem:[#allocation2 + $0x338] sm:$0xff] 0.0
          %394 = vst [vmem:[#allocation2 + $0x340] sm:$0xff] 0.0
          %395 = vst [vmem:[#allocation2 + $0x348] sm:$0xff] 0.0
          %396 = vst [vmem:[#allocation2 + $0x350] sm:$0xff] 0.0
          %397 = vst [vmem:[#allocation2 + $0x358] sm:$0xff] 0.0
          %398 = vst [vmem:[#allocation2 + $0x360] sm:$0xff] 0.0
          %399 = vst [vmem:[#allocation2 + $0x368] sm:$0xff] 0.0
          %400 = vst [vmem:[#allocation2 + $0x370] sm:$0xff] 0.0
          %401 = vst [vmem:[#allocation2 + $0x378] sm:$0xff] 0.0
          %402 = vst [vmem:[#allocation2 + $0x380] sm:$0xff] 0.0
          %403 = vst [vmem:[#allocation2 + $0x388] sm:$0xff] 0.0
          %404 = vst [vmem:[#allocation2 + $0x390] sm:$0xff] 0.0
          %405 = vst [vmem:[#allocation2 + $0x398] sm:$0xff] 0.0
          %406 = vst [vmem:[#allocation2 + $0x3a0] sm:$0xff] 0.0
          %407 = vst [vmem:[#allocation2 + $0x3a8] sm:$0xff] 0.0
          %408 = vst [vmem:[#allocation2 + $0x3b0] sm:$0xff] 0.0
          %409 = vst [vmem:[#allocation2 + $0x3b8] sm:$0xff] 0.0
          %410 = vst [vmem:[#allocation2 + $0x3c0] sm:$0xff] 0.0
          %411 = vst [vmem:[#allocation2 + $0x3c8] sm:$0xff] 0.0
          %412 = vst [vmem:[#allocation2 + $0x3d0] sm:$0xff] 0.0
          %413 = vst [vmem:[#allocation2 + $0x3d8] sm:$0xff] 0.0
          %414 = vst [vmem:[#allocation2 + $0x3e0] sm:$0xff] 0.0
          %415 = vst [vmem:[#allocation2 + $0x3e8] sm:$0xff] 0.0
          %416 = vst [vmem:[#allocation2 + $0x3f0] sm:$0xff] 0.0
          %417 = vst [vmem:[#allocation2 + $0x3f8] sm:$0xff] 0.0
          %418 = vst [vmem:[#allocation2 + $0x400] sm:$0xff] 0.0
          %419 = vst [vmem:[#allocation2 + $0x408] sm:$0xff] 0.0
          %420 = vst [vmem:[#allocation2 + $0x410] sm:$0xff] 0.0
          %421 = vst [vmem:[#allocation2 + $0x418] sm:$0xff] 0.0
          %422 = vst [vmem:[#allocation2 + $0x420] sm:$0xff] 0.0
          %423 = vst [vmem:[#allocation2 + $0x428] sm:$0xff] 0.0
          %424 = vst [vmem:[#allocation2 + $0x430] sm:$0xff] 0.0
          %425 = vst [vmem:[#allocation2 + $0x438] sm:$0xff] 0.0
          %426 = vst [vmem:[#allocation2 + $0x440] sm:$0xff] 0.0
          %427 = vst [vmem:[#allocation2 + $0x448] sm:$0xff] 0.0
          %428 = vst [vmem:[#allocation2 + $0x450] sm:$0xff] 0.0
          %429 = vst [vmem:[#allocation2 + $0x458] sm:$0xff] 0.0
          %430 = vst [vmem:[#allocation2 + $0x460] sm:$0xff] 0.0
          %431 = vst [vmem:[#allocation2 + $0x468] sm:$0xff] 0.0
          %432 = vst [vmem:[#allocation2 + $0x470] sm:$0xff] 0.0
          %433 = vst [vmem:[#allocation2 + $0x478] sm:$0xff] 0.0
          %434 = vst [vmem:[#allocation2 + $0x480] sm:$0xff] 0.0
          %435 = vst [vmem:[#allocation2 + $0x488] sm:$0xff] 0.0
          %436 = vst [vmem:[#allocation2 + $0x490] sm:$0xff] 0.0
          %437 = vst [vmem:[#allocation2 + $0x498] sm:$0xff] 0.0
          %438 = vst [vmem:[#allocation2 + $0x4a0] sm:$0xff] 0.0
          %439 = vst [vmem:[#allocation2 + $0x4a8] sm:$0xff] 0.0
          %440 = vst [vmem:[#allocation2 + $0x4b0] sm:$0xff] 0.0
          %441 = vst [vmem:[#allocation2 + $0x4b8] sm:$0xff] 0.0
          %442 = vst [vmem:[#allocation2 + $0x4c0] sm:$0xff] 0.0
          %443 = vst [vmem:[#allocation2 + $0x4c8] sm:$0xff] 0.0
          %444 = vst [vmem:[#allocation2 + $0x4d0] sm:$0xff] 0.0
          %445 = vst [vmem:[#allocation2 + $0x4d8] sm:$0xff] 0.0
          %446 = vst [vmem:[#allocation2 + $0x4e0] sm:$0xff] 0.0
          %447 = vst [vmem:[#allocation2 + $0x4e8] sm:$0xff] 0.0
          %448 = vst [vmem:[#allocation2 + $0x4f0] sm:$0xff] 0.0
          %449 = vst [vmem:[#allocation2 + $0x4f8] sm:$0xff] 0.0
          %450 = vst [vmem:[#allocation2 + $0x500] sm:$0xff] 0.0
          %451 = vst [vmem:[#allocation2 + $0x508] sm:$0xff] 0.0
          %452 = vst [vmem:[#allocation2 + $0x510] sm:$0xff] 0.0
          %453 = vst [vmem:[#allocation2 + $0x518] sm:$0xff] 0.0
          %454 = vst [vmem:[#allocation2 + $0x520] sm:$0xff] 0.0
          %455 = vst [vmem:[#allocation2 + $0x528] sm:$0xff] 0.0
          %456 = vst [vmem:[#allocation2 + $0x530] sm:$0xff] 0.0
          %457 = vst [vmem:[#allocation2 + $0x538] sm:$0xff] 0.0
          %458 = vst [vmem:[#allocation2 + $0x540] sm:$0xff] 0.0
          %459 = vst [vmem:[#allocation2 + $0x548] sm:$0xff] 0.0
          %460 = vst [vmem:[#allocation2 + $0x550] sm:$0xff] 0.0
          %461 = vst [vmem:[#allocation2 + $0x558] sm:$0xff] 0.0
          %462 = vst [vmem:[#allocation2 + $0x560] sm:$0xff] 0.0
          %463 = vst [vmem:[#allocation2 + $0x568] sm:$0xff] 0.0
          %464 = vst [vmem:[#allocation2 + $0x570] sm:$0xff] 0.0
          %465 = vst [vmem:[#allocation2 + $0x578] sm:$0xff] 0.0
          %466 = vst [vmem:[#allocation2 + $0x580] sm:$0xff] 0.0
          %467 = vst [vmem:[#allocation2 + $0x588] sm:$0xff] 0.0
          %468 = vst [vmem:[#allocation2 + $0x590] sm:$0xff] 0.0
          %469 = vst [vmem:[#allocation2 + $0x598] sm:$0xff] 0.0
          %470 = vst [vmem:[#allocation2 + $0x5a0] sm:$0xff] 0.0
          %471 = vst [vmem:[#allocation2 + $0x5a8] sm:$0xff] 0.0
          %472 = vst [vmem:[#allocation2 + $0x5b0] sm:$0xff] 0.0
          %473 = vst [vmem:[#allocation2 + $0x5b8] sm:$0xff] 0.0
          %474 = vst [vmem:[#allocation2 + $0x5c0] sm:$0xff] 0.0
          %475 = vst [vmem:[#allocation2 + $0x5c8] sm:$0xff] 0.0
          %476 = vst [vmem:[#allocation2 + $0x5d0] sm:$0xff] 0.0
          %477 = vst [vmem:[#allocation2 + $0x5d8] sm:$0xff] 0.0
          %478 = vst [vmem:[#allocation2 + $0x5e0] sm:$0xff] 0.0
          %479 = vst [vmem:[#allocation2 + $0x5e8] sm:$0xff] 0.0
          %480 = vst [vmem:[#allocation2 + $0x5f0] sm:$0xff] 0.0
          %481 = vst [vmem:[#allocation2 + $0x5f8] sm:$0xff] 0.0
          %482 = vst [vmem:[#allocation2 + $0x600] sm:$0xff] 0.0
          %483 = vst [vmem:[#allocation2 + $0x608] sm:$0xff] 0.0
          %484 = vst [vmem:[#allocation2 + $0x610] sm:$0xff] 0.0
          %485 = vst [vmem:[#allocation2 + $0x618] sm:$0xff] 0.0
          %486 = vst [vmem:[#allocation2 + $0x620] sm:$0xff] 0.0
          %487 = vst [vmem:[#allocation2 + $0x628] sm:$0xff] 0.0
          %488 = vst [vmem:[#allocation2 + $0x630] sm:$0xff] 0.0
          %489 = vst [vmem:[#allocation2 + $0x638] sm:$0xff] 0.0
          %490 = vst [vmem:[#allocation2 + $0x640] sm:$0xff] 0.0
          %491 = vst [vmem:[#allocation2 + $0x648] sm:$0xff] 0.0
          %492 = vst [vmem:[#allocation2 + $0x650] sm:$0xff] 0.0
          %493 = vst [vmem:[#allocation2 + $0x658] sm:$0xff] 0.0
          %494 = vst [vmem:[#allocation2 + $0x660] sm:$0xff] 0.0
          %495 = vst [vmem:[#allocation2 + $0x668] sm:$0xff] 0.0
          %496 = vst [vmem:[#allocation2 + $0x670] sm:$0xff] 0.0
          %497 = vst [vmem:[#allocation2 + $0x678] sm:$0xff] 0.0
          %498 = vst [vmem:[#allocation2 + $0x680] sm:$0xff] 0.0
          %499 = vst [vmem:[#allocation2 + $0x688] sm:$0xff] 0.0
          %500 = vst [vmem:[#allocation2 + $0x690] sm:$0xff] 0.0
          %501 = vst [vmem:[#allocation2 + $0x698] sm:$0xff] 0.0
          %502 = vst [vmem:[#allocation2 + $0x6a0] sm:$0xff] 0.0
          %503 = vst [vmem:[#allocation2 + $0x6a8] sm:$0xff] 0.0
          %504 = vst [vmem:[#allocation2 + $0x6b0] sm:$0xff] 0.0
          %505 = vst [vmem:[#allocation2 + $0x6b8] sm:$0xff] 0.0
          %506 = vst [vmem:[#allocation2 + $0x6c0] sm:$0xff] 0.0
          %507 = vst [vmem:[#allocation2 + $0x6c8] sm:$0xff] 0.0
          %508 = vst [vmem:[#allocation2 + $0x6d0] sm:$0xff] 0.0
          %509 = vst [vmem:[#allocation2 + $0x6d8] sm:$0xff] 0.0
          %510 = vst [vmem:[#allocation2 + $0x6e0] sm:$0xff] 0.0
          %511 = vst [vmem:[#allocation2 + $0x6e8] sm:$0xff] 0.0
          %512 = vst [vmem:[#allocation2 + $0x6f0] sm:$0xff] 0.0
          %513 = vst [vmem:[#allocation2 + $0x6f8] sm:$0xff] 0.0
          %514 = vst [vmem:[#allocation2 + $0x700] sm:$0xff] 0.0
          %515 = vst [vmem:[#allocation2 + $0x708] sm:$0xff] 0.0
          %516 = vst [vmem:[#allocation2 + $0x710] sm:$0xff] 0.0
          %517 = vst [vmem:[#allocation2 + $0x718] sm:$0xff] 0.0
          %518 = vst [vmem:[#allocation2 + $0x720] sm:$0xff] 0.0
          %519 = vst [vmem:[#allocation2 + $0x728] sm:$0xff] 0.0
          %520 = vst [vmem:[#allocation2 + $0x730] sm:$0xff] 0.0
          %521 = vst [vmem:[#allocation2 + $0x738] sm:$0xff] 0.0
          %522 = vst [vmem:[#allocation2 + $0x740] sm:$0xff] 0.0
          %523 = vst [vmem:[#allocation2 + $0x748] sm:$0xff] 0.0
          %524 = vst [vmem:[#allocation2 + $0x750] sm:$0xff] 0.0
          %525 = vst [vmem:[#allocation2 + $0x758] sm:$0xff] 0.0
          %526 = vst [vmem:[#allocation2 + $0x760] sm:$0xff] 0.0
          %527 = vst [vmem:[#allocation2 + $0x768] sm:$0xff] 0.0
          %528 = vst [vmem:[#allocation2 + $0x770] sm:$0xff] 0.0
          %529 = vst [vmem:[#allocation2 + $0x778] sm:$0xff] 0.0
          %530 = vst [vmem:[#allocation2 + $0x780] sm:$0xff] 0.0
          %531 = vst [vmem:[#allocation2 + $0x788] sm:$0xff] 0.0
          %532 = vst [vmem:[#allocation2 + $0x790] sm:$0xff] 0.0
          %533 = vst [vmem:[#allocation2 + $0x798] sm:$0xff] 0.0
          %534 = vst [vmem:[#allocation2 + $0x7a0] sm:$0xff] 0.0
          %535 = vst [vmem:[#allocation2 + $0x7a8] sm:$0xff] 0.0
          %536 = vst [vmem:[#allocation2 + $0x7b0] sm:$0xff] 0.0
          %537 = vst [vmem:[#allocation2 + $0x7b8] sm:$0xff] 0.0
          %538 = vst [vmem:[#allocation2 + $0x7c0] sm:$0xff] 0.0
          %539 = vst [vmem:[#allocation2 + $0x7c8] sm:$0xff] 0.0
          %540 = vst [vmem:[#allocation2 + $0x7d0] sm:$0xff] 0.0
          %541 = vst [vmem:[#allocation2 + $0x7d8] sm:$0xff] 0.0
          %542 = vst [vmem:[#allocation2 + $0x7e0] sm:$0xff] 0.0
          %543 = vst [vmem:[#allocation2 + $0x7e8] sm:$0xff] 0.0
          %544 = vst [vmem:[#allocation2 + $0x7f0] sm:$0xff] 0.0
          %545 = vst [vmem:[#allocation2 + $0x7f8] sm:$0xff] 0.0
          %546 = vst [vmem:[#allocation2 + $0x800] sm:$0xff] 0.0
          %547 = vst [vmem:[#allocation2 + $0x808] sm:$0xff] 0.0
          %548 = vst [vmem:[#allocation2 + $0x810] sm:$0xff] 0.0
          %549 = vst [vmem:[#allocation2 + $0x818] sm:$0xff] 0.0
          %550 = vst [vmem:[#allocation2 + $0x820] sm:$0xff] 0.0
          %551 = vst [vmem:[#allocation2 + $0x828] sm:$0xff] 0.0
          %552 = vst [vmem:[#allocation2 + $0x830] sm:$0xff] 0.0
          %553 = vst [vmem:[#allocation2 + $0x838] sm:$0xff] 0.0
          %554 = vst [vmem:[#allocation2 + $0x840] sm:$0xff] 0.0
          %555 = vst [vmem:[#allocation2 + $0x848] sm:$0xff] 0.0
          %556 = vst [vmem:[#allocation2 + $0x850] sm:$0xff] 0.0
          %557 = vst [vmem:[#allocation2 + $0x858] sm:$0xff] 0.0
          %558 = vst [vmem:[#allocation2 + $0x860] sm:$0xff] 0.0
          %559 = vst [vmem:[#allocation2 + $0x868] sm:$0xff] 0.0
          %560 = vst [vmem:[#allocation2 + $0x870] sm:$0xff] 0.0
          %561 = vst [vmem:[#allocation2 + $0x878] sm:$0xff] 0.0
          %562 = vst [vmem:[#allocation2 + $0x880] sm:$0xff] 0.0
          %563 = vst [vmem:[#allocation2 + $0x888] sm:$0xff] 0.0
          %564 = vst [vmem:[#allocation2 + $0x890] sm:$0xff] 0.0
          %565 = vst [vmem:[#allocation2 + $0x898] sm:$0xff] 0.0
          %566 = vst [vmem:[#allocation2 + $0x8a0] sm:$0xff] 0.0
          %567 = vst [vmem:[#allocation2 + $0x8a8] sm:$0xff] 0.0
          %568 = vst [vmem:[#allocation2 + $0x8b0] sm:$0xff] 0.0
          %569 = vst [vmem:[#allocation2 + $0x8b8] sm:$0xff] 0.0
          %570 = vst [vmem:[#allocation2 + $0x8c0] sm:$0xff] 0.0
          %571 = vst [vmem:[#allocation2 + $0x8c8] sm:$0xff] 0.0
          %572 = vst [vmem:[#allocation2 + $0x8d0] sm:$0xff] 0.0
          %573 = vst [vmem:[#allocation2 + $0x8d8] sm:$0xff] 0.0
          %574 = vst [vmem:[#allocation2 + $0x8e0] sm:$0xff] 0.0
          %575 = vst [vmem:[#allocation2 + $0x8e8] sm:$0xff] 0.0
          %576 = vst [vmem:[#allocation2 + $0x8f0] sm:$0xff] 0.0
          %577 = vst [vmem:[#allocation2 + $0x8f8] sm:$0xff] 0.0
          %578 = vst [vmem:[#allocation2 + $0x900] sm:$0xff] 0.0
          %579 = vst [vmem:[#allocation2 + $0x908] sm:$0xff] 0.0
          %580 = vst [vmem:[#allocation2 + $0x910] sm:$0xff] 0.0
          %581 = vst [vmem:[#allocation2 + $0x918] sm:$0xff] 0.0
          %582 = vst [vmem:[#allocation2 + $0x920] sm:$0xff] 0.0
          %583 = vst [vmem:[#allocation2 + $0x928] sm:$0xff] 0.0
          %584 = vst [vmem:[#allocation2 + $0x930] sm:$0xff] 0.0
          %585 = vst [vmem:[#allocation2 + $0x938] sm:$0xff] 0.0
          %586 = vst [vmem:[#allocation2 + $0x940] sm:$0xff] 0.0
          %587 = vst [vmem:[#allocation2 + $0x948] sm:$0xff] 0.0
          %588 = vst [vmem:[#allocation2 + $0x950] sm:$0xff] 0.0
          %589 = vst [vmem:[#allocation2 + $0x958] sm:$0xff] 0.0
          %590 = vst [vmem:[#allocation2 + $0x960] sm:$0xff] 0.0
          %591 = vst [vmem:[#allocation2 + $0x968] sm:$0xff] 0.0
          %592 = vst [vmem:[#allocation2 + $0x970] sm:$0xff] 0.0
          %593 = vst [vmem:[#allocation2 + $0x978] sm:$0xff] 0.0
          %594 = vst [vmem:[#allocation2 + $0x980] sm:$0xff] 0.0
          %595 = vst [vmem:[#allocation2 + $0x988] sm:$0xff] 0.0
          %596 = vst [vmem:[#allocation2 + $0x990] sm:$0xff] 0.0
          %597 = vst [vmem:[#allocation2 + $0x998] sm:$0xff] 0.0
          %598 = vst [vmem:[#allocation2 + $0x9a0] sm:$0xff] 0.0
          %599 = vst [vmem:[#allocation2 + $0x9a8] sm:$0xff] 0.0
          %600 = vst [vmem:[#allocation2 + $0x9b0] sm:$0xff] 0.0
          %601 = vst [vmem:[#allocation2 + $0x9b8] sm:$0xff] 0.0
          %602 = vst [vmem:[#allocation2 + $0x9c0] sm:$0xff] 0.0
          %603 = vst [vmem:[#allocation2 + $0x9c8] sm:$0xff] 0.0
          %604 = vst [vmem:[#allocation2 + $0x9d0] sm:$0xff] 0.0
          %605 = vst [vmem:[#allocation2 + $0x9d8] sm:$0xff] 0.0
          %606 = vst [vmem:[#allocation2 + $0x9e0] sm:$0xff] 0.0
          %607 = vst [vmem:[#allocation2 + $0x9e8] sm:$0xff] 0.0
          %608 = vst [vmem:[#allocation2 + $0x9f0] sm:$0xff] 0.0
          %609 = vst [vmem:[#allocation2 + $0x9f8] sm:$0xff] 0.0
          %610 = vst [vmem:[#allocation2 + $0xa00] sm:$0xff] 0.0
          %611 = vst [vmem:[#allocation2 + $0xa08] sm:$0xff] 0.0
          %612 = vst [vmem:[#allocation2 + $0xa10] sm:$0xff] 0.0
          %613 = vst [vmem:[#allocation2 + $0xa18] sm:$0xff] 0.0
          %614 = vst [vmem:[#allocation2 + $0xa20] sm:$0xff] 0.0
          %615 = vst [vmem:[#allocation2 + $0xa28] sm:$0xff] 0.0
          %616 = vst [vmem:[#allocation2 + $0xa30] sm:$0xff] 0.0
          %617 = vst [vmem:[#allocation2 + $0xa38] sm:$0xff] 0.0
          %618 = vst [vmem:[#allocation2 + $0xa40] sm:$0xff] 0.0
          %619 = vst [vmem:[#allocation2 + $0xa48] sm:$0xff] 0.0
          %620 = vst [vmem:[#allocation2 + $0xa50] sm:$0xff] 0.0
          %621 = vst [vmem:[#allocation2 + $0xa58] sm:$0xff] 0.0
          %622 = vst [vmem:[#allocation2 + $0xa60] sm:$0xff] 0.0
          %623 = vst [vmem:[#allocation2 + $0xa68] sm:$0xff] 0.0
          %624 = vst [vmem:[#allocation2 + $0xa70] sm:$0xff] 0.0
          %625 = vst [vmem:[#allocation2 + $0xa78] sm:$0xff] 0.0
          %626 = vst [vmem:[#allocation2 + $0xa80] sm:$0xff] 0.0
          %627 = vst [vmem:[#allocation2 + $0xa88] sm:$0xff] 0.0
          %628 = vst [vmem:[#allocation2 + $0xa90] sm:$0xff] 0.0
          %629 = vst [vmem:[#allocation2 + $0xa98] sm:$0xff] 0.0
          %630 = vst [vmem:[#allocation2 + $0xaa0] sm:$0xff] 0.0
          %631 = vst [vmem:[#allocation2 + $0xaa8] sm:$0xff] 0.0
          %632 = vst [vmem:[#allocation2 + $0xab0] sm:$0xff] 0.0
          %633 = vst [vmem:[#allocation2 + $0xab8] sm:$0xff] 0.0
          %634 = vst [vmem:[#allocation2 + $0xac0] sm:$0xff] 0.0
          %635 = vst [vmem:[#allocation2 + $0xac8] sm:$0xff] 0.0
          %636 = vst [vmem:[#allocation2 + $0xad0] sm:$0xff] 0.0
          %637 = vst [vmem:[#allocation2 + $0xad8] sm:$0xff] 0.0
          %638 = vst [vmem:[#allocation2 + $0xae0] sm:$0xff] 0.0
          %639 = vst [vmem:[#allocation2 + $0xae8] sm:$0xff] 0.0
          %640 = vst [vmem:[#allocation2 + $0xaf0] sm:$0xff] 0.0
          %641 = vst [vmem:[#allocation2 + $0xaf8] sm:$0xff] 0.0
          %642 = vst [vmem:[#allocation2 + $0xb00] sm:$0xff] 0.0
          %643 = vst [vmem:[#allocation2 + $0xb08] sm:$0xff] 0.0
          %644 = vst [vmem:[#allocation2 + $0xb10] sm:$0xff] 0.0
          %645 = vst [vmem:[#allocation2 + $0xb18] sm:$0xff] 0.0
          %646 = vst [vmem:[#allocation2 + $0xb20] sm:$0xff] 0.0
          %647 = vst [vmem:[#allocation2 + $0xb28] sm:$0xff] 0.0
          %648 = vst [vmem:[#allocation2 + $0xb30] sm:$0xff] 0.0
          %649 = vst [vmem:[#allocation2 + $0xb38] sm:$0xff] 0.0
          %650 = vst [vmem:[#allocation2 + $0xb40] sm:$0xff] 0.0
          %651 = vst [vmem:[#allocation2 + $0xb48] sm:$0xff] 0.0
          %652 = vst [vmem:[#allocation2 + $0xb50] sm:$0xff] 0.0
          %653 = vst [vmem:[#allocation2 + $0xb58] sm:$0xff] 0.0
          %654 = vst [vmem:[#allocation2 + $0xb60] sm:$0xff] 0.0
          %655 = vst [vmem:[#allocation2 + $0xb68] sm:$0xff] 0.0
          %656 = vst [vmem:[#allocation2 + $0xb70] sm:$0xff] 0.0
          %657 = vst [vmem:[#allocation2 + $0xb78] sm:$0xff] 0.0
          %658 = vst [vmem:[#allocation2 + $0xb80] sm:$0xff] 0.0
          %659 = vst [vmem:[#allocation2 + $0xb88] sm:$0xff] 0.0
          %660 = vst [vmem:[#allocation2 + $0xb90] sm:$0xff] 0.0
          %661 = vst [vmem:[#allocation2 + $0xb98] sm:$0xff] 0.0
          %662 = vst [vmem:[#allocation2 + $0xba0] sm:$0xff] 0.0
          %663 = vst [vmem:[#allocation2 + $0xba8] sm:$0xff] 0.0
          %664 = vst [vmem:[#allocation2 + $0xbb0] sm:$0xff] 0.0
          %665 = vst [vmem:[#allocation2 + $0xbb8] sm:$0xff] 0.0
          %666 = vst [vmem:[#allocation2 + $0xbc0] sm:$0xff] 0.0
          %667 = vst [vmem:[#allocation2 + $0xbc8] sm:$0xff] 0.0
          %668 = vst [vmem:[#allocation2 + $0xbd0] sm:$0xff] 0.0
          %669 = vst [vmem:[#allocation2 + $0xbd8] sm:$0xff] 0.0
          %670 = vst [vmem:[#allocation2 + $0xbe0] sm:$0xff] 0.0
          %671 = vst [vmem:[#allocation2 + $0xbe8] sm:$0xff] 0.0
          %672 = vst [vmem:[#allocation2 + $0xbf0] sm:$0xff] 0.0
          %673 = vst [vmem:[#allocation2 + $0xbf8] sm:$0xff] 0.0
        $region48: #{tpu_custom_call.1} parent=31 // pred_fallthru
          _
        %v674 = vld [vmem:[#allocation2] sm:$0xff]
        %v675 = vld [vmem:[#allocation2 + $0x8] sm:$0xff]
        %v676 = vld [vmem:[#allocation2 + $0x10] sm:$0xff]
        %v677 = vld [vmem:[#allocation2 + $0x18] sm:$0xff]
        %v678 = vld [vmem:[#allocation2 + $0x20] sm:$0xff]
        %v679 = vld [vmem:[#allocation2 + $0x28] sm:$0xff]
        %v680 = vld [vmem:[#allocation2 + $0x30] sm:$0xff]
        %v681 = vld [vmem:[#allocation2 + $0x38] sm:$0xff]
        %v682 = vld [vmem:[#allocation2 + $0x40] sm:$0xff]
        %v683 = vld [vmem:[#allocation2 + $0x48] sm:$0xff]
        %v684 = vld [vmem:[#allocation2 + $0x50] sm:$0xff]
        %v685 = vld [vmem:[#allocation2 + $0x58] sm:$0xff]
        %v686 = vld [vmem:[#allocation2 + $0x60] sm:$0xff]
        %v687 = vld [vmem:[#allocation2 + $0x68] sm:$0xff]
        %v688 = vld [vmem:[#allocation2 + $0x70] sm:$0xff]
        %v689 = vld [vmem:[#allocation2 + $0x78] sm:$0xff]
        %v690 = vld [vmem:[#allocation2 + $0x80] sm:$0xff]
        %v691 = vld [vmem:[#allocation2 + $0x88] sm:$0xff]
        %v692 = vld [vmem:[#allocation2 + $0x90] sm:$0xff]
        %v693 = vld [vmem:[#allocation2 + $0x98] sm:$0xff]
        %v694 = vld [vmem:[#allocation2 + $0xa0] sm:$0xff]
        %v695 = vld [vmem:[#allocation2 + $0xa8] sm:$0xff]
        %v696 = vld [vmem:[#allocation2 + $0xb0] sm:$0xff]
        %v697 = vld [vmem:[#allocation2 + $0xb8] sm:$0xff]
        %v698 = vld [vmem:[#allocation2 + $0xc0] sm:$0xff]
        %v699 = vld [vmem:[#allocation2 + $0xc8] sm:$0xff]
        %v700 = vld [vmem:[#allocation2 + $0xd0] sm:$0xff]
        %v701 = vld [vmem:[#allocation2 + $0xd8] sm:$0xff]
        %v702 = vld [vmem:[#allocation2 + $0xe0] sm:$0xff]
        %v703 = vld [vmem:[#allocation2 + $0xe8] sm:$0xff]
        %v704 = vld [vmem:[#allocation2 + $0xf0] sm:$0xff]
        %v705 = vld [vmem:[#allocation2 + $0xf8] sm:$0xff]
        %v706 = vld [vmem:[#allocation2 + $0x100] sm:$0xff]
        %v707 = vld [vmem:[#allocation2 + $0x108] sm:$0xff]
        %v708 = vld [vmem:[#allocation2 + $0x110] sm:$0xff]
        %v709 = vld [vmem:[#allocation2 + $0x118] sm:$0xff]
        %v710 = vld [vmem:[#allocation2 + $0x120] sm:$0xff]
        %v711 = vld [vmem:[#allocation2 + $0x128] sm:$0xff]
        %v712 = vld [vmem:[#allocation2 + $0x130] sm:$0xff]
        %v713 = vld [vmem:[#allocation2 + $0x138] sm:$0xff]
        %v714 = vld [vmem:[#allocation2 + $0x140] sm:$0xff]
        %v715 = vld [vmem:[#allocation2 + $0x148] sm:$0xff]
        %v716 = vld [vmem:[#allocation2 + $0x150] sm:$0xff]
        %v717 = vld [vmem:[#allocation2 + $0x158] sm:$0xff]
        %v718 = vld [vmem:[#allocation2 + $0x160] sm:$0xff]
        %v719 = vld [vmem:[#allocation2 + $0x168] sm:$0xff]
        %v720 = vld [vmem:[#allocation2 + $0x170] sm:$0xff]
        %v721 = vld [vmem:[#allocation2 + $0x178] sm:$0xff]
        %v722 = vld [vmem:[#allocation2 + $0x180] sm:$0xff]
        %v723 = vld [vmem:[#allocation2 + $0x188] sm:$0xff]
        %v724 = vld [vmem:[#allocation2 + $0x190] sm:$0xff]
        %v725 = vld [vmem:[#allocation2 + $0x198] sm:$0xff]
        %v726 = vld [vmem:[#allocation2 + $0x1a0] sm:$0xff]
        %v727 = vld [vmem:[#allocation2 + $0x1a8] sm:$0xff]
        %v728 = vld [vmem:[#allocation2 + $0x1b0] sm:$0xff]
        %v729 = vld [vmem:[#allocation2 + $0x1b8] sm:$0xff]
        %v730 = vld [vmem:[#allocation2 + $0x1c0] sm:$0xff]
        %v731 = vld [vmem:[#allocation2 + $0x1c8] sm:$0xff]
        %v732 = vld [vmem:[#allocation2 + $0x1d0] sm:$0xff]
        %v733 = vld [vmem:[#allocation2 + $0x1d8] sm:$0xff]
        %v734 = vld [vmem:[#allocation2 + $0x1e0] sm:$0xff]
        %v735 = vld [vmem:[#allocation2 + $0x1e8] sm:$0xff]
        %v736 = vld [vmem:[#allocation2 + $0x1f0] sm:$0xff]
        %v737 = vld [vmem:[#allocation2 + $0x1f8] sm:$0xff]
        %v738 = vld [vmem:[#allocation2 + $0x200] sm:$0xff]
        %v739 = vld [vmem:[#allocation2 + $0x208] sm:$0xff]
        %v740 = vld [vmem:[#allocation2 + $0x210] sm:$0xff]
        %v741 = vld [vmem:[#allocation2 + $0x218] sm:$0xff]
        %v742 = vld [vmem:[#allocation2 + $0x220] sm:$0xff]
        %v743 = vld [vmem:[#allocation2 + $0x228] sm:$0xff]
        %v744 = vld [vmem:[#allocation2 + $0x230] sm:$0xff]
        %v745 = vld [vmem:[#allocation2 + $0x238] sm:$0xff]
        %v746 = vld [vmem:[#allocation2 + $0x240] sm:$0xff]
        %v747 = vld [vmem:[#allocation2 + $0x248] sm:$0xff]
        %v748 = vld [vmem:[#allocation2 + $0x250] sm:$0xff]
        %v749 = vld [vmem:[#allocation2 + $0x258] sm:$0xff]
        %v750 = vld [vmem:[#allocation2 + $0x260] sm:$0xff]
        %v751 = vld [vmem:[#allocation2 + $0x268] sm:$0xff]
        %v752 = vld [vmem:[#allocation2 + $0x270] sm:$0xff]
        %v753 = vld [vmem:[#allocation2 + $0x278] sm:$0xff]
        %v754 = vld [vmem:[#allocation2 + $0x280] sm:$0xff]
        %v755 = vld [vmem:[#allocation2 + $0x288] sm:$0xff]
        %v756 = vld [vmem:[#allocation2 + $0x290] sm:$0xff]
        %v757 = vld [vmem:[#allocation2 + $0x298] sm:$0xff]
        %v758 = vld [vmem:[#allocation2 + $0x2a0] sm:$0xff]
        %v759 = vld [vmem:[#allocation2 + $0x2a8] sm:$0xff]
        %v760 = vld [vmem:[#allocation2 + $0x2b0] sm:$0xff]
        %v761 = vld [vmem:[#allocation2 + $0x2b8] sm:$0xff]
        %v762 = vld [vmem:[#allocation2 + $0x2c0] sm:$0xff]
        %v763 = vld [vmem:[#allocation2 + $0x2c8] sm:$0xff]
        %v764 = vld [vmem:[#allocation2 + $0x2d0] sm:$0xff]
        %v765 = vld [vmem:[#allocation2 + $0x2d8] sm:$0xff]
        %v766 = vld [vmem:[#allocation2 + $0x2e0] sm:$0xff]
        %v767 = vld [vmem:[#allocation2 + $0x2e8] sm:$0xff]
        %v768 = vld [vmem:[#allocation2 + $0x2f0] sm:$0xff]
        %v769 = vld [vmem:[#allocation2 + $0x2f8] sm:$0xff]
        %v770 = vld [vmem:[#allocation2 + $0x300] sm:$0xff]
        %v771 = vld [vmem:[#allocation2 + $0x308] sm:$0xff]
        %v772 = vld [vmem:[#allocation2 + $0x310] sm:$0xff]
        %v773 = vld [vmem:[#allocation2 + $0x318] sm:$0xff]
        %v774 = vld [vmem:[#allocation2 + $0x320] sm:$0xff]
        %v775 = vld [vmem:[#allocation2 + $0x328] sm:$0xff]
        %v776 = vld [vmem:[#allocation2 + $0x330] sm:$0xff]
        %v777 = vld [vmem:[#allocation2 + $0x338] sm:$0xff]
        %v778 = vld [vmem:[#allocation2 + $0x340] sm:$0xff]
        %v779 = vld [vmem:[#allocation2 + $0x348] sm:$0xff]
        %v780 = vld [vmem:[#allocation2 + $0x350] sm:$0xff]
        %v781 = vld [vmem:[#allocation2 + $0x358] sm:$0xff]
        %v782 = vld [vmem:[#allocation2 + $0x360] sm:$0xff]
        %v783 = vld [vmem:[#allocation2 + $0x368] sm:$0xff]
        %v784 = vld [vmem:[#allocation2 + $0x370] sm:$0xff]
        %v785 = vld [vmem:[#allocation2 + $0x378] sm:$0xff]
        %v786 = vld [vmem:[#allocation2 + $0x380] sm:$0xff]
        %v787 = vld [vmem:[#allocation2 + $0x388] sm:$0xff]
        %v788 = vld [vmem:[#allocation2 + $0x390] sm:$0xff]
        %v789 = vld [vmem:[#allocation2 + $0x398] sm:$0xff]
        %v790 = vld [vmem:[#allocation2 + $0x3a0] sm:$0xff]
        %v791 = vld [vmem:[#allocation2 + $0x3a8] sm:$0xff]
        %v792 = vld [vmem:[#allocation2 + $0x3b0] sm:$0xff]
        %v793 = vld [vmem:[#allocation2 + $0x3b8] sm:$0xff]
        %v794 = vld [vmem:[#allocation2 + $0x3c0] sm:$0xff]
        %v795 = vld [vmem:[#allocation2 + $0x3c8] sm:$0xff]
        %v796 = vld [vmem:[#allocation2 + $0x3d0] sm:$0xff]
        %v797 = vld [vmem:[#allocation2 + $0x3d8] sm:$0xff]
        %v798 = vld [vmem:[#allocation2 + $0x3e0] sm:$0xff]
        %v799 = vld [vmem:[#allocation2 + $0x3e8] sm:$0xff]
        %v800 = vld [vmem:[#allocation2 + $0x3f0] sm:$0xff]
        %v801 = vld [vmem:[#allocation2 + $0x3f8] sm:$0xff]
        %v802 = vld [vmem:[#allocation2 + $0x400] sm:$0xff]
        %v803 = vld [vmem:[#allocation2 + $0x408] sm:$0xff]
        %v804 = vld [vmem:[#allocation2 + $0x410] sm:$0xff]
        %v805 = vld [vmem:[#allocation2 + $0x418] sm:$0xff]
        %v806 = vld [vmem:[#allocation2 + $0x420] sm:$0xff]
        %v807 = vld [vmem:[#allocation2 + $0x428] sm:$0xff]
        %v808 = vld [vmem:[#allocation2 + $0x430] sm:$0xff]
        %v809 = vld [vmem:[#allocation2 + $0x438] sm:$0xff]
        %v810 = vld [vmem:[#allocation2 + $0x440] sm:$0xff]
        %v811 = vld [vmem:[#allocation2 + $0x448] sm:$0xff]
        %v812 = vld [vmem:[#allocation2 + $0x450] sm:$0xff]
        %v813 = vld [vmem:[#allocation2 + $0x458] sm:$0xff]
        %v814 = vld [vmem:[#allocation2 + $0x460] sm:$0xff]
        %v815 = vld [vmem:[#allocation2 + $0x468] sm:$0xff]
        %v816 = vld [vmem:[#allocation2 + $0x470] sm:$0xff]
        %v817 = vld [vmem:[#allocation2 + $0x478] sm:$0xff]
        %v818 = vld [vmem:[#allocation2 + $0x480] sm:$0xff]
        %v819 = vld [vmem:[#allocation2 + $0x488] sm:$0xff]
        %v820 = vld [vmem:[#allocation2 + $0x490] sm:$0xff]
        %v821 = vld [vmem:[#allocation2 + $0x498] sm:$0xff]
        %v822 = vld [vmem:[#allocation2 + $0x4a0] sm:$0xff]
        %v823 = vld [vmem:[#allocation2 + $0x4a8] sm:$0xff]
        %v824 = vld [vmem:[#allocation2 + $0x4b0] sm:$0xff]
        %v825 = vld [vmem:[#allocation2 + $0x4b8] sm:$0xff]
        %v826 = vld [vmem:[#allocation2 + $0x4c0] sm:$0xff]
        %v827 = vld [vmem:[#allocation2 + $0x4c8] sm:$0xff]
        %v828 = vld [vmem:[#allocation2 + $0x4d0] sm:$0xff]
        %v829 = vld [vmem:[#allocation2 + $0x4d8] sm:$0xff]
        %v830 = vld [vmem:[#allocation2 + $0x4e0] sm:$0xff]
        %v831 = vld [vmem:[#allocation2 + $0x4e8] sm:$0xff]
        %v832 = vld [vmem:[#allocation2 + $0x4f0] sm:$0xff]
        %v833 = vld [vmem:[#allocation2 + $0x4f8] sm:$0xff]
        %v834 = vld [vmem:[#allocation2 + $0x500] sm:$0xff]
        %v835 = vld [vmem:[#allocation2 + $0x508] sm:$0xff]
        %v836 = vld [vmem:[#allocation2 + $0x510] sm:$0xff]
        %v837 = vld [vmem:[#allocation2 + $0x518] sm:$0xff]
        %v838 = vld [vmem:[#allocation2 + $0x520] sm:$0xff]
        %v839 = vld [vmem:[#allocation2 + $0x528] sm:$0xff]
        %v840 = vld [vmem:[#allocation2 + $0x530] sm:$0xff]
        %v841 = vld [vmem:[#allocation2 + $0x538] sm:$0xff]
        %v842 = vld [vmem:[#allocation2 + $0x540] sm:$0xff]
        %v843 = vld [vmem:[#allocation2 + $0x548] sm:$0xff]
        %v844 = vld [vmem:[#allocation2 + $0x550] sm:$0xff]
        %v845 = vld [vmem:[#allocation2 + $0x558] sm:$0xff]
        %v846 = vld [vmem:[#allocation2 + $0x560] sm:$0xff]
        %v847 = vld [vmem:[#allocation2 + $0x568] sm:$0xff]
        %v848 = vld [vmem:[#allocation2 + $0x570] sm:$0xff]
        %v849 = vld [vmem:[#allocation2 + $0x578] sm:$0xff]
        %v850 = vld [vmem:[#allocation2 + $0x580] sm:$0xff]
        %v851 = vld [vmem:[#allocation2 + $0x588] sm:$0xff]
        %v852 = vld [vmem:[#allocation2 + $0x590] sm:$0xff]
        %v853 = vld [vmem:[#allocation2 + $0x598] sm:$0xff]
        %v854 = vld [vmem:[#allocation2 + $0x5a0] sm:$0xff]
        %v855 = vld [vmem:[#allocation2 + $0x5a8] sm:$0xff]
        %v856 = vld [vmem:[#allocation2 + $0x5b0] sm:$0xff]
        %v857 = vld [vmem:[#allocation2 + $0x5b8] sm:$0xff]
        %v858 = vld [vmem:[#allocation2 + $0x5c0] sm:$0xff]
        %v859 = vld [vmem:[#allocation2 + $0x5c8] sm:$0xff]
        %v860 = vld [vmem:[#allocation2 + $0x5d0] sm:$0xff]
        %v861 = vld [vmem:[#allocation2 + $0x5d8] sm:$0xff]
        %v862 = vld [vmem:[#allocation2 + $0x5e0] sm:$0xff]
        %v863 = vld [vmem:[#allocation2 + $0x5e8] sm:$0xff]
        %v864 = vld [vmem:[#allocation2 + $0x5f0] sm:$0xff]
        %v865 = vld [vmem:[#allocation2 + $0x5f8] sm:$0xff]
        %v866 = vld [vmem:[#allocation2 + $0x600] sm:$0xff]
        %v867 = vld [vmem:[#allocation2 + $0x608] sm:$0xff]
        %v868 = vld [vmem:[#allocation2 + $0x610] sm:$0xff]
        %v869 = vld [vmem:[#allocation2 + $0x618] sm:$0xff]
        %v870 = vld [vmem:[#allocation2 + $0x620] sm:$0xff]
        %v871 = vld [vmem:[#allocation2 + $0x628] sm:$0xff]
        %v872 = vld [vmem:[#allocation2 + $0x630] sm:$0xff]
        %v873 = vld [vmem:[#allocation2 + $0x638] sm:$0xff]
        %v874 = vld [vmem:[#allocation2 + $0x640] sm:$0xff]
        %v875 = vld [vmem:[#allocation2 + $0x648] sm:$0xff]
        %v876 = vld [vmem:[#allocation2 + $0x650] sm:$0xff]
        %v877 = vld [vmem:[#allocation2 + $0x658] sm:$0xff]
        %v878 = vld [vmem:[#allocation2 + $0x660] sm:$0xff]
        %v879 = vld [vmem:[#allocation2 + $0x668] sm:$0xff]
        %v880 = vld [vmem:[#allocation2 + $0x670] sm:$0xff]
        %v881 = vld [vmem:[#allocation2 + $0x678] sm:$0xff]
        %v882 = vld [vmem:[#allocation2 + $0x680] sm:$0xff]
        %v883 = vld [vmem:[#allocation2 + $0x688] sm:$0xff]
        %v884 = vld [vmem:[#allocation2 + $0x690] sm:$0xff]
        %v885 = vld [vmem:[#allocation2 + $0x698] sm:$0xff]
        %v886 = vld [vmem:[#allocation2 + $0x6a0] sm:$0xff]
        %v887 = vld [vmem:[#allocation2 + $0x6a8] sm:$0xff]
        %v888 = vld [vmem:[#allocation2 + $0x6b0] sm:$0xff]
        %v889 = vld [vmem:[#allocation2 + $0x6b8] sm:$0xff]
        %v890 = vld [vmem:[#allocation2 + $0x6c0] sm:$0xff]
        %v891 = vld [vmem:[#allocation2 + $0x6c8] sm:$0xff]
        %v892 = vld [vmem:[#allocation2 + $0x6d0] sm:$0xff]
        %v893 = vld [vmem:[#allocation2 + $0x6d8] sm:$0xff]
        %v894 = vld [vmem:[#allocation2 + $0x6e0] sm:$0xff]
        %v895 = vld [vmem:[#allocation2 + $0x6e8] sm:$0xff]
        %v896 = vld [vmem:[#allocation2 + $0x6f0] sm:$0xff]
        %v897 = vld [vmem:[#allocation2 + $0x6f8] sm:$0xff]
        %v898 = vld [vmem:[#allocation2 + $0x700] sm:$0xff]
        %v899 = vld [vmem:[#allocation2 + $0x708] sm:$0xff]
        %v900 = vld [vmem:[#allocation2 + $0x710] sm:$0xff]
        %v901 = vld [vmem:[#allocation2 + $0x718] sm:$0xff]
        %v902 = vld [vmem:[#allocation2 + $0x720] sm:$0xff]
        %v903 = vld [vmem:[#allocation2 + $0x728] sm:$0xff]
        %v904 = vld [vmem:[#allocation2 + $0x730] sm:$0xff]
        %v905 = vld [vmem:[#allocation2 + $0x738] sm:$0xff]
        %v906 = vld [vmem:[#allocation2 + $0x740] sm:$0xff]
        %v907 = vld [vmem:[#allocation2 + $0x748] sm:$0xff]
        %v908 = vld [vmem:[#allocation2 + $0x750] sm:$0xff]
        %v909 = vld [vmem:[#allocation2 + $0x758] sm:$0xff]
        %v910 = vld [vmem:[#allocation2 + $0x760] sm:$0xff]
        %v911 = vld [vmem:[#allocation2 + $0x768] sm:$0xff]
        %v912 = vld [vmem:[#allocation2 + $0x770] sm:$0xff]
        %v913 = vld [vmem:[#allocation2 + $0x778] sm:$0xff]
        %v914 = vld [vmem:[#allocation2 + $0x780] sm:$0xff]
        %v915 = vld [vmem:[#allocation2 + $0x788] sm:$0xff]
        %v916 = vld [vmem:[#allocation2 + $0x790] sm:$0xff]
        %v917 = vld [vmem:[#allocation2 + $0x798] sm:$0xff]
        %v918 = vld [vmem:[#allocation2 + $0x7a0] sm:$0xff]
        %v919 = vld [vmem:[#allocation2 + $0x7a8] sm:$0xff]
        %v920 = vld [vmem:[#allocation2 + $0x7b0] sm:$0xff]
        %v921 = vld [vmem:[#allocation2 + $0x7b8] sm:$0xff]
        %v922 = vld [vmem:[#allocation2 + $0x7c0] sm:$0xff]
        %v923 = vld [vmem:[#allocation2 + $0x7c8] sm:$0xff]
        %v924 = vld [vmem:[#allocation2 + $0x7d0] sm:$0xff]
        %v925 = vld [vmem:[#allocation2 + $0x7d8] sm:$0xff]
        %v926 = vld [vmem:[#allocation2 + $0x7e0] sm:$0xff]
        %v927 = vld [vmem:[#allocation2 + $0x7e8] sm:$0xff]
        %v928 = vld [vmem:[#allocation2 + $0x7f0] sm:$0xff]
        %v929 = vld [vmem:[#allocation2 + $0x7f8] sm:$0xff]
        %v930 = vld [vmem:[#allocation2 + $0x800] sm:$0xff]
        %v931 = vld [vmem:[#allocation2 + $0x808] sm:$0xff]
        %v932 = vld [vmem:[#allocation2 + $0x810] sm:$0xff]
        %v933 = vld [vmem:[#allocation2 + $0x818] sm:$0xff]
        %v934 = vld [vmem:[#allocation2 + $0x820] sm:$0xff]
        %v935 = vld [vmem:[#allocation2 + $0x828] sm:$0xff]
        %v936 = vld [vmem:[#allocation2 + $0x830] sm:$0xff]
        %v937 = vld [vmem:[#allocation2 + $0x838] sm:$0xff]
        %v938 = vld [vmem:[#allocation2 + $0x840] sm:$0xff]
        %v939 = vld [vmem:[#allocation2 + $0x848] sm:$0xff]
        %v940 = vld [vmem:[#allocation2 + $0x850] sm:$0xff]
        %v941 = vld [vmem:[#allocation2 + $0x858] sm:$0xff]
        %v942 = vld [vmem:[#allocation2 + $0x860] sm:$0xff]
        %v943 = vld [vmem:[#allocation2 + $0x868] sm:$0xff]
        %v944 = vld [vmem:[#allocation2 + $0x870] sm:$0xff]
        %v945 = vld [vmem:[#allocation2 + $0x878] sm:$0xff]
        %v946 = vld [vmem:[#allocation2 + $0x880] sm:$0xff]
        %v947 = vld [vmem:[#allocation2 + $0x888] sm:$0xff]
        %v948 = vld [vmem:[#allocation2 + $0x890] sm:$0xff]
        %v949 = vld [vmem:[#allocation2 + $0x898] sm:$0xff]
        %v950 = vld [vmem:[#allocation2 + $0x8a0] sm:$0xff]
        %v951 = vld [vmem:[#allocation2 + $0x8a8] sm:$0xff]
        %v952 = vld [vmem:[#allocation2 + $0x8b0] sm:$0xff]
        %v953 = vld [vmem:[#allocation2 + $0x8b8] sm:$0xff]
        %v954 = vld [vmem:[#allocation2 + $0x8c0] sm:$0xff]
        %v955 = vld [vmem:[#allocation2 + $0x8c8] sm:$0xff]
        %v956 = vld [vmem:[#allocation2 + $0x8d0] sm:$0xff]
        %v957 = vld [vmem:[#allocation2 + $0x8d8] sm:$0xff]
        %v958 = vld [vmem:[#allocation2 + $0x8e0] sm:$0xff]
        %v959 = vld [vmem:[#allocation2 + $0x8e8] sm:$0xff]
        %v960 = vld [vmem:[#allocation2 + $0x8f0] sm:$0xff]
        %v961 = vld [vmem:[#allocation2 + $0x8f8] sm:$0xff]
        %v962 = vld [vmem:[#allocation2 + $0x900] sm:$0xff]
        %v963 = vld [vmem:[#allocation2 + $0x908] sm:$0xff]
        %v964 = vld [vmem:[#allocation2 + $0x910] sm:$0xff]
        %v965 = vld [vmem:[#allocation2 + $0x918] sm:$0xff]
        %v966 = vld [vmem:[#allocation2 + $0x920] sm:$0xff]
        %v967 = vld [vmem:[#allocation2 + $0x928] sm:$0xff]
        %v968 = vld [vmem:[#allocation2 + $0x930] sm:$0xff]
        %v969 = vld [vmem:[#allocation2 + $0x938] sm:$0xff]
        %v970 = vld [vmem:[#allocation2 + $0x940] sm:$0xff]
        %v971 = vld [vmem:[#allocation2 + $0x948] sm:$0xff]
        %v972 = vld [vmem:[#allocation2 + $0x950] sm:$0xff]
        %v973 = vld [vmem:[#allocation2 + $0x958] sm:$0xff]
        %v974 = vld [vmem:[#allocation2 + $0x960] sm:$0xff]
        %v975 = vld [vmem:[#allocation2 + $0x968] sm:$0xff]
        %v976 = vld [vmem:[#allocation2 + $0x970] sm:$0xff]
        %v977 = vld [vmem:[#allocation2 + $0x978] sm:$0xff]
        %v978 = vld [vmem:[#allocation2 + $0x980] sm:$0xff]
        %v979 = vld [vmem:[#allocation2 + $0x988] sm:$0xff]
        %v980 = vld [vmem:[#allocation2 + $0x990] sm:$0xff]
        %v981 = vld [vmem:[#allocation2 + $0x998] sm:$0xff]
        %v982 = vld [vmem:[#allocation2 + $0x9a0] sm:$0xff]
        %v983 = vld [vmem:[#allocation2 + $0x9a8] sm:$0xff]
        %v984 = vld [vmem:[#allocation2 + $0x9b0] sm:$0xff]
        %v985 = vld [vmem:[#allocation2 + $0x9b8] sm:$0xff]
        %v986 = vld [vmem:[#allocation2 + $0x9c0] sm:$0xff]
        %v987 = vld [vmem:[#allocation2 + $0x9c8] sm:$0xff]
        %v988 = vld [vmem:[#allocation2 + $0x9d0] sm:$0xff]
        %v989 = vld [vmem:[#allocation2 + $0x9d8] sm:$0xff]
        %v990 = vld [vmem:[#allocation2 + $0x9e0] sm:$0xff]
        %v991 = vld [vmem:[#allocation2 + $0x9e8] sm:$0xff]
        %v992 = vld [vmem:[#allocation2 + $0x9f0] sm:$0xff]
        %v993 = vld [vmem:[#allocation2 + $0x9f8] sm:$0xff]
        %v994 = vld [vmem:[#allocation2 + $0xa00] sm:$0xff]
        %v995 = vld [vmem:[#allocation2 + $0xa08] sm:$0xff]
        %v996 = vld [vmem:[#allocation2 + $0xa10] sm:$0xff]
        %v997 = vld [vmem:[#allocation2 + $0xa18] sm:$0xff]
        %v998 = vld [vmem:[#allocation2 + $0xa20] sm:$0xff]
        %v999 = vld [vmem:[#allocation2 + $0xa28] sm:$0xff]
        %v1000 = vld [vmem:[#allocation2 + $0xa30] sm:$0xff]
        %v1001 = vld [vmem:[#allocation2 + $0xa38] sm:$0xff]
        %v1002 = vld [vmem:[#allocation2 + $0xa40] sm:$0xff]
        %v1003 = vld [vmem:[#allocation2 + $0xa48] sm:$0xff]
        %v1004 = vld [vmem:[#allocation2 + $0xa50] sm:$0xff]
        %v1005 = vld [vmem:[#allocation2 + $0xa58] sm:$0xff]
        %v1006 = vld [vmem:[#allocation2 + $0xa60] sm:$0xff]
        %v1007 = vld [vmem:[#allocation2 + $0xa68] sm:$0xff]
        %v1008 = vld [vmem:[#allocation2 + $0xa70] sm:$0xff]
        %v1009 = vld [vmem:[#allocation2 + $0xa78] sm:$0xff]
        %v1010 = vld [vmem:[#allocation2 + $0xa80] sm:$0xff]
        %v1011 = vld [vmem:[#allocation2 + $0xa88] sm:$0xff]
        %v1012 = vld [vmem:[#allocation2 + $0xa90] sm:$0xff]
        %v1013 = vld [vmem:[#allocation2 + $0xa98] sm:$0xff]
        %v1014 = vld [vmem:[#allocation2 + $0xaa0] sm:$0xff]
        %v1015 = vld [vmem:[#allocation2 + $0xaa8] sm:$0xff]
        %v1016 = vld [vmem:[#allocation2 + $0xab0] sm:$0xff]
        %v1017 = vld [vmem:[#allocation2 + $0xab8] sm:$0xff]
        %v1018 = vld [vmem:[#allocation2 + $0xac0] sm:$0xff]
        %v1019 = vld [vmem:[#allocation2 + $0xac8] sm:$0xff]
        %v1020 = vld [vmem:[#allocation2 + $0xad0] sm:$0xff]
        %v1021 = vld [vmem:[#allocation2 + $0xad8] sm:$0xff]
        %v1022 = vld [vmem:[#allocation2 + $0xae0] sm:$0xff]
        %v1023 = vld [vmem:[#allocation2 + $0xae8] sm:$0xff]
        %v1024 = vld [vmem:[#allocation2 + $0xaf0] sm:$0xff]
        %v1025 = vld [vmem:[#allocation2 + $0xaf8] sm:$0xff]
        %v1026 = vld [vmem:[#allocation2 + $0xb00] sm:$0xff]
        %v1027 = vld [vmem:[#allocation2 + $0xb08] sm:$0xff]
        %v1028 = vld [vmem:[#allocation2 + $0xb10] sm:$0xff]
        %v1029 = vld [vmem:[#allocation2 + $0xb18] sm:$0xff]
        %v1030 = vld [vmem:[#allocation2 + $0xb20] sm:$0xff]
        %v1031 = vld [vmem:[#allocation2 + $0xb28] sm:$0xff]
        %v1032 = vld [vmem:[#allocation2 + $0xb30] sm:$0xff]
        %v1033 = vld [vmem:[#allocation2 + $0xb38] sm:$0xff]
        %v1034 = vld [vmem:[#allocation2 + $0xb40] sm:$0xff]
        %v1035 = vld [vmem:[#allocation2 + $0xb48] sm:$0xff]
        %v1036 = vld [vmem:[#allocation2 + $0xb50] sm:$0xff]
        %v1037 = vld [vmem:[#allocation2 + $0xb58] sm:$0xff]
        %v1038 = vld [vmem:[#allocation2 + $0xb60] sm:$0xff]
        %v1039 = vld [vmem:[#allocation2 + $0xb68] sm:$0xff]
        %v1040 = vld [vmem:[#allocation2 + $0xb70] sm:$0xff]
        %v1041 = vld [vmem:[#allocation2 + $0xb78] sm:$0xff]
        %v1042 = vld [vmem:[#allocation2 + $0xb80] sm:$0xff]
        %v1043 = vld [vmem:[#allocation2 + $0xb88] sm:$0xff]
        %v1044 = vld [vmem:[#allocation2 + $0xb90] sm:$0xff]
        %v1045 = vld [vmem:[#allocation2 + $0xb98] sm:$0xff]
        %v1046 = vld [vmem:[#allocation2 + $0xba0] sm:$0xff]
        %v1047 = vld [vmem:[#allocation2 + $0xba8] sm:$0xff]
        %v1048 = vld [vmem:[#allocation2 + $0xbb0] sm:$0xff]
        %v1049 = vld [vmem:[#allocation2 + $0xbb8] sm:$0xff]
        %v1050 = vld [vmem:[#allocation2 + $0xbc0] sm:$0xff]
        %v1051 = vld [vmem:[#allocation2 + $0xbc8] sm:$0xff]
        %v1052 = vld [vmem:[#allocation2 + $0xbd0] sm:$0xff]
        %v1053 = vld [vmem:[#allocation2 + $0xbd8] sm:$0xff]
        %v1054 = vld [vmem:[#allocation2 + $0xbe0] sm:$0xff]
        %v1055 = vld [vmem:[#allocation2 + $0xbe8] sm:$0xff]
        %v1056 = vld [vmem:[#allocation2 + $0xbf0] sm:$0xff]
        %v1057 = vld [vmem:[#allocation2 + $0xbf8] sm:$0xff]
        %v1058 = vld [vmem:[%s238] sm:$0xff]
        %v1059 = vld [vmem:[%s238 + $0x8] sm:$0xff]
        %v1060 = vld [vmem:[%s238 + $0x10] sm:$0xff]
        %v1061 = vld [vmem:[%s238 + $0x18] sm:$0xff]
        %v1062 = vld [vmem:[%s238 + $0x20] sm:$0xff]
        %v1063 = vld [vmem:[%s238 + $0x28] sm:$0xff]
        %v1064 = vld [vmem:[%s238 + $0x30] sm:$0xff]
        %v1065 = vld [vmem:[%s238 + $0x38] sm:$0xff]
        %v1066 = vld [vmem:[%s238 + $0x40] sm:$0xff]
        %v1067 = vld [vmem:[%s238 + $0x48] sm:$0xff]
        %v1068 = vld [vmem:[%s238 + $0x50] sm:$0xff]
        %v1069 = vld [vmem:[%s238 + $0x58] sm:$0xff]
        %v1070 = vld [vmem:[%s238 + $0x60] sm:$0xff]
        %v1071 = vld [vmem:[%s238 + $0x68] sm:$0xff]
        %v1072 = vld [vmem:[%s238 + $0x70] sm:$0xff]
        %v1073 = vld [vmem:[%s238 + $0x78] sm:$0xff]
        %v1074 = vld [vmem:[%s238 + $0x80] sm:$0xff]
        %v1075 = vld [vmem:[%s238 + $0x88] sm:$0xff]
        %v1076 = vld [vmem:[%s238 + $0x90] sm:$0xff]
        %v1077 = vld [vmem:[%s238 + $0x98] sm:$0xff]
        %v1078 = vld [vmem:[%s238 + $0xa0] sm:$0xff]
        %v1079 = vld [vmem:[%s238 + $0xa8] sm:$0xff]
        %v1080 = vld [vmem:[%s238 + $0xb0] sm:$0xff]
        %v1081 = vld [vmem:[%s238 + $0xb8] sm:$0xff]
        %v1082 = vld [vmem:[%s238 + $0xc0] sm:$0xff]
        %v1083 = vld [vmem:[%s238 + $0xc8] sm:$0xff]
        %v1084 = vld [vmem:[%s238 + $0xd0] sm:$0xff]
        %v1085 = vld [vmem:[%s238 + $0xd8] sm:$0xff]
        %v1086 = vld [vmem:[%s238 + $0xe0] sm:$0xff]
        %v1087 = vld [vmem:[%s238 + $0xe8] sm:$0xff]
        %v1088 = vld [vmem:[%s238 + $0xf0] sm:$0xff]
        %v1089 = vld [vmem:[%s238 + $0xf8] sm:$0xff]
        %v1090 = vld [vmem:[%s238 + $0x100] sm:$0xff]
        %v1091 = vld [vmem:[%s238 + $0x108] sm:$0xff]
        %v1092 = vld [vmem:[%s238 + $0x110] sm:$0xff]
        %v1093 = vld [vmem:[%s238 + $0x118] sm:$0xff]
        %v1094 = vld [vmem:[%s238 + $0x120] sm:$0xff]
        %v1095 = vld [vmem:[%s238 + $0x128] sm:$0xff]
        %v1096 = vld [vmem:[%s238 + $0x130] sm:$0xff]
        %v1097 = vld [vmem:[%s238 + $0x138] sm:$0xff]
        %v1098 = vld [vmem:[%s238 + $0x140] sm:$0xff]
        %v1099 = vld [vmem:[%s238 + $0x148] sm:$0xff]
        %v1100 = vld [vmem:[%s238 + $0x150] sm:$0xff]
        %v1101 = vld [vmem:[%s238 + $0x158] sm:$0xff]
        %v1102 = vld [vmem:[%s238 + $0x160] sm:$0xff]
        %v1103 = vld [vmem:[%s238 + $0x168] sm:$0xff]
        %v1104 = vld [vmem:[%s238 + $0x170] sm:$0xff]
        %v1105 = vld [vmem:[%s238 + $0x178] sm:$0xff]
        %v1106 = vld [vmem:[%s238 + $0x180] sm:$0xff]
        %v1107 = vld [vmem:[%s238 + $0x188] sm:$0xff]
        %v1108 = vld [vmem:[%s238 + $0x190] sm:$0xff]
        %v1109 = vld [vmem:[%s238 + $0x198] sm:$0xff]
        %v1110 = vld [vmem:[%s238 + $0x1a0] sm:$0xff]
        %v1111 = vld [vmem:[%s238 + $0x1a8] sm:$0xff]
        %v1112 = vld [vmem:[%s238 + $0x1b0] sm:$0xff]
        %v1113 = vld [vmem:[%s238 + $0x1b8] sm:$0xff]
        %v1114 = vld [vmem:[%s238 + $0x1c0] sm:$0xff]
        %v1115 = vld [vmem:[%s238 + $0x1c8] sm:$0xff]
        %v1116 = vld [vmem:[%s238 + $0x1d0] sm:$0xff]
        %v1117 = vld [vmem:[%s238 + $0x1d8] sm:$0xff]
        %v1118 = vld [vmem:[%s238 + $0x1e0] sm:$0xff]
        %v1119 = vld [vmem:[%s238 + $0x1e8] sm:$0xff]
        %v1120 = vld [vmem:[%s238 + $0x1f0] sm:$0xff]
        %v1121 = vld [vmem:[%s238 + $0x1f8] sm:$0xff]
        %v1122 = vpack.c.bf16 %v1059, %v1058
        %v1123 = vpack.c.bf16 %v1061, %v1060
        %v1124 = vpack.c.bf16 %v1063, %v1062
        %v1125 = vpack.c.bf16 %v1065, %v1064
        %v1126 = vpack.c.bf16 %v1067, %v1066
        %v1127 = vpack.c.bf16 %v1069, %v1068
        %v1128 = vpack.c.bf16 %v1071, %v1070
        %v1129 = vpack.c.bf16 %v1073, %v1072
        %v1130 = vpack.c.bf16 %v1075, %v1074
        %v1131 = vpack.c.bf16 %v1077, %v1076
        %v1132 = vpack.c.bf16 %v1079, %v1078
        %v1133 = vpack.c.bf16 %v1081, %v1080
        %v1134 = vpack.c.bf16 %v1083, %v1082
        %v1135 = vpack.c.bf16 %v1085, %v1084
        %v1136 = vpack.c.bf16 %v1087, %v1086
        %v1137 = vpack.c.bf16 %v1089, %v1088
        %v1138 = vpack.c.bf16 %v1091, %v1090
        %v1139 = vpack.c.bf16 %v1093, %v1092
        %v1140 = vpack.c.bf16 %v1095, %v1094
        %v1141 = vpack.c.bf16 %v1097, %v1096
        %v1142 = vpack.c.bf16 %v1099, %v1098
        %v1143 = vpack.c.bf16 %v1101, %v1100
        %v1144 = vpack.c.bf16 %v1103, %v1102
        %v1145 = vpack.c.bf16 %v1105, %v1104
        %v1146 = vpack.c.bf16 %v1107, %v1106
        %v1147 = vpack.c.bf16 %v1109, %v1108
        %v1148 = vpack.c.bf16 %v1111, %v1110
        %v1149 = vpack.c.bf16 %v1113, %v1112
        %v1150 = vpack.c.bf16 %v1115, %v1114
        %v1151 = vpack.c.bf16 %v1117, %v1116
        %v1152 = vpack.c.bf16 %v1119, %v1118
        %v1153 = vpack.c.bf16 %v1121, %v1120
        %v1154 = vld [vmem:[%s247] sm:$0xff]
        %v1155 = vld [vmem:[%s247 + $0x8] sm:$0xff]
        %v1156 = vld [vmem:[%s247 + $0x10] sm:$0xff]
        %v1157 = vld [vmem:[%s247 + $0x18] sm:$0xff]
        %v1158 = vld [vmem:[%s247 + $0x20] sm:$0xff]
        %v1159 = vld [vmem:[%s247 + $0x28] sm:$0xff]
        %v1160 = vld [vmem:[%s247 + $0x30] sm:$0xff]
        %v1161 = vld [vmem:[%s247 + $0x38] sm:$0xff]
        %v1162 = vld [vmem:[%s247 + $0x40] sm:$0xff]
        %v1163 = vld [vmem:[%s247 + $0x48] sm:$0xff]
        %v1164 = vld [vmem:[%s247 + $0x50] sm:$0xff]
        %v1165 = vld [vmem:[%s247 + $0x58] sm:$0xff]
        %v1166 = vld [vmem:[%s247 + $0x60] sm:$0xff]
        %v1167 = vld [vmem:[%s247 + $0x68] sm:$0xff]
        %v1168 = vld [vmem:[%s247 + $0x70] sm:$0xff]
        %v1169 = vld [vmem:[%s247 + $0x78] sm:$0xff]
        %v1170 = vld [vmem:[%s247 + $0x80] sm:$0xff]
        %v1171 = vld [vmem:[%s247 + $0x88] sm:$0xff]
        %v1172 = vld [vmem:[%s247 + $0x90] sm:$0xff]
        %v1173 = vld [vmem:[%s247 + $0x98] sm:$0xff]
        %v1174 = vld [vmem:[%s247 + $0xa0] sm:$0xff]
        %v1175 = vld [vmem:[%s247 + $0xa8] sm:$0xff]
        %v1176 = vld [vmem:[%s247 + $0xb0] sm:$0xff]
        %v1177 = vld [vmem:[%s247 + $0xb8] sm:$0xff]
        %v1178 = vld [vmem:[%s247 + $0xc0] sm:$0xff]
        %v1179 = vld [vmem:[%s247 + $0xc8] sm:$0xff]
        %v1180 = vld [vmem:[%s247 + $0xd0] sm:$0xff]
        %v1181 = vld [vmem:[%s247 + $0xd8] sm:$0xff]
        %v1182 = vld [vmem:[%s247 + $0xe0] sm:$0xff]
        %v1183 = vld [vmem:[%s247 + $0xe8] sm:$0xff]
        %v1184 = vld [vmem:[%s247 + $0xf0] sm:$0xff]
        %v1185 = vld [vmem:[%s247 + $0xf8] sm:$0xff]
        %v1186 = vld [vmem:[%s247 + $0x100] sm:$0xff]
        %v1187 = vld [vmem:[%s247 + $0x108] sm:$0xff]
        %v1188 = vld [vmem:[%s247 + $0x110] sm:$0xff]
        %v1189 = vld [vmem:[%s247 + $0x118] sm:$0xff]
        %v1190 = vld [vmem:[%s247 + $0x120] sm:$0xff]
        %v1191 = vld [vmem:[%s247 + $0x128] sm:$0xff]
        %v1192 = vld [vmem:[%s247 + $0x130] sm:$0xff]
        %v1193 = vld [vmem:[%s247 + $0x138] sm:$0xff]
        %v1194 = vld [vmem:[%s247 + $0x140] sm:$0xff]
        %v1195 = vld [vmem:[%s247 + $0x148] sm:$0xff]
        %v1196 = vld [vmem:[%s247 + $0x150] sm:$0xff]
        %v1197 = vld [vmem:[%s247 + $0x158] sm:$0xff]
        %v1198 = vld [vmem:[%s247 + $0x160] sm:$0xff]
        %v1199 = vld [vmem:[%s247 + $0x168] sm:$0xff]
        %v1200 = vld [vmem:[%s247 + $0x170] sm:$0xff]
        %v1201 = vld [vmem:[%s247 + $0x178] sm:$0xff]
        %v1250 = vunpack.c.l.b16 %v1154
        %v1251 = vunpack.c.h.b16 %v1154
        %v1252 = vunpack.c.l.b16 %v1155
        %v1253 = vunpack.c.h.b16 %v1155
        %v1254 = vunpack.c.l.b16 %v1156
        %v1255 = vunpack.c.h.b16 %v1156
        %v1256 = vunpack.c.l.b16 %v1157
        %v1257 = vunpack.c.h.b16 %v1157
        %v1258 = vunpack.c.l.b16 %v1158
        %v1259 = vunpack.c.h.b16 %v1158
        %v1260 = vunpack.c.l.b16 %v1159
        %v1261 = vunpack.c.h.b16 %v1159
        %v1262 = vunpack.c.l.b16 %v1160
        %v1263 = vunpack.c.h.b16 %v1160
        %v1264 = vunpack.c.l.b16 %v1161
        %v1265 = vunpack.c.h.b16 %v1161
        %v1266 = vunpack.c.l.b16 %v1162
        %v1267 = vunpack.c.h.b16 %v1162
        %v1268 = vunpack.c.l.b16 %v1163
        %v1269 = vunpack.c.h.b16 %v1163
        %v1270 = vunpack.c.l.b16 %v1164
        %v1271 = vunpack.c.h.b16 %v1164
        %v1272 = vunpack.c.l.b16 %v1165
        %v1273 = vunpack.c.h.b16 %v1165
        %v1274 = vunpack.c.l.b16 %v1166
        %v1275 = vunpack.c.h.b16 %v1166
        %v1276 = vunpack.c.l.b16 %v1167
        %v1277 = vunpack.c.h.b16 %v1167
        %v1278 = vunpack.c.l.b16 %v1168
        %v1279 = vunpack.c.h.b16 %v1168
        %v1280 = vunpack.c.l.b16 %v1169
        %v1281 = vunpack.c.h.b16 %v1169
        %v1282 = vunpack.c.l.b16 %v1170
        %v1283 = vunpack.c.h.b16 %v1170
        %v1284 = vunpack.c.l.b16 %v1171
        %v1285 = vunpack.c.h.b16 %v1171
        %v1286 = vunpack.c.l.b16 %v1172
        %v1287 = vunpack.c.h.b16 %v1172
        %v1288 = vunpack.c.l.b16 %v1173
        %v1289 = vunpack.c.h.b16 %v1173
        %v1290 = vunpack.c.l.b16 %v1174
        %v1291 = vunpack.c.h.b16 %v1174
        %v1292 = vunpack.c.l.b16 %v1175
        %v1293 = vunpack.c.h.b16 %v1175
        %v1294 = vunpack.c.l.b16 %v1176
        %v1295 = vunpack.c.h.b16 %v1176
        %v1296 = vunpack.c.l.b16 %v1177
        %v1297 = vunpack.c.h.b16 %v1177
        %v1298 = vunpack.c.l.b16 %v1178
        %v1299 = vunpack.c.h.b16 %v1178
        %v1300 = vunpack.c.l.b16 %v1179
        %v1301 = vunpack.c.h.b16 %v1179
        %v1302 = vunpack.c.l.b16 %v1180
        %v1303 = vunpack.c.h.b16 %v1180
        %v1304 = vunpack.c.l.b16 %v1181
        %v1305 = vunpack.c.h.b16 %v1181
        %v1306 = vunpack.c.l.b16 %v1182
        %v1307 = vunpack.c.h.b16 %v1182
        %v1308 = vunpack.c.l.b16 %v1183
        %v1309 = vunpack.c.h.b16 %v1183
        %v1310 = vunpack.c.l.b16 %v1184
        %v1311 = vunpack.c.h.b16 %v1184
        %v1312 = vunpack.c.l.b16 %v1185
        %v1313 = vunpack.c.h.b16 %v1185
        %v1314 = vunpack.c.l.b16 %v1186
        %v1315 = vunpack.c.h.b16 %v1186
        %v1316 = vunpack.c.l.b16 %v1187
        %v1317 = vunpack.c.h.b16 %v1187
        %v1318 = vunpack.c.l.b16 %v1188
        %v1319 = vunpack.c.h.b16 %v1188
        %v1320 = vunpack.c.l.b16 %v1189
        %v1321 = vunpack.c.h.b16 %v1189
        %v1322 = vunpack.c.l.b16 %v1190
        %v1323 = vunpack.c.h.b16 %v1190
        %v1324 = vunpack.c.l.b16 %v1191
        %v1325 = vunpack.c.h.b16 %v1191
        %v1326 = vunpack.c.l.b16 %v1192
        %v1327 = vunpack.c.h.b16 %v1192
        %v1328 = vunpack.c.l.b16 %v1193
        %v1329 = vunpack.c.h.b16 %v1193
        %v1330 = vunpack.c.l.b16 %v1194
        %v1331 = vunpack.c.h.b16 %v1194
        %v1332 = vunpack.c.l.b16 %v1195
        %v1333 = vunpack.c.h.b16 %v1195
        %v1334 = vunpack.c.l.b16 %v1196
        %v1335 = vunpack.c.h.b16 %v1196
        %v1336 = vunpack.c.l.b16 %v1197
        %v1337 = vunpack.c.h.b16 %v1197
        %v1338 = vunpack.c.l.b16 %v1198
        %v1339 = vunpack.c.h.b16 %v1198
        %v1340 = vunpack.c.l.b16 %v1199
        %v1341 = vunpack.c.h.b16 %v1199
        %v1342 = vunpack.c.l.b16 %v1200
        %v1343 = vunpack.c.h.b16 %v1200
        %v1344 = vunpack.c.l.b16 %v1201
        %v1345 = vunpack.c.h.b16 %v1201
        %v1346 = vpack.c.b16 %v1256, %v1250
        %v1347 = vpack.c.b16 %v1257, %v1251
        %v1348 = vpack.c.b16 %v1258, %v1252
        %v1349 = vpack.c.b16 %v1259, %v1253
        %v1350 = vpack.c.b16 %v1260, %v1254
        %v1351 = vpack.c.b16 %v1261, %v1255
        %v1352 = vpack.c.b16 %v1268, %v1262
        %v1353 = vpack.c.b16 %v1269, %v1263
        %v1354 = vpack.c.b16 %v1270, %v1264
        %v1355 = vpack.c.b16 %v1271, %v1265
        %v1356 = vpack.c.b16 %v1272, %v1266
        %v1357 = vpack.c.b16 %v1273, %v1267
        %v1358 = vpack.c.b16 %v1280, %v1274
        %v1359 = vpack.c.b16 %v1281, %v1275
        %v1360 = vpack.c.b16 %v1282, %v1276
        %v1361 = vpack.c.b16 %v1283, %v1277
        %v1362 = vpack.c.b16 %v1284, %v1278
        %v1363 = vpack.c.b16 %v1285, %v1279
        %v1364 = vpack.c.b16 %v1292, %v1286
        %v1365 = vpack.c.b16 %v1293, %v1287
        %v1366 = vpack.c.b16 %v1294, %v1288
        %v1367 = vpack.c.b16 %v1295, %v1289
        %v1368 = vpack.c.b16 %v1296, %v1290
        %v1369 = vpack.c.b16 %v1297, %v1291
        %v1370 = vpack.c.b16 %v1304, %v1298
        %v1371 = vpack.c.b16 %v1305, %v1299
        %v1372 = vpack.c.b16 %v1306, %v1300
        %v1373 = vpack.c.b16 %v1307, %v1301
        %v1374 = vpack.c.b16 %v1308, %v1302
        %v1375 = vpack.c.b16 %v1309, %v1303
        %v1376 = vpack.c.b16 %v1316, %v1310
        %v1377 = vpack.c.b16 %v1317, %v1311
        %v1378 = vpack.c.b16 %v1318, %v1312
        %v1379 = vpack.c.b16 %v1319, %v1313
        %v1380 = vpack.c.b16 %v1320, %v1314
        %v1381 = vpack.c.b16 %v1321, %v1315
        %v1382 = vpack.c.b16 %v1328, %v1322
        %v1383 = vpack.c.b16 %v1329, %v1323
        %v1384 = vpack.c.b16 %v1330, %v1324
        %v1385 = vpack.c.b16 %v1331, %v1325
        %v1386 = vpack.c.b16 %v1332, %v1326
        %v1387 = vpack.c.b16 %v1333, %v1327
        %v1388 = vpack.c.b16 %v1340, %v1334
        %v1389 = vpack.c.b16 %v1341, %v1335
        %v1390 = vpack.c.b16 %v1342, %v1336
        %v1391 = vpack.c.b16 %v1343, %v1337
        %v1392 = vpack.c.b16 %v1344, %v1338
        %v1393 = vpack.c.b16 %v1345, %v1339
        %1442 = vmatprep.subr.bf16.mxu0 %v1347
        %1443 = vmatpush1.bf16.msra.mxu0 %v1346
        %1444 = vmatprep.subr.bf16.mxu0 %v1353
        %1445 = vmatpush1.bf16.msra.mxu0 %v1352
        %1446 = vmatprep.subr.bf16.mxu0 %v1359
        %1447 = vmatpush1.bf16.msra.mxu0 %v1358
        %1448 = vmatprep.subr.bf16.mxu0 %v1365
        %1449 = vmatpush1.bf16.msra.mxu0 %v1364
        %1450 = vmatprep.subr.bf16.mxu0 %v1371
        %1451 = vmatpush1.bf16.msra.mxu0 %v1370
        %1452 = vmatprep.subr.bf16.mxu0 %v1377
        %1453 = vmatpush1.bf16.msra.mxu0 %v1376
        %1454 = vmatprep.subr.bf16.mxu0 %v1383
        %1455 = vmatpush1.bf16.msra.mxu0 %v1382
        %1456 = vmatprep.subr.bf16.mxu0 %v1389
        %1457 = vmatpush1.bf16.msra.mxu0 %v1388
        %1458 = vmatprep.subr.bf16.mxu0 0
        %1459 = vmatpush1.bf16.msra.mxu0 0
        %1460 = vmatprep.subr.bf16.mxu0 0
        %1461 = vmatpush1.bf16.msra.mxu0 0
        %1462 = vmatprep.subr.bf16.mxu0 0
        %1463 = vmatpush1.bf16.msra.mxu0 0
        %1464 = vmatprep.subr.bf16.mxu0 0
        %1465 = vmatpush1.bf16.msra.mxu0 0
        %1466 = vmatprep.subr.bf16.mxu0 0
        %1467 = vmatpush1.bf16.msra.mxu0 0
        %1468 = vmatprep.subr.bf16.mxu0 0
        %1469 = vmatpush1.bf16.msra.mxu0 0
        %1470 = vmatprep.subr.bf16.mxu0 0
        %1471 = vmatpush1.bf16.msra.mxu0 0
        %1472 = vmatprep.subr.bf16.mxu0 0
        %1473 = vmatpush1.bf16.msra.mxu0 0
        %1474 = vmatprep.mubr.bf16.mxu0 0
        %1475 = vmatmul.mubr.bf16.gmra.mrb[0].mxu0 %v1122
        %v1476 = vpop.f32.mrb[0].mxu0
        %v1477 = vadd.f32 0.0, %v1476
        %v1478 = vpop.f32.mrb[0].mxu0
        %v1479 = vadd.f32 0.0, %v1478
        %v1480 = vpop.f32.mrb[0].mxu0
        %v1481 = vadd.f32 0.0, %v1480
        %v1482 = vpop.f32.mrb[0].mxu0
        %v1483 = vadd.f32 0.0, %v1482
        %1484 = vmatprep.mubr.bf16.mxu0 0
        %1485 = vmatmul.mubr.bf16.gmra.mrb[0].mxu0 %v1123
        %v1486 = vpop.f32.mrb[0].mxu0
        %v1487 = vadd.f32 0.0, %v1486
        %v1488 = vpop.f32.mrb[0].mxu0
        %v1489 = vadd.f32 0.0, %v1488
        %v1490 = vpop.f32.mrb[0].mxu0
        %v1491 = vadd.f32 0.0, %v1490
        %v1492 = vpop.f32.mrb[0].mxu0
        %v1493 = vadd.f32 0.0, %v1492
        %1494 = vmatprep.mubr.bf16.mxu0 0
        %1495 = vmatmul.mubr.bf16.gmra.mrb[0].mxu0 %v1124
        %v1496 = vpop.f32.mrb[0].mxu0
        %v1497 = vadd.f32 0.0, %v1496
        %v1498 = vpop.f32.mrb[0].mxu0
        %v1499 = vadd.f32 0.0, %v1498
        %v1500 = vpop.f32.mrb[0].mxu0
        %v1501 = vadd.f32 0.0, %v1500
        %v1502 = vpop.f32.mrb[0].mxu0
        %v1503 = vadd.f32 0.0, %v1502
        %1504 = vmatprep.mubr.bf16.mxu0 0
        %1505 = vmatmul.mubr.bf16.gmra.mrb[0].mxu0 %v1125
        %v1506 = vpop.f32.mrb[0].mxu0
        %v1507 = vadd.f32 0.0, %v1506
        %v1508 = vpop.f32.mrb[0].mxu0
        %v1509 = vadd.f32 0.0, %v1508
        %v1510 = vpop.f32.mrb[0].mxu0
        %v1511 = vadd.f32 0.0, %v1510
        %v1512 = vpop.f32.mrb[0].mxu0
        %v1513 = vadd.f32 0.0, %v1512
        %1514 = vmatprep.mubr.bf16.mxu0 0
        %1515 = vmatmul.mubr.bf16.gmra.mrb[0].mxu0 %v1126
        %v1516 = vpop.f32.mrb[0].mxu0
        %v1517 = vadd.f32 0.0, %v1516
        %v1518 = vpop.f32.mrb[0].mxu0
        %v1519 = vadd.f32 0.0, %v1518
        %v1520 = vpop.f32.mrb[0].mxu0
        %v1521 = vadd.f32 0.0, %v1520
        %v1522 = vpop.f32.mrb[0].mxu0
        %v1523 = vadd.f32 0.0, %v1522
        %1524 = vmatprep.mubr.bf16.mxu0 0
        %1525 = vmatmul.mubr.bf16.gmra.mrb[0].mxu0 %v1127
        %v1526 = vpop.f32.mrb[0].mxu0
        %v1527 = vadd.f32 0.0, %v1526
        %v1528 = vpop.f32.mrb[0].mxu0
        %v1529 = vadd.f32 0.0, %v1528
        %v1530 = vpop.f32.mrb[0].mxu0
        %v1531 = vadd.f32 0.0, %v1530
        %v1532 = vpop.f32.mrb[0].mxu0
        %v1533 = vadd.f32 0.0, %v1532
        %1534 = vmatprep.mubr.bf16.mxu0 0
        %1535 = vmatmul.mubr.bf16.gmra.mrb[0].mxu0 %v1128
        %v1536 = vpop.f32.mrb[0].mxu0
        %v1537 = vadd.f32 0.0, %v1536
        %v1538 = vpop.f32.mrb[0].mxu0
        %v1539 = vadd.f32 0.0, %v1538
        %v1540 = vpop.f32.mrb[0].mxu0
        %v1541 = vadd.f32 0.0, %v1540
        %v1542 = vpop.f32.mrb[0].mxu0
        %v1543 = vadd.f32 0.0, %v1542
        %1544 = vmatprep.mubr.bf16.mxu0 0
        %1545 = vmatmul.mubr.bf16.gmra.mrb[0].mxu0 %v1129
        %v1546 = vpop.f32.mrb[0].mxu0
        %v1547 = vadd.f32 0.0, %v1546
        %v1548 = vpop.f32.mrb[0].mxu0
        %v1549 = vadd.f32 0.0, %v1548
        %v1550 = vpop.f32.mrb[0].mxu0
        %v1551 = vadd.f32 0.0, %v1550
        %v1552 = vpop.f32.mrb[0].mxu0
        %v1553 = vadd.f32 0.0, %v1552
        %1554 = vmatprep.mubr.bf16.mxu0 0
        %1555 = vmatmul.mubr.bf16.gmra.mrb[0].mxu0 %v1130
        %v1556 = vpop.f32.mrb[0].mxu0
        %v1557 = vadd.f32 0.0, %v1556
        %v1558 = vpop.f32.mrb[0].mxu0
        %v1559 = vadd.f32 0.0, %v1558
        %v1560 = vpop.f32.mrb[0].mxu0
        %v1561 = vadd.f32 0.0, %v1560
        %v1562 = vpop.f32.mrb[0].mxu0
        %v1563 = vadd.f32 0.0, %v1562
        %1564 = vmatprep.mubr.bf16.mxu0 0
        %1565 = vmatmul.mubr.bf16.gmra.mrb[0].mxu0 %v1131
        %v1566 = vpop.f32.mrb[0].mxu0
        %v1567 = vadd.f32 0.0, %v1566
        %v1568 = vpop.f32.mrb[0].mxu0
        %v1569 = vadd.f32 0.0, %v1568
        %v1570 = vpop.f32.mrb[0].mxu0
        %v1571 = vadd.f32 0.0, %v1570
        %v1572 = vpop.f32.mrb[0].mxu0
        %v1573 = vadd.f32 0.0, %v1572
        %1574 = vmatprep.mubr.bf16.mxu0 0
        %1575 = vmatmul.mubr.bf16.gmra.mrb[0].mxu0 %v1132
        %v1576 = vpop.f32.mrb[0].mxu0
        %v1577 = vadd.f32 0.0, %v1576
        %v1578 = vpop.f32.mrb[0].mxu0
        %v1579 = vadd.f32 0.0, %v1578
        %v1580 = vpop.f32.mrb[0].mxu0
        %v1581 = vadd.f32 0.0, %v1580
        %v1582 = vpop.f32.mrb[0].mxu0
        %v1583 = vadd.f32 0.0, %v1582
        %1584 = vmatprep.mubr.bf16.mxu0 0
        %1585 = vmatmul.mubr.bf16.gmra.mrb[0].mxu0 %v1133
        %v1586 = vpop.f32.mrb[0].mxu0
        %v1587 = vadd.f32 0.0, %v1586
        %v1588 = vpop.f32.mrb[0].mxu0
        %v1589 = vadd.f32 0.0, %v1588
        %v1590 = vpop.f32.mrb[0].mxu0
        %v1591 = vadd.f32 0.0, %v1590
        %v1592 = vpop.f32.mrb[0].mxu0
        %v1593 = vadd.f32 0.0, %v1592
        %1594 = vmatprep.mubr.bf16.mxu0 0
        %1595 = vmatmul.mubr.bf16.gmra.mrb[0].mxu0 %v1134
        %v1596 = vpop.f32.mrb[0].mxu0
        %v1597 = vadd.f32 0.0, %v1596
        %v1598 = vpop.f32.mrb[0].mxu0
        %v1599 = vadd.f32 0.0, %v1598
        %v1600 = vpop.f32.mrb[0].mxu0
        %v1601 = vadd.f32 0.0, %v1600
        %v1602 = vpop.f32.mrb[0].mxu0
        %v1603 = vadd.f32 0.0, %v1602
        %1604 = vmatprep.mubr.bf16.mxu0 0
        %1605 = vmatmul.mubr.bf16.gmra.mrb[0].mxu0 %v1135
        %v1606 = vpop.f32.mrb[0].mxu0
        %v1607 = vadd.f32 0.0, %v1606
        %v1608 = vpop.f32.mrb[0].mxu0
        %v1609 = vadd.f32 0.0, %v1608
        %v1610 = vpop.f32.mrb[0].mxu0
        %v1611 = vadd.f32 0.0, %v1610
        %v1612 = vpop.f32.mrb[0].mxu0
        %v1613 = vadd.f32 0.0, %v1612
        %1614 = vmatprep.mubr.bf16.mxu0 0
        %1615 = vmatmul.mubr.bf16.gmra.mrb[0].mxu0 %v1136
        %v1616 = vpop.f32.mrb[0].mxu0
        %v1617 = vadd.f32 0.0, %v1616
        %v1618 = vpop.f32.mrb[0].mxu0
        %v1619 = vadd.f32 0.0, %v1618
        %v1620 = vpop.f32.mrb[0].mxu0
        %v1621 = vadd.f32 0.0, %v1620
        %v1622 = vpop.f32.mrb[0].mxu0
        %v1623 = vadd.f32 0.0, %v1622
        %1624 = vmatprep.mubr.bf16.mxu0 0
        %1625 = vmatmul.mubr.bf16.gmra.mrb[0].mxu0 %v1137
        %v1626 = vpop.f32.mrb[0].mxu0
        %v1627 = vadd.f32 0.0, %v1626
        %v1628 = vpop.f32.mrb[0].mxu0
        %v1629 = vadd.f32 0.0, %v1628
        %v1630 = vpop.f32.mrb[0].mxu0
        %v1631 = vadd.f32 0.0, %v1630
        %v1632 = vpop.f32.mrb[0].mxu0
        %v1633 = vadd.f32 0.0, %v1632
        %1634 = vmatprep.mubr.bf16.mxu0 0
        %1635 = vmatmul.mubr.bf16.gmra.mrb[0].mxu0 %v1138
        %v1636 = vpop.f32.mrb[0].mxu0
        %v1637 = vadd.f32 0.0, %v1636
        %v1638 = vpop.f32.mrb[0].mxu0
        %v1639 = vadd.f32 0.0, %v1638
        %v1640 = vpop.f32.mrb[0].mxu0
        %v1641 = vadd.f32 0.0, %v1640
        %v1642 = vpop.f32.mrb[0].mxu0
        %v1643 = vadd.f32 0.0, %v1642
        %1644 = vmatprep.mubr.bf16.mxu0 0
        %1645 = vmatmul.mubr.bf16.gmra.mrb[0].mxu0 %v1139
        %v1646 = vpop.f32.mrb[0].mxu0
        %v1647 = vadd.f32 0.0, %v1646
        %v1648 = vpop.f32.mrb[0].mxu0
        %v1649 = vadd.f32 0.0, %v1648
        %v1650 = vpop.f32.mrb[0].mxu0
        %v1651 = vadd.f32 0.0, %v1650
        %v1652 = vpop.f32.mrb[0].mxu0
        %v1653 = vadd.f32 0.0, %v1652
        %1654 = vmatprep.mubr.bf16.mxu0 0
        %1655 = vmatmul.mubr.bf16.gmra.mrb[0].mxu0 %v1140
        %v1656 = vpop.f32.mrb[0].mxu0
        %v1657 = vadd.f32 0.0, %v1656
        %v1658 = vpop.f32.mrb[0].mxu0
        %v1659 = vadd.f32 0.0, %v1658
        %v1660 = vpop.f32.mrb[0].mxu0
        %v1661 = vadd.f32 0.0, %v1660
        %v1662 = vpop.f32.mrb[0].mxu0
        %v1663 = vadd.f32 0.0, %v1662
        %1664 = vmatprep.mubr.bf16.mxu0 0
        %1665 = vmatmul.mubr.bf16.gmra.mrb[0].mxu0 %v1141
        %v1666 = vpop.f32.mrb[0].mxu0
        %v1667 = vadd.f32 0.0, %v1666
        %v1668 = vpop.f32.mrb[0].mxu0
        %v1669 = vadd.f32 0.0, %v1668
        %v1670 = vpop.f32.mrb[0].mxu0
        %v1671 = vadd.f32 0.0, %v1670
        %v1672 = vpop.f32.mrb[0].mxu0
        %v1673 = vadd.f32 0.0, %v1672
        %1674 = vmatprep.mubr.bf16.mxu0 0
        %1675 = vmatmul.mubr.bf16.gmra.mrb[0].mxu0 %v1142
        %v1676 = vpop.f32.mrb[0].mxu0
        %v1677 = vadd.f32 0.0, %v1676
        %v1678 = vpop.f32.mrb[0].mxu0
        %v1679 = vadd.f32 0.0, %v1678
        %v1680 = vpop.f32.mrb[0].mxu0
        %v1681 = vadd.f32 0.0, %v1680
        %v1682 = vpop.f32.mrb[0].mxu0
        %v1683 = vadd.f32 0.0, %v1682
        %1684 = vmatprep.mubr.bf16.mxu0 0
        %1685 = vmatmul.mubr.bf16.gmra.mrb[0].mxu0 %v1143
        %v1686 = vpop.f32.mrb[0].mxu0
        %v1687 = vadd.f32 0.0, %v1686
        %v1688 = vpop.f32.mrb[0].mxu0
        %v1689 = vadd.f32 0.0, %v1688
        %v1690 = vpop.f32.mrb[0].mxu0
        %v1691 = vadd.f32 0.0, %v1690
        %v1692 = vpop.f32.mrb[0].mxu0
        %v1693 = vadd.f32 0.0, %v1692
        %1694 = vmatprep.mubr.bf16.mxu0 0
        %1695 = vmatmul.mubr.bf16.gmra.mrb[0].mxu0 %v1144
        %v1696 = vpop.f32.mrb[0].mxu0
        %v1697 = vadd.f32 0.0, %v1696
        %v1698 = vpop.f32.mrb[0].mxu0
        %v1699 = vadd.f32 0.0, %v1698
        %v1700 = vpop.f32.mrb[0].mxu0
        %v1701 = vadd.f32 0.0, %v1700
        %v1702 = vpop.f32.mrb[0].mxu0
        %v1703 = vadd.f32 0.0, %v1702
        %1704 = vmatprep.mubr.bf16.mxu0 0
        %1705 = vmatmul.mubr.bf16.gmra.mrb[0].mxu0 %v1145
        %v1706 = vpop.f32.mrb[0].mxu0
        %v1707 = vadd.f32 0.0, %v1706
        %v1708 = vpop.f32.mrb[0].mxu0
        %v1709 = vadd.f32 0.0, %v1708
        %v1710 = vpop.f32.mrb[0].mxu0
        %v1711 = vadd.f32 0.0, %v1710
        %v1712 = vpop.f32.mrb[0].mxu0
        %v1713 = vadd.f32 0.0, %v1712
        %1714 = vmatprep.mubr.bf16.mxu0 0
        %1715 = vmatmul.mubr.bf16.gmra.mrb[0].mxu0 %v1146
        %v1716 = vpop.f32.mrb[0].mxu0
        %v1717 = vadd.f32 0.0, %v1716
        %v1718 = vpop.f32.mrb[0].mxu0
        %v1719 = vadd.f32 0.0, %v1718
        %v1720 = vpop.f32.mrb[0].mxu0
        %v1721 = vadd.f32 0.0, %v1720
        %v1722 = vpop.f32.mrb[0].mxu0
        %v1723 = vadd.f32 0.0, %v1722
        %1724 = vmatprep.mubr.bf16.mxu0 0
        %1725 = vmatmul.mubr.bf16.gmra.mrb[0].mxu0 %v1147
        %v1726 = vpop.f32.mrb[0].mxu0
        %v1727 = vadd.f32 0.0, %v1726
        %v1728 = vpop.f32.mrb[0].mxu0
        %v1729 = vadd.f32 0.0, %v1728
        %v1730 = vpop.f32.mrb[0].mxu0
        %v1731 = vadd.f32 0.0, %v1730
        %v1732 = vpop.f32.mrb[0].mxu0
        %v1733 = vadd.f32 0.0, %v1732
        %1734 = vmatprep.mubr.bf16.mxu0 0
        %1735 = vmatmul.mubr.bf16.gmra.mrb[0].mxu0 %v1148
        %v1736 = vpop.f32.mrb[0].mxu0
        %v1737 = vadd.f32 0.0, %v1736
        %v1738 = vpop.f32.mrb[0].mxu0
        %v1739 = vadd.f32 0.0, %v1738
        %v1740 = vpop.f32.mrb[0].mxu0
        %v1741 = vadd.f32 0.0, %v1740
        %v1742 = vpop.f32.mrb[0].mxu0
        %v1743 = vadd.f32 0.0, %v1742
        %1744 = vmatprep.mubr.bf16.mxu0 0
        %1745 = vmatmul.mubr.bf16.gmra.mrb[0].mxu0 %v1149
        %v1746 = vpop.f32.mrb[0].mxu0
        %v1747 = vadd.f32 0.0, %v1746
        %v1748 = vpop.f32.mrb[0].mxu0
        %v1749 = vadd.f32 0.0, %v1748
        %v1750 = vpop.f32.mrb[0].mxu0
        %v1751 = vadd.f32 0.0, %v1750
        %v1752 = vpop.f32.mrb[0].mxu0
        %v1753 = vadd.f32 0.0, %v1752
        %1754 = vmatprep.mubr.bf16.mxu0 0
        %1755 = vmatmul.mubr.bf16.gmra.mrb[0].mxu0 %v1150
        %v1756 = vpop.f32.mrb[0].mxu0
        %v1757 = vadd.f32 0.0, %v1756
        %v1758 = vpop.f32.mrb[0].mxu0
        %v1759 = vadd.f32 0.0, %v1758
        %v1760 = vpop.f32.mrb[0].mxu0
        %v1761 = vadd.f32 0.0, %v1760
        %v1762 = vpop.f32.mrb[0].mxu0
        %v1763 = vadd.f32 0.0, %v1762
        %1764 = vmatprep.mubr.bf16.mxu0 0
        %1765 = vmatmul.mubr.bf16.gmra.mrb[0].mxu0 %v1151
        %v1766 = vpop.f32.mrb[0].mxu0
        %v1767 = vadd.f32 0.0, %v1766
        %v1768 = vpop.f32.mrb[0].mxu0
        %v1769 = vadd.f32 0.0, %v1768
        %v1770 = vpop.f32.mrb[0].mxu0
        %v1771 = vadd.f32 0.0, %v1770
        %v1772 = vpop.f32.mrb[0].mxu0
        %v1773 = vadd.f32 0.0, %v1772
        %1774 = vmatprep.mubr.bf16.mxu0 0
        %1775 = vmatmul.mubr.bf16.gmra.mrb[0].mxu0 %v1152
        %v1776 = vpop.f32.mrb[0].mxu0
        %v1777 = vadd.f32 0.0, %v1776
        %v1778 = vpop.f32.mrb[0].mxu0
        %v1779 = vadd.f32 0.0, %v1778
        %v1780 = vpop.f32.mrb[0].mxu0
        %v1781 = vadd.f32 0.0, %v1780
        %v1782 = vpop.f32.mrb[0].mxu0
        %v1783 = vadd.f32 0.0, %v1782
        %1784 = vmatprep.mubr.bf16.mxu0 0
        %1785 = vmatmul.mubr.bf16.gmra.mrb[0].mxu0 %v1153
        %v1786 = vpop.f32.mrb[0].mxu0
        %v1787 = vadd.f32 0.0, %v1786
        %v1788 = vpop.f32.mrb[0].mxu0
        %v1789 = vadd.f32 0.0, %v1788
        %v1790 = vpop.f32.mrb[0].mxu0
        %v1791 = vadd.f32 0.0, %v1790
        %v1792 = vpop.f32.mrb[0].mxu0
        %v1793 = vadd.f32 0.0, %v1792
        %1794 = vdwg.mxu0
        %1795 = vmatprep.subr.bf16.mxu0 %v1349
        %1796 = vmatpush1.bf16.msra.mxu0 %v1348
        %1797 = vmatprep.subr.bf16.mxu0 %v1355
        %1798 = vmatpush1.bf16.msra.mxu0 %v1354
        %1799 = vmatprep.subr.bf16.mxu0 %v1361
        %1800 = vmatpush1.bf16.msra.mxu0 %v1360
        %1801 = vmatprep.subr.bf16.mxu0 %v1367
        %1802 = vmatpush1.bf16.msra.mxu0 %v1366
        %1803 = vmatprep.subr.bf16.mxu0 %v1373
        %1804 = vmatpush1.bf16.msra.mxu0 %v1372
        %1805 = vmatprep.subr.bf16.mxu0 %v1379
        %1806 = vmatpush1.bf16.msra.mxu0 %v1378
        %1807 = vmatprep.subr.bf16.mxu0 %v1385
        %1808 = vmatpush1.bf16.msra.mxu0 %v1384
        %1809 = vmatprep.subr.bf16.mxu0 %v1391
        %1810 = vmatpush1.bf16.msra.mxu0 %v1390
        %1811 = vmatprep.subr.bf16.mxu0 0
        %1812 = vmatpush1.bf16.msra.mxu0 0
        %1813 = vmatprep.subr.bf16.mxu0 0
        %1814 = vmatpush1.bf16.msra.mxu0 0
        %1815 = vmatprep.subr.bf16.mxu0 0
        %1816 = vmatpush1.bf16.msra.mxu0 0
        %1817 = vmatprep.subr.bf16.mxu0 0
        %1818 = vmatpush1.bf16.msra.mxu0 0
        %1819 = vmatprep.subr.bf16.mxu0 0
        %1820 = vmatpush1.bf16.msra.mxu0 0
        %1821 = vmatprep.subr.bf16.mxu0 0
        %1822 = vmatpush1.bf16.msra.mxu0 0
        %1823 = vmatprep.subr.bf16.mxu0 0
        %1824 = vmatpush1.bf16.msra.mxu0 0
        %1825 = vmatprep.subr.bf16.mxu0 0
        %1826 = vmatpush1.bf16.msra.mxu0 0
        %1827 = vmatprep.mubr.bf16.mxu0 0
        %1828 = vmatmul.mubr.bf16.gmra.mrb[0].mxu0 %v1122
        %v1829 = vpop.f32.mrb[0].mxu0
        %v1830 = vadd.f32 0.0, %v1829
        %v1831 = vpop.f32.mrb[0].mxu0
        %v1832 = vadd.f32 0.0, %v1831
        %v1833 = vpop.f32.mrb[0].mxu0
        %v1834 = vadd.f32 0.0, %v1833
        %v1835 = vpop.f32.mrb[0].mxu0
        %v1836 = vadd.f32 0.0, %v1835
        %1837 = vmatprep.mubr.bf16.mxu0 0
        %1838 = vmatmul.mubr.bf16.gmra.mrb[0].mxu0 %v1123
        %v1839 = vpop.f32.mrb[0].mxu0
        %v1840 = vadd.f32 0.0, %v1839
        %v1841 = vpop.f32.mrb[0].mxu0
        %v1842 = vadd.f32 0.0, %v1841
        %v1843 = vpop.f32.mrb[0].mxu0
        %v1844 = vadd.f32 0.0, %v1843
        %v1845 = vpop.f32.mrb[0].mxu0
        %v1846 = vadd.f32 0.0, %v1845
        %1847 = vmatprep.mubr.bf16.mxu0 0
        %1848 = vmatmul.mubr.bf16.gmra.mrb[0].mxu0 %v1124
        %v1849 = vpop.f32.mrb[0].mxu0
        %v1850 = vadd.f32 0.0, %v1849
        %v1851 = vpop.f32.mrb[0].mxu0
        %v1852 = vadd.f32 0.0, %v1851
        %v1853 = vpop.f32.mrb[0].mxu0
        %v1854 = vadd.f32 0.0, %v1853
        %v1855 = vpop.f32.mrb[0].mxu0
        %v1856 = vadd.f32 0.0, %v1855
        %1857 = vmatprep.mubr.bf16.mxu0 0
        %1858 = vmatmul.mubr.bf16.gmra.mrb[0].mxu0 %v1125
        %v1859 = vpop.f32.mrb[0].mxu0
        %v1860 = vadd.f32 0.0, %v1859
        %v1861 = vpop.f32.mrb[0].mxu0
        %v1862 = vadd.f32 0.0, %v1861
        %v1863 = vpop.f32.mrb[0].mxu0
        %v1864 = vadd.f32 0.0, %v1863
        %v1865 = vpop.f32.mrb[0].mxu0
        %v1866 = vadd.f32 0.0, %v1865
        %1867 = vmatprep.mubr.bf16.mxu0 0
        %1868 = vmatmul.mubr.bf16.gmra.mrb[0].mxu0 %v1126
        %v1869 = vpop.f32.mrb[0].mxu0
        %v1870 = vadd.f32 0.0, %v1869
        %v1871 = vpop.f32.mrb[0].mxu0
        %v1872 = vadd.f32 0.0, %v1871
        %v1873 = vpop.f32.mrb[0].mxu0
        %v1874 = vadd.f32 0.0, %v1873
        %v1875 = vpop.f32.mrb[0].mxu0
        %v1876 = vadd.f32 0.0, %v1875
        %1877 = vmatprep.mubr.bf16.mxu0 0
        %1878 = vmatmul.mubr.bf16.gmra.mrb[0].mxu0 %v1127
        %v1879 = vpop.f32.mrb[0].mxu0
        %v1880 = vadd.f32 0.0, %v1879
        %v1881 = vpop.f32.mrb[0].mxu0
        %v1882 = vadd.f32 0.0, %v1881
        %v1883 = vpop.f32.mrb[0].mxu0
        %v1884 = vadd.f32 0.0, %v1883
        %v1885 = vpop.f32.mrb[0].mxu0
        %v1886 = vadd.f32 0.0, %v1885
        %1887 = vmatprep.mubr.bf16.mxu0 0
        %1888 = vmatmul.mubr.bf16.gmra.mrb[0].mxu0 %v1128
        %v1889 = vpop.f32.mrb[0].mxu0
        %v1890 = vadd.f32 0.0, %v1889
        %v1891 = vpop.f32.mrb[0].mxu0
        %v1892 = vadd.f32 0.0, %v1891
        %v1893 = vpop.f32.mrb[0].mxu0
        %v1894 = vadd.f32 0.0, %v1893
        %v1895 = vpop.f32.mrb[0].mxu0
        %v1896 = vadd.f32 0.0, %v1895
        %1897 = vmatprep.mubr.bf16.mxu0 0
        %1898 = vmatmul.mubr.bf16.gmra.mrb[0].mxu0 %v1129
        %v1899 = vpop.f32.mrb[0].mxu0
        %v1900 = vadd.f32 0.0, %v1899
        %v1901 = vpop.f32.mrb[0].mxu0
        %v1902 = vadd.f32 0.0, %v1901
        %v1903 = vpop.f32.mrb[0].mxu0
        %v1904 = vadd.f32 0.0, %v1903
        %v1905 = vpop.f32.mrb[0].mxu0
        %v1906 = vadd.f32 0.0, %v1905
        %1907 = vmatprep.mubr.bf16.mxu0 0
        %1908 = vmatmul.mubr.bf16.gmra.mrb[0].mxu0 %v1130
        %v1909 = vpop.f32.mrb[0].mxu0
        %v1910 = vadd.f32 0.0, %v1909
        %v1911 = vpop.f32.mrb[0].mxu0
        %v1912 = vadd.f32 0.0, %v1911
        %v1913 = vpop.f32.mrb[0].mxu0
        %v1914 = vadd.f32 0.0, %v1913
        %v1915 = vpop.f32.mrb[0].mxu0
        %v1916 = vadd.f32 0.0, %v1915
        %1917 = vmatprep.mubr.bf16.mxu0 0
        %1918 = vmatmul.mubr.bf16.gmra.mrb[0].mxu0 %v1131
        %v1919 = vpop.f32.mrb[0].mxu0
        %v1920 = vadd.f32 0.0, %v1919
        %v1921 = vpop.f32.mrb[0].mxu0
        %v1922 = vadd.f32 0.0, %v1921
        %v1923 = vpop.f32.mrb[0].mxu0
        %v1924 = vadd.f32 0.0, %v1923
        %v1925 = vpop.f32.mrb[0].mxu0
        %v1926 = vadd.f32 0.0, %v1925
        %1927 = vmatprep.mubr.bf16.mxu0 0
        %1928 = vmatmul.mubr.bf16.gmra.mrb[0].mxu0 %v1132
        %v1929 = vpop.f32.mrb[0].mxu0
        %v1930 = vadd.f32 0.0, %v1929
        %v1931 = vpop.f32.mrb[0].mxu0
        %v1932 = vadd.f32 0.0, %v1931
        %v1933 = vpop.f32.mrb[0].mxu0
        %v1934 = vadd.f32 0.0, %v1933
        %v1935 = vpop.f32.mrb[0].mxu0
        %v1936 = vadd.f32 0.0, %v1935
        %1937 = vmatprep.mubr.bf16.mxu0 0
        %1938 = vmatmul.mubr.bf16.gmra.mrb[0].mxu0 %v1133
        %v1939 = vpop.f32.mrb[0].mxu0
        %v1940 = vadd.f32 0.0, %v1939
        %v1941 = vpop.f32.mrb[0].mxu0
        %v1942 = vadd.f32 0.0, %v1941
        %v1943 = vpop.f32.mrb[0].mxu0
        %v1944 = vadd.f32 0.0, %v1943
        %v1945 = vpop.f32.mrb[0].mxu0
        %v1946 = vadd.f32 0.0, %v1945
        %1947 = vmatprep.mubr.bf16.mxu0 0
        %1948 = vmatmul.mubr.bf16.gmra.mrb[0].mxu0 %v1134
        %v1949 = vpop.f32.mrb[0].mxu0
        %v1950 = vadd.f32 0.0, %v1949
        %v1951 = vpop.f32.mrb[0].mxu0
        %v1952 = vadd.f32 0.0, %v1951
        %v1953 = vpop.f32.mrb[0].mxu0
        %v1954 = vadd.f32 0.0, %v1953
        %v1955 = vpop.f32.mrb[0].mxu0
        %v1956 = vadd.f32 0.0, %v1955
        %1957 = vmatprep.mubr.bf16.mxu0 0
        %1958 = vmatmul.mubr.bf16.gmra.mrb[0].mxu0 %v1135
        %v1959 = vpop.f32.mrb[0].mxu0
        %v1960 = vadd.f32 0.0, %v1959
        %v1961 = vpop.f32.mrb[0].mxu0
        %v1962 = vadd.f32 0.0, %v1961
        %v1963 = vpop.f32.mrb[0].mxu0
        %v1964 = vadd.f32 0.0, %v1963
        %v1965 = vpop.f32.mrb[0].mxu0
        %v1966 = vadd.f32 0.0, %v1965
        %1967 = vmatprep.mubr.bf16.mxu0 0
        %1968 = vmatmul.mubr.bf16.gmra.mrb[0].mxu0 %v1136
        %v1969 = vpop.f32.mrb[0].mxu0
        %v1970 = vadd.f32 0.0, %v1969
        %v1971 = vpop.f32.mrb[0].mxu0
        %v1972 = vadd.f32 0.0, %v1971
        %v1973 = vpop.f32.mrb[0].mxu0
        %v1974 = vadd.f32 0.0, %v1973
        %v1975 = vpop.f32.mrb[0].mxu0
        %v1976 = vadd.f32 0.0, %v1975
        %1977 = vmatprep.mubr.bf16.mxu0 0
        %1978 = vmatmul.mubr.bf16.gmra.mrb[0].mxu0 %v1137
        %v1979 = vpop.f32.mrb[0].mxu0
        %v1980 = vadd.f32 0.0, %v1979
        %v1981 = vpop.f32.mrb[0].mxu0
        %v1982 = vadd.f32 0.0, %v1981
        %v1983 = vpop.f32.mrb[0].mxu0
        %v1984 = vadd.f32 0.0, %v1983
        %v1985 = vpop.f32.mrb[0].mxu0
        %v1986 = vadd.f32 0.0, %v1985
        %1987 = vmatprep.mubr.bf16.mxu0 0
        %1988 = vmatmul.mubr.bf16.gmra.mrb[0].mxu0 %v1138
        %v1989 = vpop.f32.mrb[0].mxu0
        %v1990 = vadd.f32 0.0, %v1989
        %v1991 = vpop.f32.mrb[0].mxu0
        %v1992 = vadd.f32 0.0, %v1991
        %v1993 = vpop.f32.mrb[0].mxu0
        %v1994 = vadd.f32 0.0, %v1993
        %v1995 = vpop.f32.mrb[0].mxu0
        %v1996 = vadd.f32 0.0, %v1995
        %1997 = vmatprep.mubr.bf16.mxu0 0
        %1998 = vmatmul.mubr.bf16.gmra.mrb[0].mxu0 %v1139
        %v1999 = vpop.f32.mrb[0].mxu0
        %v2000 = vadd.f32 0.0, %v1999
        %v2001 = vpop.f32.mrb[0].mxu0
        %v2002 = vadd.f32 0.0, %v2001
        %v2003 = vpop.f32.mrb[0].mxu0
        %v2004 = vadd.f32 0.0, %v2003
        %v2005 = vpop.f32.mrb[0].mxu0
        %v2006 = vadd.f32 0.0, %v2005
        %2007 = vmatprep.mubr.bf16.mxu0 0
        %2008 = vmatmul.mubr.bf16.gmra.mrb[0].mxu0 %v1140
        %v2009 = vpop.f32.mrb[0].mxu0
        %v2010 = vadd.f32 0.0, %v2009
        %v2011 = vpop.f32.mrb[0].mxu0
        %v2012 = vadd.f32 0.0, %v2011
        %v2013 = vpop.f32.mrb[0].mxu0
        %v2014 = vadd.f32 0.0, %v2013
        %v2015 = vpop.f32.mrb[0].mxu0
        %v2016 = vadd.f32 0.0, %v2015
        %2017 = vmatprep.mubr.bf16.mxu0 0
        %2018 = vmatmul.mubr.bf16.gmra.mrb[0].mxu0 %v1141
        %v2019 = vpop.f32.mrb[0].mxu0
        %v2020 = vadd.f32 0.0, %v2019
        %v2021 = vpop.f32.mrb[0].mxu0
        %v2022 = vadd.f32 0.0, %v2021
        %v2023 = vpop.f32.mrb[0].mxu0
        %v2024 = vadd.f32 0.0, %v2023
        %v2025 = vpop.f32.mrb[0].mxu0
        %v2026 = vadd.f32 0.0, %v2025
        %2027 = vmatprep.mubr.bf16.mxu0 0
        %2028 = vmatmul.mubr.bf16.gmra.mrb[0].mxu0 %v1142
        %v2029 = vpop.f32.mrb[0].mxu0
        %v2030 = vadd.f32 0.0, %v2029
        %v2031 = vpop.f32.mrb[0].mxu0
        %v2032 = vadd.f32 0.0, %v2031
        %v2033 = vpop.f32.mrb[0].mxu0
        %v2034 = vadd.f32 0.0, %v2033
        %v2035 = vpop.f32.mrb[0].mxu0
        %v2036 = vadd.f32 0.0, %v2035
        %2037 = vmatprep.mubr.bf16.mxu0 0
        %2038 = vmatmul.mubr.bf16.gmra.mrb[0].mxu0 %v1143
        %v2039 = vpop.f32.mrb[0].mxu0
        %v2040 = vadd.f32 0.0, %v2039
        %v2041 = vpop.f32.mrb[0].mxu0
        %v2042 = vadd.f32 0.0, %v2041
        %v2043 = vpop.f32.mrb[0].mxu0
        %v2044 = vadd.f32 0.0, %v2043
        %v2045 = vpop.f32.mrb[0].mxu0
        %v2046 = vadd.f32 0.0, %v2045
        %2047 = vmatprep.mubr.bf16.mxu0 0
        %2048 = vmatmul.mubr.bf16.gmra.mrb[0].mxu0 %v1144
        %v2049 = vpop.f32.mrb[0].mxu0
        %v2050 = vadd.f32 0.0, %v2049
        %v2051 = vpop.f32.mrb[0].mxu0
        %v2052 = vadd.f32 0.0, %v2051
        %v2053 = vpop.f32.mrb[0].mxu0
        %v2054 = vadd.f32 0.0, %v2053
        %v2055 = vpop.f32.mrb[0].mxu0
        %v2056 = vadd.f32 0.0, %v2055
        %2057 = vmatprep.mubr.bf16.mxu0 0
        %2058 = vmatmul.mubr.bf16.gmra.mrb[0].mxu0 %v1145
        %v2059 = vpop.f32.mrb[0].mxu0
        %v2060 = vadd.f32 0.0, %v2059
        %v2061 = vpop.f32.mrb[0].mxu0
        %v2062 = vadd.f32 0.0, %v2061
        %v2063 = vpop.f32.mrb[0].mxu0
        %v2064 = vadd.f32 0.0, %v2063
        %v2065 = vpop.f32.mrb[0].mxu0
        %v2066 = vadd.f32 0.0, %v2065
        %2067 = vmatprep.mubr.bf16.mxu0 0
        %2068 = vmatmul.mubr.bf16.gmra.mrb[0].mxu0 %v1146
        %v2069 = vpop.f32.mrb[0].mxu0
        %v2070 = vadd.f32 0.0, %v2069
        %v2071 = vpop.f32.mrb[0].mxu0
        %v2072 = vadd.f32 0.0, %v2071
        %v2073 = vpop.f32.mrb[0].mxu0
        %v2074 = vadd.f32 0.0, %v2073
        %v2075 = vpop.f32.mrb[0].mxu0
        %v2076 = vadd.f32 0.0, %v2075
        %2077 = vmatprep.mubr.bf16.mxu0 0
        %2078 = vmatmul.mubr.bf16.gmra.mrb[0].mxu0 %v1147
        %v2079 = vpop.f32.mrb[0].mxu0
        %v2080 = vadd.f32 0.0, %v2079
        %v2081 = vpop.f32.mrb[0].mxu0
        %v2082 = vadd.f32 0.0, %v2081
        %v2083 = vpop.f32.mrb[0].mxu0
        %v2084 = vadd.f32 0.0, %v2083
        %v2085 = vpop.f32.mrb[0].mxu0
        %v2086 = vadd.f32 0.0, %v2085
        %2087 = vmatprep.mubr.bf16.mxu0 0
        %2088 = vmatmul.mubr.bf16.gmra.mrb[0].mxu0 %v1148
        %v2089 = vpop.f32.mrb[0].mxu0
        %v2090 = vadd.f32 0.0, %v2089
        %v2091 = vpop.f32.mrb[0].mxu0
        %v2092 = vadd.f32 0.0, %v2091
        %v2093 = vpop.f32.mrb[0].mxu0
        %v2094 = vadd.f32 0.0, %v2093
        %v2095 = vpop.f32.mrb[0].mxu0
        %v2096 = vadd.f32 0.0, %v2095
        %2097 = vmatprep.mubr.bf16.mxu0 0
        %2098 = vmatmul.mubr.bf16.gmra.mrb[0].mxu0 %v1149
        %v2099 = vpop.f32.mrb[0].mxu0
        %v2100 = vadd.f32 0.0, %v2099
        %v2101 = vpop.f32.mrb[0].mxu0
        %v2102 = vadd.f32 0.0, %v2101
        %v2103 = vpop.f32.mrb[0].mxu0
        %v2104 = vadd.f32 0.0, %v2103
        %v2105 = vpop.f32.mrb[0].mxu0
        %v2106 = vadd.f32 0.0, %v2105
        %2107 = vmatprep.mubr.bf16.mxu0 0
        %2108 = vmatmul.mubr.bf16.gmra.mrb[0].mxu0 %v1150
        %v2109 = vpop.f32.mrb[0].mxu0
        %v2110 = vadd.f32 0.0, %v2109
        %v2111 = vpop.f32.mrb[0].mxu0
        %v2112 = vadd.f32 0.0, %v2111
        %v2113 = vpop.f32.mrb[0].mxu0
        %v2114 = vadd.f32 0.0, %v2113
        %v2115 = vpop.f32.mrb[0].mxu0
        %v2116 = vadd.f32 0.0, %v2115
        %2117 = vmatprep.mubr.bf16.mxu0 0
        %2118 = vmatmul.mubr.bf16.gmra.mrb[0].mxu0 %v1151
        %v2119 = vpop.f32.mrb[0].mxu0
        %v2120 = vadd.f32 0.0, %v2119
        %v2121 = vpop.f32.mrb[0].mxu0
        %v2122 = vadd.f32 0.0, %v2121
        %v2123 = vpop.f32.mrb[0].mxu0
        %v2124 = vadd.f32 0.0, %v2123
        %v2125 = vpop.f32.mrb[0].mxu0
        %v2126 = vadd.f32 0.0, %v2125
        %2127 = vmatprep.mubr.bf16.mxu0 0
        %2128 = vmatmul.mubr.bf16.gmra.mrb[0].mxu0 %v1152
        %v2129 = vpop.f32.mrb[0].mxu0
        %v2130 = vadd.f32 0.0, %v2129
        %v2131 = vpop.f32.mrb[0].mxu0
        %v2132 = vadd.f32 0.0, %v2131
        %v2133 = vpop.f32.mrb[0].mxu0
        %v2134 = vadd.f32 0.0, %v2133
        %v2135 = vpop.f32.mrb[0].mxu0
        %v2136 = vadd.f32 0.0, %v2135
        %2137 = vmatprep.mubr.bf16.mxu0 0
        %2138 = vmatmul.mubr.bf16.gmra.mrb[0].mxu0 %v1153
        %v2139 = vpop.f32.mrb[0].mxu0
        %v2140 = vadd.f32 0.0, %v2139
        %v2141 = vpop.f32.mrb[0].mxu0
        %v2142 = vadd.f32 0.0, %v2141
        %v2143 = vpop.f32.mrb[0].mxu0
        %v2144 = vadd.f32 0.0, %v2143
        %v2145 = vpop.f32.mrb[0].mxu0
        %v2146 = vadd.f32 0.0, %v2145
        %2147 = vdwg.mxu0
        %2148 = vmatprep.subr.bf16.mxu0 %v1351
        %2149 = vmatpush1.bf16.msra.mxu0 %v1350
        %2150 = vmatprep.subr.bf16.mxu0 %v1357
        %2151 = vmatpush1.bf16.msra.mxu0 %v1356
        %2152 = vmatprep.subr.bf16.mxu0 %v1363
        %2153 = vmatpush1.bf16.msra.mxu0 %v1362
        %2154 = vmatprep.subr.bf16.mxu0 %v1369
        %2155 = vmatpush1.bf16.msra.mxu0 %v1368
        %2156 = vmatprep.subr.bf16.mxu0 %v1375
        %2157 = vmatpush1.bf16.msra.mxu0 %v1374
        %2158 = vmatprep.subr.bf16.mxu0 %v1381
        %2159 = vmatpush1.bf16.msra.mxu0 %v1380
        %2160 = vmatprep.subr.bf16.mxu0 %v1387
        %2161 = vmatpush1.bf16.msra.mxu0 %v1386
        %2162 = vmatprep.subr.bf16.mxu0 %v1393
        %2163 = vmatpush1.bf16.msra.mxu0 %v1392
        %2164 = vmatprep.subr.bf16.mxu0 0
        %2165 = vmatpush1.bf16.msra.mxu0 0
        %2166 = vmatprep.subr.bf16.mxu0 0
        %2167 = vmatpush1.bf16.msra.mxu0 0
        %2168 = vmatprep.subr.bf16.mxu0 0
        %2169 = vmatpush1.bf16.msra.mxu0 0
        %2170 = vmatprep.subr.bf16.mxu0 0
        %2171 = vmatpush1.bf16.msra.mxu0 0
        %2172 = vmatprep.subr.bf16.mxu0 0
        %2173 = vmatpush1.bf16.msra.mxu0 0
        %2174 = vmatprep.subr.bf16.mxu0 0
        %2175 = vmatpush1.bf16.msra.mxu0 0
        %2176 = vmatprep.subr.bf16.mxu0 0
        %2177 = vmatpush1.bf16.msra.mxu0 0
        %2178 = vmatprep.subr.bf16.mxu0 0
        %2179 = vmatpush1.bf16.msra.mxu0 0
        %2180 = vmatprep.mubr.bf16.mxu0 0
        %2181 = vmatmul.mubr.bf16.gmra.mrb[0].mxu0 %v1122
        %v2182 = vpop.f32.mrb[0].mxu0
        %v2183 = vadd.f32 0.0, %v2182
        %v2184 = vpop.f32.mrb[0].mxu0
        %v2185 = vadd.f32 0.0, %v2184
        %v2186 = vpop.f32.mrb[0].mxu0
        %v2187 = vadd.f32 0.0, %v2186
        %v2188 = vpop.f32.mrb[0].mxu0
        %v2189 = vadd.f32 0.0, %v2188
        %2190 = vmatprep.mubr.bf16.mxu0 0
        %2191 = vmatmul.mubr.bf16.gmra.mrb[0].mxu0 %v1123
        %v2192 = vpop.f32.mrb[0].mxu0
        %v2193 = vadd.f32 0.0, %v2192
        %v2194 = vpop.f32.mrb[0].mxu0
        %v2195 = vadd.f32 0.0, %v2194
        %v2196 = vpop.f32.mrb[0].mxu0
        %v2197 = vadd.f32 0.0, %v2196
        %v2198 = vpop.f32.mrb[0].mxu0
        %v2199 = vadd.f32 0.0, %v2198
        %2200 = vmatprep.mubr.bf16.mxu0 0
        %2201 = vmatmul.mubr.bf16.gmra.mrb[0].mxu0 %v1124
        %v2202 = vpop.f32.mrb[0].mxu0
        %v2203 = vadd.f32 0.0, %v2202
        %v2204 = vpop.f32.mrb[0].mxu0
        %v2205 = vadd.f32 0.0, %v2204
        %v2206 = vpop.f32.mrb[0].mxu0
        %v2207 = vadd.f32 0.0, %v2206
        %v2208 = vpop.f32.mrb[0].mxu0
        %v2209 = vadd.f32 0.0, %v2208
        %2210 = vmatprep.mubr.bf16.mxu0 0
        %2211 = vmatmul.mubr.bf16.gmra.mrb[0].mxu0 %v1125
        %v2212 = vpop.f32.mrb[0].mxu0
        %v2213 = vadd.f32 0.0, %v2212
        %v2214 = vpop.f32.mrb[0].mxu0
        %v2215 = vadd.f32 0.0, %v2214
        %v2216 = vpop.f32.mrb[0].mxu0
        %v2217 = vadd.f32 0.0, %v2216
        %v2218 = vpop.f32.mrb[0].mxu0
        %v2219 = vadd.f32 0.0, %v2218
        %2220 = vmatprep.mubr.bf16.mxu0 0
        %2221 = vmatmul.mubr.bf16.gmra.mrb[0].mxu0 %v1126
        %v2222 = vpop.f32.mrb[0].mxu0
        %v2223 = vadd.f32 0.0, %v2222
        %v2224 = vpop.f32.mrb[0].mxu0
        %v2225 = vadd.f32 0.0, %v2224
        %v2226 = vpop.f32.mrb[0].mxu0
        %v2227 = vadd.f32 0.0, %v2226
        %v2228 = vpop.f32.mrb[0].mxu0
        %v2229 = vadd.f32 0.0, %v2228
        %2230 = vmatprep.mubr.bf16.mxu0 0
        %2231 = vmatmul.mubr.bf16.gmra.mrb[0].mxu0 %v1127
        %v2232 = vpop.f32.mrb[0].mxu0
        %v2233 = vadd.f32 0.0, %v2232
        %v2234 = vpop.f32.mrb[0].mxu0
        %v2235 = vadd.f32 0.0, %v2234
        %v2236 = vpop.f32.mrb[0].mxu0
        %v2237 = vadd.f32 0.0, %v2236
        %v2238 = vpop.f32.mrb[0].mxu0
        %v2239 = vadd.f32 0.0, %v2238
        %2240 = vmatprep.mubr.bf16.mxu0 0
        %2241 = vmatmul.mubr.bf16.gmra.mrb[0].mxu0 %v1128
        %v2242 = vpop.f32.mrb[0].mxu0
        %v2243 = vadd.f32 0.0, %v2242
        %v2244 = vpop.f32.mrb[0].mxu0
        %v2245 = vadd.f32 0.0, %v2244
        %v2246 = vpop.f32.mrb[0].mxu0
        %v2247 = vadd.f32 0.0, %v2246
        %v2248 = vpop.f32.mrb[0].mxu0
        %v2249 = vadd.f32 0.0, %v2248
        %2250 = vmatprep.mubr.bf16.mxu0 0
        %2251 = vmatmul.mubr.bf16.gmra.mrb[0].mxu0 %v1129
        %v2252 = vpop.f32.mrb[0].mxu0
        %v2253 = vadd.f32 0.0, %v2252
        %v2254 = vpop.f32.mrb[0].mxu0
        %v2255 = vadd.f32 0.0, %v2254
        %v2256 = vpop.f32.mrb[0].mxu0
        %v2257 = vadd.f32 0.0, %v2256
        %v2258 = vpop.f32.mrb[0].mxu0
        %v2259 = vadd.f32 0.0, %v2258
        %2260 = vmatprep.mubr.bf16.mxu0 0
        %2261 = vmatmul.mubr.bf16.gmra.mrb[0].mxu0 %v1130
        %v2262 = vpop.f32.mrb[0].mxu0
        %v2263 = vadd.f32 0.0, %v2262
        %v2264 = vpop.f32.mrb[0].mxu0
        %v2265 = vadd.f32 0.0, %v2264
        %v2266 = vpop.f32.mrb[0].mxu0
        %v2267 = vadd.f32 0.0, %v2266
        %v2268 = vpop.f32.mrb[0].mxu0
        %v2269 = vadd.f32 0.0, %v2268
        %2270 = vmatprep.mubr.bf16.mxu0 0
        %2271 = vmatmul.mubr.bf16.gmra.mrb[0].mxu0 %v1131
        %v2272 = vpop.f32.mrb[0].mxu0
        %v2273 = vadd.f32 0.0, %v2272
        %v2274 = vpop.f32.mrb[0].mxu0
        %v2275 = vadd.f32 0.0, %v2274
        %v2276 = vpop.f32.mrb[0].mxu0
        %v2277 = vadd.f32 0.0, %v2276
        %v2278 = vpop.f32.mrb[0].mxu0
        %v2279 = vadd.f32 0.0, %v2278
        %2280 = vmatprep.mubr.bf16.mxu0 0
        %2281 = vmatmul.mubr.bf16.gmra.mrb[0].mxu0 %v1132
        %v2282 = vpop.f32.mrb[0].mxu0
        %v2283 = vadd.f32 0.0, %v2282
        %v2284 = vpop.f32.mrb[0].mxu0
        %v2285 = vadd.f32 0.0, %v2284
        %v2286 = vpop.f32.mrb[0].mxu0
        %v2287 = vadd.f32 0.0, %v2286
        %v2288 = vpop.f32.mrb[0].mxu0
        %v2289 = vadd.f32 0.0, %v2288
        %2290 = vmatprep.mubr.bf16.mxu0 0
        %2291 = vmatmul.mubr.bf16.gmra.mrb[0].mxu0 %v1133
        %v2292 = vpop.f32.mrb[0].mxu0
        %v2293 = vadd.f32 0.0, %v2292
        %v2294 = vpop.f32.mrb[0].mxu0
        %v2295 = vadd.f32 0.0, %v2294
        %v2296 = vpop.f32.mrb[0].mxu0
        %v2297 = vadd.f32 0.0, %v2296
        %v2298 = vpop.f32.mrb[0].mxu0
        %v2299 = vadd.f32 0.0, %v2298
        %2300 = vmatprep.mubr.bf16.mxu0 0
        %2301 = vmatmul.mubr.bf16.gmra.mrb[0].mxu0 %v1134
        %v2302 = vpop.f32.mrb[0].mxu0
        %v2303 = vadd.f32 0.0, %v2302
        %v2304 = vpop.f32.mrb[0].mxu0
        %v2305 = vadd.f32 0.0, %v2304
        %v2306 = vpop.f32.mrb[0].mxu0
        %v2307 = vadd.f32 0.0, %v2306
        %v2308 = vpop.f32.mrb[0].mxu0
        %v2309 = vadd.f32 0.0, %v2308
        %2310 = vmatprep.mubr.bf16.mxu0 0
        %2311 = vmatmul.mubr.bf16.gmra.mrb[0].mxu0 %v1135
        %v2312 = vpop.f32.mrb[0].mxu0
        %v2313 = vadd.f32 0.0, %v2312
        %v2314 = vpop.f32.mrb[0].mxu0
        %v2315 = vadd.f32 0.0, %v2314
        %v2316 = vpop.f32.mrb[0].mxu0
        %v2317 = vadd.f32 0.0, %v2316
        %v2318 = vpop.f32.mrb[0].mxu0
        %v2319 = vadd.f32 0.0, %v2318
        %2320 = vmatprep.mubr.bf16.mxu0 0
        %2321 = vmatmul.mubr.bf16.gmra.mrb[0].mxu0 %v1136
        %v2322 = vpop.f32.mrb[0].mxu0
        %v2323 = vadd.f32 0.0, %v2322
        %v2324 = vpop.f32.mrb[0].mxu0
        %v2325 = vadd.f32 0.0, %v2324
        %v2326 = vpop.f32.mrb[0].mxu0
        %v2327 = vadd.f32 0.0, %v2326
        %v2328 = vpop.f32.mrb[0].mxu0
        %v2329 = vadd.f32 0.0, %v2328
        %2330 = vmatprep.mubr.bf16.mxu0 0
        %2331 = vmatmul.mubr.bf16.gmra.mrb[0].mxu0 %v1137
        %v2332 = vpop.f32.mrb[0].mxu0
        %v2333 = vadd.f32 0.0, %v2332
        %v2334 = vpop.f32.mrb[0].mxu0
        %v2335 = vadd.f32 0.0, %v2334
        %v2336 = vpop.f32.mrb[0].mxu0
        %v2337 = vadd.f32 0.0, %v2336
        %v2338 = vpop.f32.mrb[0].mxu0
        %v2339 = vadd.f32 0.0, %v2338
        %2340 = vmatprep.mubr.bf16.mxu0 0
        %2341 = vmatmul.mubr.bf16.gmra.mrb[0].mxu0 %v1138
        %v2342 = vpop.f32.mrb[0].mxu0
        %v2343 = vadd.f32 0.0, %v2342
        %v2344 = vpop.f32.mrb[0].mxu0
        %v2345 = vadd.f32 0.0, %v2344
        %v2346 = vpop.f32.mrb[0].mxu0
        %v2347 = vadd.f32 0.0, %v2346
        %v2348 = vpop.f32.mrb[0].mxu0
        %v2349 = vadd.f32 0.0, %v2348
        %2350 = vmatprep.mubr.bf16.mxu0 0
        %2351 = vmatmul.mubr.bf16.gmra.mrb[0].mxu0 %v1139
        %v2352 = vpop.f32.mrb[0].mxu0
        %v2353 = vadd.f32 0.0, %v2352
        %v2354 = vpop.f32.mrb[0].mxu0
        %v2355 = vadd.f32 0.0, %v2354
        %v2356 = vpop.f32.mrb[0].mxu0
        %v2357 = vadd.f32 0.0, %v2356
        %v2358 = vpop.f32.mrb[0].mxu0
        %v2359 = vadd.f32 0.0, %v2358
        %2360 = vmatprep.mubr.bf16.mxu0 0
        %2361 = vmatmul.mubr.bf16.gmra.mrb[0].mxu0 %v1140
        %v2362 = vpop.f32.mrb[0].mxu0
        %v2363 = vadd.f32 0.0, %v2362
        %v2364 = vpop.f32.mrb[0].mxu0
        %v2365 = vadd.f32 0.0, %v2364
        %v2366 = vpop.f32.mrb[0].mxu0
        %v2367 = vadd.f32 0.0, %v2366
        %v2368 = vpop.f32.mrb[0].mxu0
        %v2369 = vadd.f32 0.0, %v2368
        %2370 = vmatprep.mubr.bf16.mxu0 0
        %2371 = vmatmul.mubr.bf16.gmra.mrb[0].mxu0 %v1141
        %v2372 = vpop.f32.mrb[0].mxu0
        %v2373 = vadd.f32 0.0, %v2372
        %v2374 = vpop.f32.mrb[0].mxu0
        %v2375 = vadd.f32 0.0, %v2374
        %v2376 = vpop.f32.mrb[0].mxu0
        %v2377 = vadd.f32 0.0, %v2376
        %v2378 = vpop.f32.mrb[0].mxu0
        %v2379 = vadd.f32 0.0, %v2378
        %2380 = vmatprep.mubr.bf16.mxu0 0
        %2381 = vmatmul.mubr.bf16.gmra.mrb[0].mxu0 %v1142
        %v2382 = vpop.f32.mrb[0].mxu0
        %v2383 = vadd.f32 0.0, %v2382
        %v2384 = vpop.f32.mrb[0].mxu0
        %v2385 = vadd.f32 0.0, %v2384
        %v2386 = vpop.f32.mrb[0].mxu0
        %v2387 = vadd.f32 0.0, %v2386
        %v2388 = vpop.f32.mrb[0].mxu0
        %v2389 = vadd.f32 0.0, %v2388
        %2390 = vmatprep.mubr.bf16.mxu0 0
        %2391 = vmatmul.mubr.bf16.gmra.mrb[0].mxu0 %v1143
        %v2392 = vpop.f32.mrb[0].mxu0
        %v2393 = vadd.f32 0.0, %v2392
        %v2394 = vpop.f32.mrb[0].mxu0
        %v2395 = vadd.f32 0.0, %v2394
        %v2396 = vpop.f32.mrb[0].mxu0
        %v2397 = vadd.f32 0.0, %v2396
        %v2398 = vpop.f32.mrb[0].mxu0
        %v2399 = vadd.f32 0.0, %v2398
        %2400 = vmatprep.mubr.bf16.mxu0 0
        %2401 = vmatmul.mubr.bf16.gmra.mrb[0].mxu0 %v1144
        %v2402 = vpop.f32.mrb[0].mxu0
        %v2403 = vadd.f32 0.0, %v2402
        %v2404 = vpop.f32.mrb[0].mxu0
        %v2405 = vadd.f32 0.0, %v2404
        %v2406 = vpop.f32.mrb[0].mxu0
        %v2407 = vadd.f32 0.0, %v2406
        %v2408 = vpop.f32.mrb[0].mxu0
        %v2409 = vadd.f32 0.0, %v2408
        %2410 = vmatprep.mubr.bf16.mxu0 0
        %2411 = vmatmul.mubr.bf16.gmra.mrb[0].mxu0 %v1145
        %v2412 = vpop.f32.mrb[0].mxu0
        %v2413 = vadd.f32 0.0, %v2412
        %v2414 = vpop.f32.mrb[0].mxu0
        %v2415 = vadd.f32 0.0, %v2414
        %v2416 = vpop.f32.mrb[0].mxu0
        %v2417 = vadd.f32 0.0, %v2416
        %v2418 = vpop.f32.mrb[0].mxu0
        %v2419 = vadd.f32 0.0, %v2418
        %2420 = vmatprep.mubr.bf16.mxu0 0
        %2421 = vmatmul.mubr.bf16.gmra.mrb[0].mxu0 %v1146
        %v2422 = vpop.f32.mrb[0].mxu0
        %v2423 = vadd.f32 0.0, %v2422
        %v2424 = vpop.f32.mrb[0].mxu0
        %v2425 = vadd.f32 0.0, %v2424
        %v2426 = vpop.f32.mrb[0].mxu0
        %v2427 = vadd.f32 0.0, %v2426
        %v2428 = vpop.f32.mrb[0].mxu0
        %v2429 = vadd.f32 0.0, %v2428
        %2430 = vmatprep.mubr.bf16.mxu0 0
        %2431 = vmatmul.mubr.bf16.gmra.mrb[0].mxu0 %v1147
        %v2432 = vpop.f32.mrb[0].mxu0
        %v2433 = vadd.f32 0.0, %v2432
        %v2434 = vpop.f32.mrb[0].mxu0
        %v2435 = vadd.f32 0.0, %v2434
        %v2436 = vpop.f32.mrb[0].mxu0
        %v2437 = vadd.f32 0.0, %v2436
        %v2438 = vpop.f32.mrb[0].mxu0
        %v2439 = vadd.f32 0.0, %v2438
        %2440 = vmatprep.mubr.bf16.mxu0 0
        %2441 = vmatmul.mubr.bf16.gmra.mrb[0].mxu0 %v1148
        %v2442 = vpop.f32.mrb[0].mxu0
        %v2443 = vadd.f32 0.0, %v2442
        %v2444 = vpop.f32.mrb[0].mxu0
        %v2445 = vadd.f32 0.0, %v2444
        %v2446 = vpop.f32.mrb[0].mxu0
        %v2447 = vadd.f32 0.0, %v2446
        %v2448 = vpop.f32.mrb[0].mxu0
        %v2449 = vadd.f32 0.0, %v2448
        %2450 = vmatprep.mubr.bf16.mxu0 0
        %2451 = vmatmul.mubr.bf16.gmra.mrb[0].mxu0 %v1149
        %v2452 = vpop.f32.mrb[0].mxu0
        %v2453 = vadd.f32 0.0, %v2452
        %v2454 = vpop.f32.mrb[0].mxu0
        %v2455 = vadd.f32 0.0, %v2454
        %v2456 = vpop.f32.mrb[0].mxu0
        %v2457 = vadd.f32 0.0, %v2456
        %v2458 = vpop.f32.mrb[0].mxu0
        %v2459 = vadd.f32 0.0, %v2458
        %2460 = vmatprep.mubr.bf16.mxu0 0
        %2461 = vmatmul.mubr.bf16.gmra.mrb[0].mxu0 %v1150
        %v2462 = vpop.f32.mrb[0].mxu0
        %v2463 = vadd.f32 0.0, %v2462
        %v2464 = vpop.f32.mrb[0].mxu0
        %v2465 = vadd.f32 0.0, %v2464
        %v2466 = vpop.f32.mrb[0].mxu0
        %v2467 = vadd.f32 0.0, %v2466
        %v2468 = vpop.f32.mrb[0].mxu0
        %v2469 = vadd.f32 0.0, %v2468
        %2470 = vmatprep.mubr.bf16.mxu0 0
        %2471 = vmatmul.mubr.bf16.gmra.mrb[0].mxu0 %v1151
        %v2472 = vpop.f32.mrb[0].mxu0
        %v2473 = vadd.f32 0.0, %v2472
        %v2474 = vpop.f32.mrb[0].mxu0
        %v2475 = vadd.f32 0.0, %v2474
        %v2476 = vpop.f32.mrb[0].mxu0
        %v2477 = vadd.f32 0.0, %v2476
        %v2478 = vpop.f32.mrb[0].mxu0
        %v2479 = vadd.f32 0.0, %v2478
        %2480 = vmatprep.mubr.bf16.mxu0 0
        %2481 = vmatmul.mubr.bf16.gmra.mrb[0].mxu0 %v1152
        %v2482 = vpop.f32.mrb[0].mxu0
        %v2483 = vadd.f32 0.0, %v2482
        %v2484 = vpop.f32.mrb[0].mxu0
        %v2485 = vadd.f32 0.0, %v2484
        %v2486 = vpop.f32.mrb[0].mxu0
        %v2487 = vadd.f32 0.0, %v2486
        %v2488 = vpop.f32.mrb[0].mxu0
        %v2489 = vadd.f32 0.0, %v2488
        %2490 = vmatprep.mubr.bf16.mxu0 0
        %2491 = vmatmul.mubr.bf16.gmra.mrb[0].mxu0 %v1153
        %v2492 = vpop.f32.mrb[0].mxu0
        %v2493 = vadd.f32 0.0, %v2492
        %v2494 = vpop.f32.mrb[0].mxu0
        %v2495 = vadd.f32 0.0, %v2494
        %v2496 = vpop.f32.mrb[0].mxu0
        %v2497 = vadd.f32 0.0, %v2496
        %v2498 = vpop.f32.mrb[0].mxu0
        %v2499 = vadd.f32 0.0, %v2498
        %2500 = vdwg.mxu0
        %v2501 = vadd.f32 %v674, %v1477
        %v2502 = vadd.f32 %v675, %v1479
        %v2503 = vadd.f32 %v676, %v1830
        %v2504 = vadd.f32 %v677, %v1832
        %v2505 = vadd.f32 %v678, %v2183
        %v2506 = vadd.f32 %v679, %v2185
        %v2507 = vadd.f32 %v680, %v1481
        %v2508 = vadd.f32 %v681, %v1483
        %v2509 = vadd.f32 %v682, %v1834
        %v2510 = vadd.f32 %v683, %v1836
        %v2511 = vadd.f32 %v684, %v2187
        %v2512 = vadd.f32 %v685, %v2189
        %v2513 = vadd.f32 %v686, %v1487
        %v2514 = vadd.f32 %v687, %v1489
        %v2515 = vadd.f32 %v688, %v1840
        %v2516 = vadd.f32 %v689, %v1842
        %v2517 = vadd.f32 %v690, %v2193
        %v2518 = vadd.f32 %v691, %v2195
        %v2519 = vadd.f32 %v692, %v1491
        %v2520 = vadd.f32 %v693, %v1493
        %v2521 = vadd.f32 %v694, %v1844
        %v2522 = vadd.f32 %v695, %v1846
        %v2523 = vadd.f32 %v696, %v2197
        %v2524 = vadd.f32 %v697, %v2199
        %v2525 = vadd.f32 %v698, %v1497
        %v2526 = vadd.f32 %v699, %v1499
        %v2527 = vadd.f32 %v700, %v1850
        %v2528 = vadd.f32 %v701, %v1852
        %v2529 = vadd.f32 %v702, %v2203
        %v2530 = vadd.f32 %v703, %v2205
        %v2531 = vadd.f32 %v704, %v1501
        %v2532 = vadd.f32 %v705, %v1503
        %v2533 = vadd.f32 %v706, %v1854
        %v2534 = vadd.f32 %v707, %v1856
        %v2535 = vadd.f32 %v708, %v2207
        %v2536 = vadd.f32 %v709, %v2209
        %v2537 = vadd.f32 %v710, %v1507
        %v2538 = vadd.f32 %v711, %v1509
        %v2539 = vadd.f32 %v712, %v1860
        %v2540 = vadd.f32 %v713, %v1862
        %v2541 = vadd.f32 %v714, %v2213
        %v2542 = vadd.f32 %v715, %v2215
        %v2543 = vadd.f32 %v716, %v1511
        %v2544 = vadd.f32 %v717, %v1513
        %v2545 = vadd.f32 %v718, %v1864
        %v2546 = vadd.f32 %v719, %v1866
        %v2547 = vadd.f32 %v720, %v2217
        %v2548 = vadd.f32 %v721, %v2219
        %v2549 = vadd.f32 %v722, %v1517
        %v2550 = vadd.f32 %v723, %v1519
        %v2551 = vadd.f32 %v724, %v1870
        %v2552 = vadd.f32 %v725, %v1872
        %v2553 = vadd.f32 %v726, %v2223
        %v2554 = vadd.f32 %v727, %v2225
        %v2555 = vadd.f32 %v728, %v1521
        %v2556 = vadd.f32 %v729, %v1523
        %v2557 = vadd.f32 %v730, %v1874
        %v2558 = vadd.f32 %v731, %v1876
        %v2559 = vadd.f32 %v732, %v2227
        %v2560 = vadd.f32 %v733, %v2229
        %v2561 = vadd.f32 %v734, %v1527
        %v2562 = vadd.f32 %v735, %v1529
        %v2563 = vadd.f32 %v736, %v1880
        %v2564 = vadd.f32 %v737, %v1882
        %v2565 = vadd.f32 %v738, %v2233
        %v2566 = vadd.f32 %v739, %v2235
        %v2567 = vadd.f32 %v740, %v1531
        %v2568 = vadd.f32 %v741, %v1533
        %v2569 = vadd.f32 %v742, %v1884
        %v2570 = vadd.f32 %v743, %v1886
        %v2571 = vadd.f32 %v744, %v2237
        %v2572 = vadd.f32 %v745, %v2239
        %v2573 = vadd.f32 %v746, %v1537
        %v2574 = vadd.f32 %v747, %v1539
        %v2575 = vadd.f32 %v748, %v1890
        %v2576 = vadd.f32 %v749, %v1892
        %v2577 = vadd.f32 %v750, %v2243
        %v2578 = vadd.f32 %v751, %v2245
        %v2579 = vadd.f32 %v752, %v1541
        %v2580 = vadd.f32 %v753, %v1543
        %v2581 = vadd.f32 %v754, %v1894
        %v2582 = vadd.f32 %v755, %v1896
        %v2583 = vadd.f32 %v756, %v2247
        %v2584 = vadd.f32 %v757, %v2249
        %v2585 = vadd.f32 %v758, %v1547
        %v2586 = vadd.f32 %v759, %v1549
        %v2587 = vadd.f32 %v760, %v1900
        %v2588 = vadd.f32 %v761, %v1902
        %v2589 = vadd.f32 %v762, %v2253
        %v2590 = vadd.f32 %v763, %v2255
        %v2591 = vadd.f32 %v764, %v1551
        %v2592 = vadd.f32 %v765, %v1553
        %v2593 = vadd.f32 %v766, %v1904
        %v2594 = vadd.f32 %v767, %v1906
        %v2595 = vadd.f32 %v768, %v2257
        %v2596 = vadd.f32 %v769, %v2259
        %v2597 = vadd.f32 %v770, %v1557
        %v2598 = vadd.f32 %v771, %v1559
        %v2599 = vadd.f32 %v772, %v1910
        %v2600 = vadd.f32 %v773, %v1912
        %v2601 = vadd.f32 %v774, %v2263
        %v2602 = vadd.f32 %v775, %v2265
        %v2603 = vadd.f32 %v776, %v1561
        %v2604 = vadd.f32 %v777, %v1563
        %v2605 = vadd.f32 %v778, %v1914
        %v2606 = vadd.f32 %v779, %v1916
        %v2607 = vadd.f32 %v780, %v2267
        %v2608 = vadd.f32 %v781, %v2269
        %v2609 = vadd.f32 %v782, %v1567
        %v2610 = vadd.f32 %v783, %v1569
        %v2611 = vadd.f32 %v784, %v1920
        %v2612 = vadd.f32 %v785, %v1922
        %v2613 = vadd.f32 %v786, %v2273
        %v2614 = vadd.f32 %v787, %v2275
        %v2615 = vadd.f32 %v788, %v1571
        %v2616 = vadd.f32 %v789, %v1573
        %v2617 = vadd.f32 %v790, %v1924
        %v2618 = vadd.f32 %v791, %v1926
        %v2619 = vadd.f32 %v792, %v2277
        %v2620 = vadd.f32 %v793, %v2279
        %v2621 = vadd.f32 %v794, %v1577
        %v2622 = vadd.f32 %v795, %v1579
        %v2623 = vadd.f32 %v796, %v1930
        %v2624 = vadd.f32 %v797, %v1932
        %v2625 = vadd.f32 %v798, %v2283
        %v2626 = vadd.f32 %v799, %v2285
        %v2627 = vadd.f32 %v800, %v1581
        %v2628 = vadd.f32 %v801, %v1583
        %v2629 = vadd.f32 %v802, %v1934
        %v2630 = vadd.f32 %v803, %v1936
        %v2631 = vadd.f32 %v804, %v2287
        %v2632 = vadd.f32 %v805, %v2289
        %v2633 = vadd.f32 %v806, %v1587
        %v2634 = vadd.f32 %v807, %v1589
        %v2635 = vadd.f32 %v808, %v1940
        %v2636 = vadd.f32 %v809, %v1942
        %v2637 = vadd.f32 %v810, %v2293
        %v2638 = vadd.f32 %v811, %v2295
        %v2639 = vadd.f32 %v812, %v1591
        %v2640 = vadd.f32 %v813, %v1593
        %v2641 = vadd.f32 %v814, %v1944
        %v2642 = vadd.f32 %v815, %v1946
        %v2643 = vadd.f32 %v816, %v2297
        %v2644 = vadd.f32 %v817, %v2299
        %v2645 = vadd.f32 %v818, %v1597
        %v2646 = vadd.f32 %v819, %v1599
        %v2647 = vadd.f32 %v820, %v1950
        %v2648 = vadd.f32 %v821, %v1952
        %v2649 = vadd.f32 %v822, %v2303
        %v2650 = vadd.f32 %v823, %v2305
        %v2651 = vadd.f32 %v824, %v1601
        %v2652 = vadd.f32 %v825, %v1603
        %v2653 = vadd.f32 %v826, %v1954
        %v2654 = vadd.f32 %v827, %v1956
        %v2655 = vadd.f32 %v828, %v2307
        %v2656 = vadd.f32 %v829, %v2309
        %v2657 = vadd.f32 %v830, %v1607
        %v2658 = vadd.f32 %v831, %v1609
        %v2659 = vadd.f32 %v832, %v1960
        %v2660 = vadd.f32 %v833, %v1962
        %v2661 = vadd.f32 %v834, %v2313
        %v2662 = vadd.f32 %v835, %v2315
        %v2663 = vadd.f32 %v836, %v1611
        %v2664 = vadd.f32 %v837, %v1613
        %v2665 = vadd.f32 %v838, %v1964
        %v2666 = vadd.f32 %v839, %v1966
        %v2667 = vadd.f32 %v840, %v2317
        %v2668 = vadd.f32 %v841, %v2319
        %v2669 = vadd.f32 %v842, %v1617
        %v2670 = vadd.f32 %v843, %v1619
        %v2671 = vadd.f32 %v844, %v1970
        %v2672 = vadd.f32 %v845, %v1972
        %v2673 = vadd.f32 %v846, %v2323
        %v2674 = vadd.f32 %v847, %v2325
        %v2675 = vadd.f32 %v848, %v1621
        %v2676 = vadd.f32 %v849, %v1623
        %v2677 = vadd.f32 %v850, %v1974
        %v2678 = vadd.f32 %v851, %v1976
        %v2679 = vadd.f32 %v852, %v2327
        %v2680 = vadd.f32 %v853, %v2329
        %v2681 = vadd.f32 %v854, %v1627
        %v2682 = vadd.f32 %v855, %v1629
        %v2683 = vadd.f32 %v856, %v1980
        %v2684 = vadd.f32 %v857, %v1982
        %v2685 = vadd.f32 %v858, %v2333
        %v2686 = vadd.f32 %v859, %v2335
        %v2687 = vadd.f32 %v860, %v1631
        %v2688 = vadd.f32 %v861, %v1633
        %v2689 = vadd.f32 %v862, %v1984
        %v2690 = vadd.f32 %v863, %v1986
        %v2691 = vadd.f32 %v864, %v2337
        %v2692 = vadd.f32 %v865, %v2339
        %v2693 = vadd.f32 %v866, %v1637
        %v2694 = vadd.f32 %v867, %v1639
        %v2695 = vadd.f32 %v868, %v1990
        %v2696 = vadd.f32 %v869, %v1992
        %v2697 = vadd.f32 %v870, %v2343
        %v2698 = vadd.f32 %v871, %v2345
        %v2699 = vadd.f32 %v872, %v1641
        %v2700 = vadd.f32 %v873, %v1643
        %v2701 = vadd.f32 %v874, %v1994
        %v2702 = vadd.f32 %v875, %v1996
        %v2703 = vadd.f32 %v876, %v2347
        %v2704 = vadd.f32 %v877, %v2349
        %v2705 = vadd.f32 %v878, %v1647
        %v2706 = vadd.f32 %v879, %v1649
        %v2707 = vadd.f32 %v880, %v2000
        %v2708 = vadd.f32 %v881, %v2002
        %v2709 = vadd.f32 %v882, %v2353
        %v2710 = vadd.f32 %v883, %v2355
        %v2711 = vadd.f32 %v884, %v1651
        %v2712 = vadd.f32 %v885, %v1653
        %v2713 = vadd.f32 %v886, %v2004
        %v2714 = vadd.f32 %v887, %v2006
        %v2715 = vadd.f32 %v888, %v2357
        %v2716 = vadd.f32 %v889, %v2359
        %v2717 = vadd.f32 %v890, %v1657
        %v2718 = vadd.f32 %v891, %v1659
        %v2719 = vadd.f32 %v892, %v2010
        %v2720 = vadd.f32 %v893, %v2012
        %v2721 = vadd.f32 %v894, %v2363
        %v2722 = vadd.f32 %v895, %v2365
        %v2723 = vadd.f32 %v896, %v1661
        %v2724 = vadd.f32 %v897, %v1663
        %v2725 = vadd.f32 %v898, %v2014
        %v2726 = vadd.f32 %v899, %v2016
        %v2727 = vadd.f32 %v900, %v2367
        %v2728 = vadd.f32 %v901, %v2369
        %v2729 = vadd.f32 %v902, %v1667
        %v2730 = vadd.f32 %v903, %v1669
        %v2731 = vadd.f32 %v904, %v2020
        %v2732 = vadd.f32 %v905, %v2022
        %v2733 = vadd.f32 %v906, %v2373
        %v2734 = vadd.f32 %v907, %v2375
        %v2735 = vadd.f32 %v908, %v1671
        %v2736 = vadd.f32 %v909, %v1673
        %v2737 = vadd.f32 %v910, %v2024
        %v2738 = vadd.f32 %v911, %v2026
        %v2739 = vadd.f32 %v912, %v2377
        %v2740 = vadd.f32 %v913, %v2379
        %v2741 = vadd.f32 %v914, %v1677
        %v2742 = vadd.f32 %v915, %v1679
        %v2743 = vadd.f32 %v916, %v2030
        %v2744 = vadd.f32 %v917, %v2032
        %v2745 = vadd.f32 %v918, %v2383
        %v2746 = vadd.f32 %v919, %v2385
        %v2747 = vadd.f32 %v920, %v1681
        %v2748 = vadd.f32 %v921, %v1683
        %v2749 = vadd.f32 %v922, %v2034
        %v2750 = vadd.f32 %v923, %v2036
        %v2751 = vadd.f32 %v924, %v2387
        %v2752 = vadd.f32 %v925, %v2389
        %v2753 = vadd.f32 %v926, %v1687
        %v2754 = vadd.f32 %v927, %v1689
        %v2755 = vadd.f32 %v928, %v2040
        %v2756 = vadd.f32 %v929, %v2042
        %v2757 = vadd.f32 %v930, %v2393
        %v2758 = vadd.f32 %v931, %v2395
        %v2759 = vadd.f32 %v932, %v1691
        %v2760 = vadd.f32 %v933, %v1693
        %v2761 = vadd.f32 %v934, %v2044
        %v2762 = vadd.f32 %v935, %v2046
        %v2763 = vadd.f32 %v936, %v2397
        %v2764 = vadd.f32 %v937, %v2399
        %v2765 = vadd.f32 %v938, %v1697
        %v2766 = vadd.f32 %v939, %v1699
        %v2767 = vadd.f32 %v940, %v2050
        %v2768 = vadd.f32 %v941, %v2052
        %v2769 = vadd.f32 %v942, %v2403
        %v2770 = vadd.f32 %v943, %v2405
        %v2771 = vadd.f32 %v944, %v1701
        %v2772 = vadd.f32 %v945, %v1703
        %v2773 = vadd.f32 %v946, %v2054
        %v2774 = vadd.f32 %v947, %v2056
        %v2775 = vadd.f32 %v948, %v2407
        %v2776 = vadd.f32 %v949, %v2409
        %v2777 = vadd.f32 %v950, %v1707
        %v2778 = vadd.f32 %v951, %v1709
        %v2779 = vadd.f32 %v952, %v2060
        %v2780 = vadd.f32 %v953, %v2062
        %v2781 = vadd.f32 %v954, %v2413
        %v2782 = vadd.f32 %v955, %v2415
        %v2783 = vadd.f32 %v956, %v1711
        %v2784 = vadd.f32 %v957, %v1713
        %v2785 = vadd.f32 %v958, %v2064
        %v2786 = vadd.f32 %v959, %v2066
        %v2787 = vadd.f32 %v960, %v2417
        %v2788 = vadd.f32 %v961, %v2419
        %v2789 = vadd.f32 %v962, %v1717
        %v2790 = vadd.f32 %v963, %v1719
        %v2791 = vadd.f32 %v964, %v2070
        %v2792 = vadd.f32 %v965, %v2072
        %v2793 = vadd.f32 %v966, %v2423
        %v2794 = vadd.f32 %v967, %v2425
        %v2795 = vadd.f32 %v968, %v1721
        %v2796 = vadd.f32 %v969, %v1723
        %v2797 = vadd.f32 %v970, %v2074
        %v2798 = vadd.f32 %v971, %v2076
        %v2799 = vadd.f32 %v972, %v2427
        %v2800 = vadd.f32 %v973, %v2429
        %v2801 = vadd.f32 %v974, %v1727
        %v2802 = vadd.f32 %v975, %v1729
        %v2803 = vadd.f32 %v976, %v2080
        %v2804 = vadd.f32 %v977, %v2082
        %v2805 = vadd.f32 %v978, %v2433
        %v2806 = vadd.f32 %v979, %v2435
        %v2807 = vadd.f32 %v980, %v1731
        %v2808 = vadd.f32 %v981, %v1733
        %v2809 = vadd.f32 %v982, %v2084
        %v2810 = vadd.f32 %v983, %v2086
        %v2811 = vadd.f32 %v984, %v2437
        %v2812 = vadd.f32 %v985, %v2439
        %v2813 = vadd.f32 %v986, %v1737
        %v2814 = vadd.f32 %v987, %v1739
        %v2815 = vadd.f32 %v988, %v2090
        %v2816 = vadd.f32 %v989, %v2092
        %v2817 = vadd.f32 %v990, %v2443
        %v2818 = vadd.f32 %v991, %v2445
        %v2819 = vadd.f32 %v992, %v1741
        %v2820 = vadd.f32 %v993, %v1743
        %v2821 = vadd.f32 %v994, %v2094
        %v2822 = vadd.f32 %v995, %v2096
        %v2823 = vadd.f32 %v996, %v2447
        %v2824 = vadd.f32 %v997, %v2449
        %v2825 = vadd.f32 %v998, %v1747
        %v2826 = vadd.f32 %v999, %v1749
        %v2827 = vadd.f32 %v1000, %v2100
        %v2828 = vadd.f32 %v1001, %v2102
        %v2829 = vadd.f32 %v1002, %v2453
        %v2830 = vadd.f32 %v1003, %v2455
        %v2831 = vadd.f32 %v1004, %v1751
        %v2832 = vadd.f32 %v1005, %v1753
        %v2833 = vadd.f32 %v1006, %v2104
        %v2834 = vadd.f32 %v1007, %v2106
        %v2835 = vadd.f32 %v1008, %v2457
        %v2836 = vadd.f32 %v1009, %v2459
        %v2837 = vadd.f32 %v1010, %v1757
        %v2838 = vadd.f32 %v1011, %v1759
        %v2839 = vadd.f32 %v1012, %v2110
        %v2840 = vadd.f32 %v1013, %v2112
        %v2841 = vadd.f32 %v1014, %v2463
        %v2842 = vadd.f32 %v1015, %v2465
        %v2843 = vadd.f32 %v1016, %v1761
        %v2844 = vadd.f32 %v1017, %v1763
        %v2845 = vadd.f32 %v1018, %v2114
        %v2846 = vadd.f32 %v1019, %v2116
        %v2847 = vadd.f32 %v1020, %v2467
        %v2848 = vadd.f32 %v1021, %v2469
        %v2849 = vadd.f32 %v1022, %v1767
        %v2850 = vadd.f32 %v1023, %v1769
        %v2851 = vadd.f32 %v1024, %v2120
        %v2852 = vadd.f32 %v1025, %v2122
        %v2853 = vadd.f32 %v1026, %v2473
        %v2854 = vadd.f32 %v1027, %v2475
        %v2855 = vadd.f32 %v1028, %v1771
        %v2856 = vadd.f32 %v1029, %v1773
        %v2857 = vadd.f32 %v1030, %v2124
        %v2858 = vadd.f32 %v1031, %v2126
        %v2859 = vadd.f32 %v1032, %v2477
        %v2860 = vadd.f32 %v1033, %v2479
        %v2861 = vadd.f32 %v1034, %v1777
        %v2862 = vadd.f32 %v1035, %v1779
        %v2863 = vadd.f32 %v1036, %v2130
        %v2864 = vadd.f32 %v1037, %v2132
        %v2865 = vadd.f32 %v1038, %v2483
        %v2866 = vadd.f32 %v1039, %v2485
        %v2867 = vadd.f32 %v1040, %v1781
        %v2868 = vadd.f32 %v1041, %v1783
        %v2869 = vadd.f32 %v1042, %v2134
        %v2870 = vadd.f32 %v1043, %v2136
        %v2871 = vadd.f32 %v1044, %v2487
        %v2872 = vadd.f32 %v1045, %v2489
        %v2873 = vadd.f32 %v1046, %v1787
        %v2874 = vadd.f32 %v1047, %v1789
        %v2875 = vadd.f32 %v1048, %v2140
        %v2876 = vadd.f32 %v1049, %v2142
        %v2877 = vadd.f32 %v1050, %v2493
        %v2878 = vadd.f32 %v1051, %v2495
        %v2879 = vadd.f32 %v1052, %v1791
        %v2880 = vadd.f32 %v1053, %v1793
        %v2881 = vadd.f32 %v1054, %v2144
        %v2882 = vadd.f32 %v1055, %v2146
        %v2883 = vadd.f32 %v1056, %v2497
        %v2884 = vadd.f32 %v1057, %v2499
        %2885 = vst [vmem:[#allocation2] sm:$0xff] %v2501
        %2886 = vst [vmem:[#allocation2 + $0x8] sm:$0xff] %v2502
        %2887 = vst [vmem:[#allocation2 + $0x10] sm:$0xff] %v2503
        %2888 = vst [vmem:[#allocation2 + $0x18] sm:$0xff] %v2504
        %2889 = vst [vmem:[#allocation2 + $0x20] sm:$0xff] %v2505
        %2890 = vst [vmem:[#allocation2 + $0x28] sm:$0xff] %v2506
        %2891 = vst [vmem:[#allocation2 + $0x30] sm:$0xff] %v2507
        %2892 = vst [vmem:[#allocation2 + $0x38] sm:$0xff] %v2508
        %2893 = vst [vmem:[#allocation2 + $0x40] sm:$0xff] %v2509
        %2894 = vst [vmem:[#allocation2 + $0x48] sm:$0xff] %v2510
        %2895 = vst [vmem:[#allocation2 + $0x50] sm:$0xff] %v2511
        %2896 = vst [vmem:[#allocation2 + $0x58] sm:$0xff] %v2512
        %2897 = vst [vmem:[#allocation2 + $0x60] sm:$0xff] %v2513
        %2898 = vst [vmem:[#allocation2 + $0x68] sm:$0xff] %v2514
        %2899 = vst [vmem:[#allocation2 + $0x70] sm:$0xff] %v2515
        %2900 = vst [vmem:[#allocation2 + $0x78] sm:$0xff] %v2516
        %2901 = vst [vmem:[#allocation2 + $0x80] sm:$0xff] %v2517
        %2902 = vst [vmem:[#allocation2 + $0x88] sm:$0xff] %v2518
        %2903 = vst [vmem:[#allocation2 + $0x90] sm:$0xff] %v2519
        %2904 = vst [vmem:[#allocation2 + $0x98] sm:$0xff] %v2520
        %2905 = vst [vmem:[#allocation2 + $0xa0] sm:$0xff] %v2521
        %2906 = vst [vmem:[#allocation2 + $0xa8] sm:$0xff] %v2522
        %2907 = vst [vmem:[#allocation2 + $0xb0] sm:$0xff] %v2523
        %2908 = vst [vmem:[#allocation2 + $0xb8] sm:$0xff] %v2524
        %2909 = vst [vmem:[#allocation2 + $0xc0] sm:$0xff] %v2525
        %2910 = vst [vmem:[#allocation2 + $0xc8] sm:$0xff] %v2526
        %2911 = vst [vmem:[#allocation2 + $0xd0] sm:$0xff] %v2527
        %2912 = vst [vmem:[#allocation2 + $0xd8] sm:$0xff] %v2528
        %2913 = vst [vmem:[#allocation2 + $0xe0] sm:$0xff] %v2529
        %2914 = vst [vmem:[#allocation2 + $0xe8] sm:$0xff] %v2530
        %2915 = vst [vmem:[#allocation2 + $0xf0] sm:$0xff] %v2531
        %2916 = vst [vmem:[#allocation2 + $0xf8] sm:$0xff] %v2532
        %2917 = vst [vmem:[#allocation2 + $0x100] sm:$0xff] %v2533
        %2918 = vst [vmem:[#allocation2 + $0x108] sm:$0xff] %v2534
        %2919 = vst [vmem:[#allocation2 + $0x110] sm:$0xff] %v2535
        %2920 = vst [vmem:[#allocation2 + $0x118] sm:$0xff] %v2536
        %2921 = vst [vmem:[#allocation2 + $0x120] sm:$0xff] %v2537
        %2922 = vst [vmem:[#allocation2 + $0x128] sm:$0xff] %v2538
        %2923 = vst [vmem:[#allocation2 + $0x130] sm:$0xff] %v2539
        %2924 = vst [vmem:[#allocation2 + $0x138] sm:$0xff] %v2540
        %2925 = vst [vmem:[#allocation2 + $0x140] sm:$0xff] %v2541
        %2926 = vst [vmem:[#allocation2 + $0x148] sm:$0xff] %v2542
        %2927 = vst [vmem:[#allocation2 + $0x150] sm:$0xff] %v2543
        %2928 = vst [vmem:[#allocation2 + $0x158] sm:$0xff] %v2544
        %2929 = vst [vmem:[#allocation2 + $0x160] sm:$0xff] %v2545
        %2930 = vst [vmem:[#allocation2 + $0x168] sm:$0xff] %v2546
        %2931 = vst [vmem:[#allocation2 + $0x170] sm:$0xff] %v2547
        %2932 = vst [vmem:[#allocation2 + $0x178] sm:$0xff] %v2548
        %2933 = vst [vmem:[#allocation2 + $0x180] sm:$0xff] %v2549
        %2934 = vst [vmem:[#allocation2 + $0x188] sm:$0xff] %v2550
        %2935 = vst [vmem:[#allocation2 + $0x190] sm:$0xff] %v2551
        %2936 = vst [vmem:[#allocation2 + $0x198] sm:$0xff] %v2552
        %2937 = vst [vmem:[#allocation2 + $0x1a0] sm:$0xff] %v2553
        %2938 = vst [vmem:[#allocation2 + $0x1a8] sm:$0xff] %v2554
        %2939 = vst [vmem:[#allocation2 + $0x1b0] sm:$0xff] %v2555
        %2940 = vst [vmem:[#allocation2 + $0x1b8] sm:$0xff] %v2556
        %2941 = vst [vmem:[#allocation2 + $0x1c0] sm:$0xff] %v2557
        %2942 = vst [vmem:[#allocation2 + $0x1c8] sm:$0xff] %v2558
        %2943 = vst [vmem:[#allocation2 + $0x1d0] sm:$0xff] %v2559
        %2944 = vst [vmem:[#allocation2 + $0x1d8] sm:$0xff] %v2560
        %2945 = vst [vmem:[#allocation2 + $0x1e0] sm:$0xff] %v2561
        %2946 = vst [vmem:[#allocation2 + $0x1e8] sm:$0xff] %v2562
        %2947 = vst [vmem:[#allocation2 + $0x1f0] sm:$0xff] %v2563
        %2948 = vst [vmem:[#allocation2 + $0x1f8] sm:$0xff] %v2564
        %2949 = vst [vmem:[#allocation2 + $0x200] sm:$0xff] %v2565
        %2950 = vst [vmem:[#allocation2 + $0x208] sm:$0xff] %v2566
        %2951 = vst [vmem:[#allocation2 + $0x210] sm:$0xff] %v2567
        %2952 = vst [vmem:[#allocation2 + $0x218] sm:$0xff] %v2568
        %2953 = vst [vmem:[#allocation2 + $0x220] sm:$0xff] %v2569
        %2954 = vst [vmem:[#allocation2 + $0x228] sm:$0xff] %v2570
        %2955 = vst [vmem:[#allocation2 + $0x230] sm:$0xff] %v2571
        %2956 = vst [vmem:[#allocation2 + $0x238] sm:$0xff] %v2572
        %2957 = vst [vmem:[#allocation2 + $0x240] sm:$0xff] %v2573
        %2958 = vst [vmem:[#allocation2 + $0x248] sm:$0xff] %v2574
        %2959 = vst [vmem:[#allocation2 + $0x250] sm:$0xff] %v2575
        %2960 = vst [vmem:[#allocation2 + $0x258] sm:$0xff] %v2576
        %2961 = vst [vmem:[#allocation2 + $0x260] sm:$0xff] %v2577
        %2962 = vst [vmem:[#allocation2 + $0x268] sm:$0xff] %v2578
        %2963 = vst [vmem:[#allocation2 + $0x270] sm:$0xff] %v2579
        %2964 = vst [vmem:[#allocation2 + $0x278] sm:$0xff] %v2580
        %2965 = vst [vmem:[#allocation2 + $0x280] sm:$0xff] %v2581
        %2966 = vst [vmem:[#allocation2 + $0x288] sm:$0xff] %v2582
        %2967 = vst [vmem:[#allocation2 + $0x290] sm:$0xff] %v2583
        %2968 = vst [vmem:[#allocation2 + $0x298] sm:$0xff] %v2584
        %2969 = vst [vmem:[#allocation2 + $0x2a0] sm:$0xff] %v2585
        %2970 = vst [vmem:[#allocation2 + $0x2a8] sm:$0xff] %v2586
        %2971 = vst [vmem:[#allocation2 + $0x2b0] sm:$0xff] %v2587
        %2972 = vst [vmem:[#allocation2 + $0x2b8] sm:$0xff] %v2588
        %2973 = vst [vmem:[#allocation2 + $0x2c0] sm:$0xff] %v2589
        %2974 = vst [vmem:[#allocation2 + $0x2c8] sm:$0xff] %v2590
        %2975 = vst [vmem:[#allocation2 + $0x2d0] sm:$0xff] %v2591
        %2976 = vst [vmem:[#allocation2 + $0x2d8] sm:$0xff] %v2592
        %2977 = vst [vmem:[#allocation2 + $0x2e0] sm:$0xff] %v2593
        %2978 = vst [vmem:[#allocation2 + $0x2e8] sm:$0xff] %v2594
        %2979 = vst [vmem:[#allocation2 + $0x2f0] sm:$0xff] %v2595
        %2980 = vst [vmem:[#allocation2 + $0x2f8] sm:$0xff] %v2596
        %2981 = vst [vmem:[#allocation2 + $0x300] sm:$0xff] %v2597
        %2982 = vst [vmem:[#allocation2 + $0x308] sm:$0xff] %v2598
        %2983 = vst [vmem:[#allocation2 + $0x310] sm:$0xff] %v2599
        %2984 = vst [vmem:[#allocation2 + $0x318] sm:$0xff] %v2600
        %2985 = vst [vmem:[#allocation2 + $0x320] sm:$0xff] %v2601
        %2986 = vst [vmem:[#allocation2 + $0x328] sm:$0xff] %v2602
        %2987 = vst [vmem:[#allocation2 + $0x330] sm:$0xff] %v2603
        %2988 = vst [vmem:[#allocation2 + $0x338] sm:$0xff] %v2604
        %2989 = vst [vmem:[#allocation2 + $0x340] sm:$0xff] %v2605
        %2990 = vst [vmem:[#allocation2 + $0x348] sm:$0xff] %v2606
        %2991 = vst [vmem:[#allocation2 + $0x350] sm:$0xff] %v2607
        %2992 = vst [vmem:[#allocation2 + $0x358] sm:$0xff] %v2608
        %2993 = vst [vmem:[#allocation2 + $0x360] sm:$0xff] %v2609
        %2994 = vst [vmem:[#allocation2 + $0x368] sm:$0xff] %v2610
        %2995 = vst [vmem:[#allocation2 + $0x370] sm:$0xff] %v2611
        %2996 = vst [vmem:[#allocation2 + $0x378] sm:$0xff] %v2612
        %2997 = vst [vmem:[#allocation2 + $0x380] sm:$0xff] %v2613
        %2998 = vst [vmem:[#allocation2 + $0x388] sm:$0xff] %v2614
        %2999 = vst [vmem:[#allocation2 + $0x390] sm:$0xff] %v2615
        %3000 = vst [vmem:[#allocation2 + $0x398] sm:$0xff] %v2616
        %3001 = vst [vmem:[#allocation2 + $0x3a0] sm:$0xff] %v2617
        %3002 = vst [vmem:[#allocation2 + $0x3a8] sm:$0xff] %v2618
        %3003 = vst [vmem:[#allocation2 + $0x3b0] sm:$0xff] %v2619
        %3004 = vst [vmem:[#allocation2 + $0x3b8] sm:$0xff] %v2620
        %3005 = vst [vmem:[#allocation2 + $0x3c0] sm:$0xff] %v2621
        %3006 = vst [vmem:[#allocation2 + $0x3c8] sm:$0xff] %v2622
        %3007 = vst [vmem:[#allocation2 + $0x3d0] sm:$0xff] %v2623
        %3008 = vst [vmem:[#allocation2 + $0x3d8] sm:$0xff] %v2624
        %3009 = vst [vmem:[#allocation2 + $0x3e0] sm:$0xff] %v2625
        %3010 = vst [vmem:[#allocation2 + $0x3e8] sm:$0xff] %v2626
        %3011 = vst [vmem:[#allocation2 + $0x3f0] sm:$0xff] %v2627
        %3012 = vst [vmem:[#allocation2 + $0x3f8] sm:$0xff] %v2628
        %3013 = vst [vmem:[#allocation2 + $0x400] sm:$0xff] %v2629
        %3014 = vst [vmem:[#allocation2 + $0x408] sm:$0xff] %v2630
        %3015 = vst [vmem:[#allocation2 + $0x410] sm:$0xff] %v2631
        %3016 = vst [vmem:[#allocation2 + $0x418] sm:$0xff] %v2632
        %3017 = vst [vmem:[#allocation2 + $0x420] sm:$0xff] %v2633
        %3018 = vst [vmem:[#allocation2 + $0x428] sm:$0xff] %v2634
        %3019 = vst [vmem:[#allocation2 + $0x430] sm:$0xff] %v2635
        %3020 = vst [vmem:[#allocation2 + $0x438] sm:$0xff] %v2636
        %3021 = vst [vmem:[#allocation2 + $0x440] sm:$0xff] %v2637
        %3022 = vst [vmem:[#allocation2 + $0x448] sm:$0xff] %v2638
        %3023 = vst [vmem:[#allocation2 + $0x450] sm:$0xff] %v2639
        %3024 = vst [vmem:[#allocation2 + $0x458] sm:$0xff] %v2640
        %3025 = vst [vmem:[#allocation2 + $0x460] sm:$0xff] %v2641
        %3026 = vst [vmem:[#allocation2 + $0x468] sm:$0xff] %v2642
        %3027 = vst [vmem:[#allocation2 + $0x470] sm:$0xff] %v2643
        %3028 = vst [vmem:[#allocation2 + $0x478] sm:$0xff] %v2644
        %3029 = vst [vmem:[#allocation2 + $0x480] sm:$0xff] %v2645
        %3030 = vst [vmem:[#allocation2 + $0x488] sm:$0xff] %v2646
        %3031 = vst [vmem:[#allocation2 + $0x490] sm:$0xff] %v2647
        %3032 = vst [vmem:[#allocation2 + $0x498] sm:$0xff] %v2648
        %3033 = vst [vmem:[#allocation2 + $0x4a0] sm:$0xff] %v2649
        %3034 = vst [vmem:[#allocation2 + $0x4a8] sm:$0xff] %v2650
        %3035 = vst [vmem:[#allocation2 + $0x4b0] sm:$0xff] %v2651
        %3036 = vst [vmem:[#allocation2 + $0x4b8] sm:$0xff] %v2652
        %3037 = vst [vmem:[#allocation2 + $0x4c0] sm:$0xff] %v2653
        %3038 = vst [vmem:[#allocation2 + $0x4c8] sm:$0xff] %v2654
        %3039 = vst [vmem:[#allocation2 + $0x4d0] sm:$0xff] %v2655
        %3040 = vst [vmem:[#allocation2 + $0x4d8] sm:$0xff] %v2656
        %3041 = vst [vmem:[#allocation2 + $0x4e0] sm:$0xff] %v2657
        %3042 = vst [vmem:[#allocation2 + $0x4e8] sm:$0xff] %v2658
        %3043 = vst [vmem:[#allocation2 + $0x4f0] sm:$0xff] %v2659
        %3044 = vst [vmem:[#allocation2 + $0x4f8] sm:$0xff] %v2660
        %3045 = vst [vmem:[#allocation2 + $0x500] sm:$0xff] %v2661
        %3046 = vst [vmem:[#allocation2 + $0x508] sm:$0xff] %v2662
        %3047 = vst [vmem:[#allocation2 + $0x510] sm:$0xff] %v2663
        %3048 = vst [vmem:[#allocation2 + $0x518] sm:$0xff] %v2664
        %3049 = vst [vmem:[#allocation2 + $0x520] sm:$0xff] %v2665
        %3050 = vst [vmem:[#allocation2 + $0x528] sm:$0xff] %v2666
        %3051 = vst [vmem:[#allocation2 + $0x530] sm:$0xff] %v2667
        %3052 = vst [vmem:[#allocation2 + $0x538] sm:$0xff] %v2668
        %3053 = vst [vmem:[#allocation2 + $0x540] sm:$0xff] %v2669
        %3054 = vst [vmem:[#allocation2 + $0x548] sm:$0xff] %v2670
        %3055 = vst [vmem:[#allocation2 + $0x550] sm:$0xff] %v2671
        %3056 = vst [vmem:[#allocation2 + $0x558] sm:$0xff] %v2672
        %3057 = vst [vmem:[#allocation2 + $0x560] sm:$0xff] %v2673
        %3058 = vst [vmem:[#allocation2 + $0x568] sm:$0xff] %v2674
        %3059 = vst [vmem:[#allocation2 + $0x570] sm:$0xff] %v2675
        %3060 = vst [vmem:[#allocation2 + $0x578] sm:$0xff] %v2676
        %3061 = vst [vmem:[#allocation2 + $0x580] sm:$0xff] %v2677
        %3062 = vst [vmem:[#allocation2 + $0x588] sm:$0xff] %v2678
        %3063 = vst [vmem:[#allocation2 + $0x590] sm:$0xff] %v2679
        %3064 = vst [vmem:[#allocation2 + $0x598] sm:$0xff] %v2680
        %3065 = vst [vmem:[#allocation2 + $0x5a0] sm:$0xff] %v2681
        %3066 = vst [vmem:[#allocation2 + $0x5a8] sm:$0xff] %v2682
        %3067 = vst [vmem:[#allocation2 + $0x5b0] sm:$0xff] %v2683
        %3068 = vst [vmem:[#allocation2 + $0x5b8] sm:$0xff] %v2684
        %3069 = vst [vmem:[#allocation2 + $0x5c0] sm:$0xff] %v2685
        %3070 = vst [vmem:[#allocation2 + $0x5c8] sm:$0xff] %v2686
        %3071 = vst [vmem:[#allocation2 + $0x5d0] sm:$0xff] %v2687
        %3072 = vst [vmem:[#allocation2 + $0x5d8] sm:$0xff] %v2688
        %3073 = vst [vmem:[#allocation2 + $0x5e0] sm:$0xff] %v2689
        %3074 = vst [vmem:[#allocation2 + $0x5e8] sm:$0xff] %v2690
        %3075 = vst [vmem:[#allocation2 + $0x5f0] sm:$0xff] %v2691
        %3076 = vst [vmem:[#allocation2 + $0x5f8] sm:$0xff] %v2692
        %3077 = vst [vmem:[#allocation2 + $0x600] sm:$0xff] %v2693
        %3078 = vst [vmem:[#allocation2 + $0x608] sm:$0xff] %v2694
        %3079 = vst [vmem:[#allocation2 + $0x610] sm:$0xff] %v2695
        %3080 = vst [vmem:[#allocation2 + $0x618] sm:$0xff] %v2696
        %3081 = vst [vmem:[#allocation2 + $0x620] sm:$0xff] %v2697
        %3082 = vst [vmem:[#allocation2 + $0x628] sm:$0xff] %v2698
        %3083 = vst [vmem:[#allocation2 + $0x630] sm:$0xff] %v2699
        %3084 = vst [vmem:[#allocation2 + $0x638] sm:$0xff] %v2700
        %3085 = vst [vmem:[#allocation2 + $0x640] sm:$0xff] %v2701
        %3086 = vst [vmem:[#allocation2 + $0x648] sm:$0xff] %v2702
        %3087 = vst [vmem:[#allocation2 + $0x650] sm:$0xff] %v2703
        %3088 = vst [vmem:[#allocation2 + $0x658] sm:$0xff] %v2704
        %3089 = vst [vmem:[#allocation2 + $0x660] sm:$0xff] %v2705
        %3090 = vst [vmem:[#allocation2 + $0x668] sm:$0xff] %v2706
        %3091 = vst [vmem:[#allocation2 + $0x670] sm:$0xff] %v2707
        %3092 = vst [vmem:[#allocation2 + $0x678] sm:$0xff] %v2708
        %3093 = vst [vmem:[#allocation2 + $0x680] sm:$0xff] %v2709
        %3094 = vst [vmem:[#allocation2 + $0x688] sm:$0xff] %v2710
        %3095 = vst [vmem:[#allocation2 + $0x690] sm:$0xff] %v2711
        %3096 = vst [vmem:[#allocation2 + $0x698] sm:$0xff] %v2712
        %3097 = vst [vmem:[#allocation2 + $0x6a0] sm:$0xff] %v2713
        %3098 = vst [vmem:[#allocation2 + $0x6a8] sm:$0xff] %v2714
        %3099 = vst [vmem:[#allocation2 + $0x6b0] sm:$0xff] %v2715
        %3100 = vst [vmem:[#allocation2 + $0x6b8] sm:$0xff] %v2716
        %3101 = vst [vmem:[#allocation2 + $0x6c0] sm:$0xff] %v2717
        %3102 = vst [vmem:[#allocation2 + $0x6c8] sm:$0xff] %v2718
        %3103 = vst [vmem:[#allocation2 + $0x6d0] sm:$0xff] %v2719
        %3104 = vst [vmem:[#allocation2 + $0x6d8] sm:$0xff] %v2720
        %3105 = vst [vmem:[#allocation2 + $0x6e0] sm:$0xff] %v2721
        %3106 = vst [vmem:[#allocation2 + $0x6e8] sm:$0xff] %v2722
        %3107 = vst [vmem:[#allocation2 + $0x6f0] sm:$0xff] %v2723
        %3108 = vst [vmem:[#allocation2 + $0x6f8] sm:$0xff] %v2724
        %3109 = vst [vmem:[#allocation2 + $0x700] sm:$0xff] %v2725
        %3110 = vst [vmem:[#allocation2 + $0x708] sm:$0xff] %v2726
        %3111 = vst [vmem:[#allocation2 + $0x710] sm:$0xff] %v2727
        %3112 = vst [vmem:[#allocation2 + $0x718] sm:$0xff] %v2728
        %3113 = vst [vmem:[#allocation2 + $0x720] sm:$0xff] %v2729
        %3114 = vst [vmem:[#allocation2 + $0x728] sm:$0xff] %v2730
        %3115 = vst [vmem:[#allocation2 + $0x730] sm:$0xff] %v2731
        %3116 = vst [vmem:[#allocation2 + $0x738] sm:$0xff] %v2732
        %3117 = vst [vmem:[#allocation2 + $0x740] sm:$0xff] %v2733
        %3118 = vst [vmem:[#allocation2 + $0x748] sm:$0xff] %v2734
        %3119 = vst [vmem:[#allocation2 + $0x750] sm:$0xff] %v2735
        %3120 = vst [vmem:[#allocation2 + $0x758] sm:$0xff] %v2736
        %3121 = vst [vmem:[#allocation2 + $0x760] sm:$0xff] %v2737
        %3122 = vst [vmem:[#allocation2 + $0x768] sm:$0xff] %v2738
        %3123 = vst [vmem:[#allocation2 + $0x770] sm:$0xff] %v2739
        %3124 = vst [vmem:[#allocation2 + $0x778] sm:$0xff] %v2740
        %3125 = vst [vmem:[#allocation2 + $0x780] sm:$0xff] %v2741
        %3126 = vst [vmem:[#allocation2 + $0x788] sm:$0xff] %v2742
        %3127 = vst [vmem:[#allocation2 + $0x790] sm:$0xff] %v2743
        %3128 = vst [vmem:[#allocation2 + $0x798] sm:$0xff] %v2744
        %3129 = vst [vmem:[#allocation2 + $0x7a0] sm:$0xff] %v2745
        %3130 = vst [vmem:[#allocation2 + $0x7a8] sm:$0xff] %v2746
        %3131 = vst [vmem:[#allocation2 + $0x7b0] sm:$0xff] %v2747
        %3132 = vst [vmem:[#allocation2 + $0x7b8] sm:$0xff] %v2748
        %3133 = vst [vmem:[#allocation2 + $0x7c0] sm:$0xff] %v2749
        %3134 = vst [vmem:[#allocation2 + $0x7c8] sm:$0xff] %v2750
        %3135 = vst [vmem:[#allocation2 + $0x7d0] sm:$0xff] %v2751
        %3136 = vst [vmem:[#allocation2 + $0x7d8] sm:$0xff] %v2752
        %3137 = vst [vmem:[#allocation2 + $0x7e0] sm:$0xff] %v2753
        %3138 = vst [vmem:[#allocation2 + $0x7e8] sm:$0xff] %v2754
        %3139 = vst [vmem:[#allocation2 + $0x7f0] sm:$0xff] %v2755
        %3140 = vst [vmem:[#allocation2 + $0x7f8] sm:$0xff] %v2756
        %3141 = vst [vmem:[#allocation2 + $0x800] sm:$0xff] %v2757
        %3142 = vst [vmem:[#allocation2 + $0x808] sm:$0xff] %v2758
        %3143 = vst [vmem:[#allocation2 + $0x810] sm:$0xff] %v2759
        %3144 = vst [vmem:[#allocation2 + $0x818] sm:$0xff] %v2760
        %3145 = vst [vmem:[#allocation2 + $0x820] sm:$0xff] %v2761
        %3146 = vst [vmem:[#allocation2 + $0x828] sm:$0xff] %v2762
        %3147 = vst [vmem:[#allocation2 + $0x830] sm:$0xff] %v2763
        %3148 = vst [vmem:[#allocation2 + $0x838] sm:$0xff] %v2764
        %3149 = vst [vmem:[#allocation2 + $0x840] sm:$0xff] %v2765
        %3150 = vst [vmem:[#allocation2 + $0x848] sm:$0xff] %v2766
        %3151 = vst [vmem:[#allocation2 + $0x850] sm:$0xff] %v2767
        %3152 = vst [vmem:[#allocation2 + $0x858] sm:$0xff] %v2768
        %3153 = vst [vmem:[#allocation2 + $0x860] sm:$0xff] %v2769
        %3154 = vst [vmem:[#allocation2 + $0x868] sm:$0xff] %v2770
        %3155 = vst [vmem:[#allocation2 + $0x870] sm:$0xff] %v2771
        %3156 = vst [vmem:[#allocation2 + $0x878] sm:$0xff] %v2772
        %3157 = vst [vmem:[#allocation2 + $0x880] sm:$0xff] %v2773
        %3158 = vst [vmem:[#allocation2 + $0x888] sm:$0xff] %v2774
        %3159 = vst [vmem:[#allocation2 + $0x890] sm:$0xff] %v2775
        %3160 = vst [vmem:[#allocation2 + $0x898] sm:$0xff] %v2776
        %3161 = vst [vmem:[#allocation2 + $0x8a0] sm:$0xff] %v2777
        %3162 = vst [vmem:[#allocation2 + $0x8a8] sm:$0xff] %v2778
        %3163 = vst [vmem:[#allocation2 + $0x8b0] sm:$0xff] %v2779
        %3164 = vst [vmem:[#allocation2 + $0x8b8] sm:$0xff] %v2780
        %3165 = vst [vmem:[#allocation2 + $0x8c0] sm:$0xff] %v2781
        %3166 = vst [vmem:[#allocation2 + $0x8c8] sm:$0xff] %v2782
        %3167 = vst [vmem:[#allocation2 + $0x8d0] sm:$0xff] %v2783
        %3168 = vst [vmem:[#allocation2 + $0x8d8] sm:$0xff] %v2784
        %3169 = vst [vmem:[#allocation2 + $0x8e0] sm:$0xff] %v2785
        %3170 = vst [vmem:[#allocation2 + $0x8e8] sm:$0xff] %v2786
        %3171 = vst [vmem:[#allocation2 + $0x8f0] sm:$0xff] %v2787
        %3172 = vst [vmem:[#allocation2 + $0x8f8] sm:$0xff] %v2788
        %3173 = vst [vmem:[#allocation2 + $0x900] sm:$0xff] %v2789
        %3174 = vst [vmem:[#allocation2 + $0x908] sm:$0xff] %v2790
        %3175 = vst [vmem:[#allocation2 + $0x910] sm:$0xff] %v2791
        %3176 = vst [vmem:[#allocation2 + $0x918] sm:$0xff] %v2792
        %3177 = vst [vmem:[#allocation2 + $0x920] sm:$0xff] %v2793
        %3178 = vst [vmem:[#allocation2 + $0x928] sm:$0xff] %v2794
        %3179 = vst [vmem:[#allocation2 + $0x930] sm:$0xff] %v2795
        %3180 = vst [vmem:[#allocation2 + $0x938] sm:$0xff] %v2796
        %3181 = vst [vmem:[#allocation2 + $0x940] sm:$0xff] %v2797
        %3182 = vst [vmem:[#allocation2 + $0x948] sm:$0xff] %v2798
        %3183 = vst [vmem:[#allocation2 + $0x950] sm:$0xff] %v2799
        %3184 = vst [vmem:[#allocation2 + $0x958] sm:$0xff] %v2800
        %3185 = vst [vmem:[#allocation2 + $0x960] sm:$0xff] %v2801
        %3186 = vst [vmem:[#allocation2 + $0x968] sm:$0xff] %v2802
        %3187 = vst [vmem:[#allocation2 + $0x970] sm:$0xff] %v2803
        %3188 = vst [vmem:[#allocation2 + $0x978] sm:$0xff] %v2804
        %3189 = vst [vmem:[#allocation2 + $0x980] sm:$0xff] %v2805
        %3190 = vst [vmem:[#allocation2 + $0x988] sm:$0xff] %v2806
        %3191 = vst [vmem:[#allocation2 + $0x990] sm:$0xff] %v2807
        %3192 = vst [vmem:[#allocation2 + $0x998] sm:$0xff] %v2808
        %3193 = vst [vmem:[#allocation2 + $0x9a0] sm:$0xff] %v2809
        %3194 = vst [vmem:[#allocation2 + $0x9a8] sm:$0xff] %v2810
        %3195 = vst [vmem:[#allocation2 + $0x9b0] sm:$0xff] %v2811
        %3196 = vst [vmem:[#allocation2 + $0x9b8] sm:$0xff] %v2812
        %3197 = vst [vmem:[#allocation2 + $0x9c0] sm:$0xff] %v2813
        %3198 = vst [vmem:[#allocation2 + $0x9c8] sm:$0xff] %v2814
        %3199 = vst [vmem:[#allocation2 + $0x9d0] sm:$0xff] %v2815
        %3200 = vst [vmem:[#allocation2 + $0x9d8] sm:$0xff] %v2816
        %3201 = vst [vmem:[#allocation2 + $0x9e0] sm:$0xff] %v2817
        %3202 = vst [vmem:[#allocation2 + $0x9e8] sm:$0xff] %v2818
        %3203 = vst [vmem:[#allocation2 + $0x9f0] sm:$0xff] %v2819
        %3204 = vst [vmem:[#allocation2 + $0x9f8] sm:$0xff] %v2820
        %3205 = vst [vmem:[#allocation2 + $0xa00] sm:$0xff] %v2821
        %3206 = vst [vmem:[#allocation2 + $0xa08] sm:$0xff] %v2822
        %3207 = vst [vmem:[#allocation2 + $0xa10] sm:$0xff] %v2823
        %3208 = vst [vmem:[#allocation2 + $0xa18] sm:$0xff] %v2824
        %3209 = vst [vmem:[#allocation2 + $0xa20] sm:$0xff] %v2825
        %3210 = vst [vmem:[#allocation2 + $0xa28] sm:$0xff] %v2826
        %3211 = vst [vmem:[#allocation2 + $0xa30] sm:$0xff] %v2827
        %3212 = vst [vmem:[#allocation2 + $0xa38] sm:$0xff] %v2828
        %3213 = vst [vmem:[#allocation2 + $0xa40] sm:$0xff] %v2829
        %3214 = vst [vmem:[#allocation2 + $0xa48] sm:$0xff] %v2830
        %3215 = vst [vmem:[#allocation2 + $0xa50] sm:$0xff] %v2831
        %3216 = vst [vmem:[#allocation2 + $0xa58] sm:$0xff] %v2832
        %3217 = vst [vmem:[#allocation2 + $0xa60] sm:$0xff] %v2833
        %3218 = vst [vmem:[#allocation2 + $0xa68] sm:$0xff] %v2834
        %3219 = vst [vmem:[#allocation2 + $0xa70] sm:$0xff] %v2835
        %3220 = vst [vmem:[#allocation2 + $0xa78] sm:$0xff] %v2836
        %3221 = vst [vmem:[#allocation2 + $0xa80] sm:$0xff] %v2837
        %3222 = vst [vmem:[#allocation2 + $0xa88] sm:$0xff] %v2838
        %3223 = vst [vmem:[#allocation2 + $0xa90] sm:$0xff] %v2839
        %3224 = vst [vmem:[#allocation2 + $0xa98] sm:$0xff] %v2840
        %3225 = vst [vmem:[#allocation2 + $0xaa0] sm:$0xff] %v2841
        %3226 = vst [vmem:[#allocation2 + $0xaa8] sm:$0xff] %v2842
        %3227 = vst [vmem:[#allocation2 + $0xab0] sm:$0xff] %v2843
        %3228 = vst [vmem:[#allocation2 + $0xab8] sm:$0xff] %v2844
        %3229 = vst [vmem:[#allocation2 + $0xac0] sm:$0xff] %v2845
        %3230 = vst [vmem:[#allocation2 + $0xac8] sm:$0xff] %v2846
        %3231 = vst [vmem:[#allocation2 + $0xad0] sm:$0xff] %v2847
        %3232 = vst [vmem:[#allocation2 + $0xad8] sm:$0xff] %v2848
        %3233 = vst [vmem:[#allocation2 + $0xae0] sm:$0xff] %v2849
        %3234 = vst [vmem:[#allocation2 + $0xae8] sm:$0xff] %v2850
        %3235 = vst [vmem:[#allocation2 + $0xaf0] sm:$0xff] %v2851
        %3236 = vst [vmem:[#allocation2 + $0xaf8] sm:$0xff] %v2852
        %3237 = vst [vmem:[#allocation2 + $0xb00] sm:$0xff] %v2853
        %3238 = vst [vmem:[#allocation2 + $0xb08] sm:$0xff] %v2854
        %3239 = vst [vmem:[#allocation2 + $0xb10] sm:$0xff] %v2855
        %3240 = vst [vmem:[#allocation2 + $0xb18] sm:$0xff] %v2856
        %3241 = vst [vmem:[#allocation2 + $0xb20] sm:$0xff] %v2857
        %3242 = vst [vmem:[#allocation2 + $0xb28] sm:$0xff] %v2858
        %3243 = vst [vmem:[#allocation2 + $0xb30] sm:$0xff] %v2859
        %3244 = vst [vmem:[#allocation2 + $0xb38] sm:$0xff] %v2860
        %3245 = vst [vmem:[#allocation2 + $0xb40] sm:$0xff] %v2861
        %3246 = vst [vmem:[#allocation2 + $0xb48] sm:$0xff] %v2862
        %3247 = vst [vmem:[#allocation2 + $0xb50] sm:$0xff] %v2863
        %3248 = vst [vmem:[#allocation2 + $0xb58] sm:$0xff] %v2864
        %3249 = vst [vmem:[#allocation2 + $0xb60] sm:$0xff] %v2865
        %3250 = vst [vmem:[#allocation2 + $0xb68] sm:$0xff] %v2866
        %3251 = vst [vmem:[#allocation2 + $0xb70] sm:$0xff] %v2867
        %3252 = vst [vmem:[#allocation2 + $0xb78] sm:$0xff] %v2868
        %3253 = vst [vmem:[#allocation2 + $0xb80] sm:$0xff] %v2869
        %3254 = vst [vmem:[#allocation2 + $0xb88] sm:$0xff] %v2870
        %3255 = vst [vmem:[#allocation2 + $0xb90] sm:$0xff] %v2871
        %3256 = vst [vmem:[#allocation2 + $0xb98] sm:$0xff] %v2872
        %3257 = vst [vmem:[#allocation2 + $0xba0] sm:$0xff] %v2873
        %3258 = vst [vmem:[#allocation2 + $0xba8] sm:$0xff] %v2874
        %3259 = vst [vmem:[#allocation2 + $0xbb0] sm:$0xff] %v2875
        %3260 = vst [vmem:[#allocation2 + $0xbb8] sm:$0xff] %v2876
        %3261 = vst [vmem:[#allocation2 + $0xbc0] sm:$0xff] %v2877
        %3262 = vst [vmem:[#allocation2 + $0xbc8] sm:$0xff] %v2878
        %3263 = vst [vmem:[#allocation2 + $0xbd0] sm:$0xff] %v2879
        %3264 = vst [vmem:[#allocation2 + $0xbd8] sm:$0xff] %v2880
        %3265 = vst [vmem:[#allocation2 + $0xbe0] sm:$0xff] %v2881
        %3266 = vst [vmem:[#allocation2 + $0xbe8] sm:$0xff] %v2882
        %3267 = vst [vmem:[#allocation2 + $0xbf0] sm:$0xff] %v2883
        %3268 = vst [vmem:[#allocation2 + $0xbf8] sm:$0xff] %v2884
        %p3269 = scmp.eq.s32.totalorder %s30, 1
        // Predicated region
        $region49: #{tpu_custom_call.1} parent=31 // pred_check
          %p3270 = pneg %p3269
        $region50: #{tpu_custom_call.1} parent=31 // pred_check_branch
          %3272 = sbr.rel (%p3270) target = $region52
        $region51: #{tpu_custom_call.1} parent=31 // pred_region
          %v3273 = vld [vmem:[#allocation2] sm:$0xff]
          %v3274 = vld [vmem:[#allocation2 + $0x8] sm:$0xff]
          %v3275 = vld [vmem:[#allocation2 + $0x10] sm:$0xff]
          %v3276 = vld [vmem:[#allocation2 + $0x18] sm:$0xff]
          %v3277 = vld [vmem:[#allocation2 + $0x20] sm:$0xff]
          %v3278 = vld [vmem:[#allocation2 + $0x28] sm:$0xff]
          %v3279 = vld [vmem:[#allocation2 + $0x30] sm:$0xff]
          %v3280 = vld [vmem:[#allocation2 + $0x38] sm:$0xff]
          %v3281 = vld [vmem:[#allocation2 + $0x40] sm:$0xff]
          %v3282 = vld [vmem:[#allocation2 + $0x48] sm:$0xff]
          %v3283 = vld [vmem:[#allocation2 + $0x50] sm:$0xff]
          %v3284 = vld [vmem:[#allocation2 + $0x58] sm:$0xff]
          %v3285 = vld [vmem:[#allocation2 + $0x60] sm:$0xff]
          %v3286 = vld [vmem:[#allocation2 + $0x68] sm:$0xff]
          %v3287 = vld [vmem:[#allocation2 + $0x70] sm:$0xff]
          %v3288 = vld [vmem:[#allocation2 + $0x78] sm:$0xff]
          %v3289 = vld [vmem:[#allocation2 + $0x80] sm:$0xff]
          %v3290 = vld [vmem:[#allocation2 + $0x88] sm:$0xff]
          %v3291 = vld [vmem:[#allocation2 + $0x90] sm:$0xff]
          %v3292 = vld [vmem:[#allocation2 + $0x98] sm:$0xff]
          %v3293 = vld [vmem:[#allocation2 + $0xa0] sm:$0xff]
          %v3294 = vld [vmem:[#allocation2 + $0xa8] sm:$0xff]
          %v3295 = vld [vmem:[#allocation2 + $0xb0] sm:$0xff]
          %v3296 = vld [vmem:[#allocation2 + $0xb8] sm:$0xff]
          %v3297 = vld [vmem:[#allocation2 + $0xc0] sm:$0xff]
          %v3298 = vld [vmem:[#allocation2 + $0xc8] sm:$0xff]
          %v3299 = vld [vmem:[#allocation2 + $0xd0] sm:$0xff]
          %v3300 = vld [vmem:[#allocation2 + $0xd8] sm:$0xff]
          %v3301 = vld [vmem:[#allocation2 + $0xe0] sm:$0xff]
          %v3302 = vld [vmem:[#allocation2 + $0xe8] sm:$0xff]
          %v3303 = vld [vmem:[#allocation2 + $0xf0] sm:$0xff]
          %v3304 = vld [vmem:[#allocation2 + $0xf8] sm:$0xff]
          %v3305 = vld [vmem:[#allocation2 + $0x100] sm:$0xff]
          %v3306 = vld [vmem:[#allocation2 + $0x108] sm:$0xff]
          %v3307 = vld [vmem:[#allocation2 + $0x110] sm:$0xff]
          %v3308 = vld [vmem:[#allocation2 + $0x118] sm:$0xff]
          %v3309 = vld [vmem:[#allocation2 + $0x120] sm:$0xff]
          %v3310 = vld [vmem:[#allocation2 + $0x128] sm:$0xff]
          %v3311 = vld [vmem:[#allocation2 + $0x130] sm:$0xff]
          %v3312 = vld [vmem:[#allocation2 + $0x138] sm:$0xff]
          %v3313 = vld [vmem:[#allocation2 + $0x140] sm:$0xff]
          %v3314 = vld [vmem:[#allocation2 + $0x148] sm:$0xff]
          %v3315 = vld [vmem:[#allocation2 + $0x150] sm:$0xff]
          %v3316 = vld [vmem:[#allocation2 + $0x158] sm:$0xff]
          %v3317 = vld [vmem:[#allocation2 + $0x160] sm:$0xff]
          %v3318 = vld [vmem:[#allocation2 + $0x168] sm:$0xff]
          %v3319 = vld [vmem:[#allocation2 + $0x170] sm:$0xff]
          %v3320 = vld [vmem:[#allocation2 + $0x178] sm:$0xff]
          %v3321 = vld [vmem:[#allocation2 + $0x180] sm:$0xff]
          %v3322 = vld [vmem:[#allocation2 + $0x188] sm:$0xff]
          %v3323 = vld [vmem:[#allocation2 + $0x190] sm:$0xff]
          %v3324 = vld [vmem:[#allocation2 + $0x198] sm:$0xff]
          %v3325 = vld [vmem:[#allocation2 + $0x1a0] sm:$0xff]
          %v3326 = vld [vmem:[#allocation2 + $0x1a8] sm:$0xff]
          %v3327 = vld [vmem:[#allocation2 + $0x1b0] sm:$0xff]
          %v3328 = vld [vmem:[#allocation2 + $0x1b8] sm:$0xff]
          %v3329 = vld [vmem:[#allocation2 + $0x1c0] sm:$0xff]
          %v3330 = vld [vmem:[#allocation2 + $0x1c8] sm:$0xff]
          %v3331 = vld [vmem:[#allocation2 + $0x1d0] sm:$0xff]
          %v3332 = vld [vmem:[#allocation2 + $0x1d8] sm:$0xff]
          %v3333 = vld [vmem:[#allocation2 + $0x1e0] sm:$0xff]
          %v3334 = vld [vmem:[#allocation2 + $0x1e8] sm:$0xff]
          %v3335 = vld [vmem:[#allocation2 + $0x1f0] sm:$0xff]
          %v3336 = vld [vmem:[#allocation2 + $0x1f8] sm:$0xff]
          %v3337 = vld [vmem:[#allocation2 + $0x200] sm:$0xff]
          %v3338 = vld [vmem:[#allocation2 + $0x208] sm:$0xff]
          %v3339 = vld [vmem:[#allocation2 + $0x210] sm:$0xff]
          %v3340 = vld [vmem:[#allocation2 + $0x218] sm:$0xff]
          %v3341 = vld [vmem:[#allocation2 + $0x220] sm:$0xff]
          %v3342 = vld [vmem:[#allocation2 + $0x228] sm:$0xff]
          %v3343 = vld [vmem:[#allocation2 + $0x230] sm:$0xff]
          %v3344 = vld [vmem:[#allocation2 + $0x238] sm:$0xff]
          %v3345 = vld [vmem:[#allocation2 + $0x240] sm:$0xff]
          %v3346 = vld [vmem:[#allocation2 + $0x248] sm:$0xff]
          %v3347 = vld [vmem:[#allocation2 + $0x250] sm:$0xff]
          %v3348 = vld [vmem:[#allocation2 + $0x258] sm:$0xff]
          %v3349 = vld [vmem:[#allocation2 + $0x260] sm:$0xff]
          %v3350 = vld [vmem:[#allocation2 + $0x268] sm:$0xff]
          %v3351 = vld [vmem:[#allocation2 + $0x270] sm:$0xff]
          %v3352 = vld [vmem:[#allocation2 + $0x278] sm:$0xff]
          %v3353 = vld [vmem:[#allocation2 + $0x280] sm:$0xff]
          %v3354 = vld [vmem:[#allocation2 + $0x288] sm:$0xff]
          %v3355 = vld [vmem:[#allocation2 + $0x290] sm:$0xff]
          %v3356 = vld [vmem:[#allocation2 + $0x298] sm:$0xff]
          %v3357 = vld [vmem:[#allocation2 + $0x2a0] sm:$0xff]
          %v3358 = vld [vmem:[#allocation2 + $0x2a8] sm:$0xff]
          %v3359 = vld [vmem:[#allocation2 + $0x2b0] sm:$0xff]
          %v3360 = vld [vmem:[#allocation2 + $0x2b8] sm:$0xff]
          %v3361 = vld [vmem:[#allocation2 + $0x2c0] sm:$0xff]
          %v3362 = vld [vmem:[#allocation2 + $0x2c8] sm:$0xff]
          %v3363 = vld [vmem:[#allocation2 + $0x2d0] sm:$0xff]
          %v3364 = vld [vmem:[#allocation2 + $0x2d8] sm:$0xff]
          %v3365 = vld [vmem:[#allocation2 + $0x2e0] sm:$0xff]
          %v3366 = vld [vmem:[#allocation2 + $0x2e8] sm:$0xff]
          %v3367 = vld [vmem:[#allocation2 + $0x2f0] sm:$0xff]
          %v3368 = vld [vmem:[#allocation2 + $0x2f8] sm:$0xff]
          %v3369 = vld [vmem:[#allocation2 + $0x300] sm:$0xff]
          %v3370 = vld [vmem:[#allocation2 + $0x308] sm:$0xff]
          %v3371 = vld [vmem:[#allocation2 + $0x310] sm:$0xff]
          %v3372 = vld [vmem:[#allocation2 + $0x318] sm:$0xff]
          %v3373 = vld [vmem:[#allocation2 + $0x320] sm:$0xff]
          %v3374 = vld [vmem:[#allocation2 + $0x328] sm:$0xff]
          %v3375 = vld [vmem:[#allocation2 + $0x330] sm:$0xff]
          %v3376 = vld [vmem:[#allocation2 + $0x338] sm:$0xff]
          %v3377 = vld [vmem:[#allocation2 + $0x340] sm:$0xff]
          %v3378 = vld [vmem:[#allocation2 + $0x348] sm:$0xff]
          %v3379 = vld [vmem:[#allocation2 + $0x350] sm:$0xff]
          %v3380 = vld [vmem:[#allocation2 + $0x358] sm:$0xff]
          %v3381 = vld [vmem:[#allocation2 + $0x360] sm:$0xff]
          %v3382 = vld [vmem:[#allocation2 + $0x368] sm:$0xff]
          %v3383 = vld [vmem:[#allocation2 + $0x370] sm:$0xff]
          %v3384 = vld [vmem:[#allocation2 + $0x378] sm:$0xff]
          %v3385 = vld [vmem:[#allocation2 + $0x380] sm:$0xff]
          %v3386 = vld [vmem:[#allocation2 + $0x388] sm:$0xff]
          %v3387 = vld [vmem:[#allocation2 + $0x390] sm:$0xff]
          %v3388 = vld [vmem:[#allocation2 + $0x398] sm:$0xff]
          %v3389 = vld [vmem:[#allocation2 + $0x3a0] sm:$0xff]
          %v3390 = vld [vmem:[#allocation2 + $0x3a8] sm:$0xff]
          %v3391 = vld [vmem:[#allocation2 + $0x3b0] sm:$0xff]
          %v3392 = vld [vmem:[#allocation2 + $0x3b8] sm:$0xff]
          %v3393 = vld [vmem:[#allocation2 + $0x3c0] sm:$0xff]
          %v3394 = vld [vmem:[#allocation2 + $0x3c8] sm:$0xff]
          %v3395 = vld [vmem:[#allocation2 + $0x3d0] sm:$0xff]
          %v3396 = vld [vmem:[#allocation2 + $0x3d8] sm:$0xff]
          %v3397 = vld [vmem:[#allocation2 + $0x3e0] sm:$0xff]
          %v3398 = vld [vmem:[#allocation2 + $0x3e8] sm:$0xff]
          %v3399 = vld [vmem:[#allocation2 + $0x3f0] sm:$0xff]
          %v3400 = vld [vmem:[#allocation2 + $0x3f8] sm:$0xff]
          %v3401 = vld [vmem:[#allocation2 + $0x400] sm:$0xff]
          %v3402 = vld [vmem:[#allocation2 + $0x408] sm:$0xff]
          %v3403 = vld [vmem:[#allocation2 + $0x410] sm:$0xff]
          %v3404 = vld [vmem:[#allocation2 + $0x418] sm:$0xff]
          %v3405 = vld [vmem:[#allocation2 + $0x420] sm:$0xff]
          %v3406 = vld [vmem:[#allocation2 + $0x428] sm:$0xff]
          %v3407 = vld [vmem:[#allocation2 + $0x430] sm:$0xff]
          %v3408 = vld [vmem:[#allocation2 + $0x438] sm:$0xff]
          %v3409 = vld [vmem:[#allocation2 + $0x440] sm:$0xff]
          %v3410 = vld [vmem:[#allocation2 + $0x448] sm:$0xff]
          %v3411 = vld [vmem:[#allocation2 + $0x450] sm:$0xff]
          %v3412 = vld [vmem:[#allocation2 + $0x458] sm:$0xff]
          %v3413 = vld [vmem:[#allocation2 + $0x460] sm:$0xff]
          %v3414 = vld [vmem:[#allocation2 + $0x468] sm:$0xff]
          %v3415 = vld [vmem:[#allocation2 + $0x470] sm:$0xff]
          %v3416 = vld [vmem:[#allocation2 + $0x478] sm:$0xff]
          %v3417 = vld [vmem:[#allocation2 + $0x480] sm:$0xff]
          %v3418 = vld [vmem:[#allocation2 + $0x488] sm:$0xff]
          %v3419 = vld [vmem:[#allocation2 + $0x490] sm:$0xff]
          %v3420 = vld [vmem:[#allocation2 + $0x498] sm:$0xff]
          %v3421 = vld [vmem:[#allocation2 + $0x4a0] sm:$0xff]
          %v3422 = vld [vmem:[#allocation2 + $0x4a8] sm:$0xff]
          %v3423 = vld [vmem:[#allocation2 + $0x4b0] sm:$0xff]
          %v3424 = vld [vmem:[#allocation2 + $0x4b8] sm:$0xff]
          %v3425 = vld [vmem:[#allocation2 + $0x4c0] sm:$0xff]
          %v3426 = vld [vmem:[#allocation2 + $0x4c8] sm:$0xff]
          %v3427 = vld [vmem:[#allocation2 + $0x4d0] sm:$0xff]
          %v3428 = vld [vmem:[#allocation2 + $0x4d8] sm:$0xff]
          %v3429 = vld [vmem:[#allocation2 + $0x4e0] sm:$0xff]
          %v3430 = vld [vmem:[#allocation2 + $0x4e8] sm:$0xff]
          %v3431 = vld [vmem:[#allocation2 + $0x4f0] sm:$0xff]
          %v3432 = vld [vmem:[#allocation2 + $0x4f8] sm:$0xff]
          %v3433 = vld [vmem:[#allocation2 + $0x500] sm:$0xff]
          %v3434 = vld [vmem:[#allocation2 + $0x508] sm:$0xff]
          %v3435 = vld [vmem:[#allocation2 + $0x510] sm:$0xff]
          %v3436 = vld [vmem:[#allocation2 + $0x518] sm:$0xff]
          %v3437 = vld [vmem:[#allocation2 + $0x520] sm:$0xff]
          %v3438 = vld [vmem:[#allocation2 + $0x528] sm:$0xff]
          %v3439 = vld [vmem:[#allocation2 + $0x530] sm:$0xff]
          %v3440 = vld [vmem:[#allocation2 + $0x538] sm:$0xff]
          %v3441 = vld [vmem:[#allocation2 + $0x540] sm:$0xff]
          %v3442 = vld [vmem:[#allocation2 + $0x548] sm:$0xff]
          %v3443 = vld [vmem:[#allocation2 + $0x550] sm:$0xff]
          %v3444 = vld [vmem:[#allocation2 + $0x558] sm:$0xff]
          %v3445 = vld [vmem:[#allocation2 + $0x560] sm:$0xff]
          %v3446 = vld [vmem:[#allocation2 + $0x568] sm:$0xff]
          %v3447 = vld [vmem:[#allocation2 + $0x570] sm:$0xff]
          %v3448 = vld [vmem:[#allocation2 + $0x578] sm:$0xff]
          %v3449 = vld [vmem:[#allocation2 + $0x580] sm:$0xff]
          %v3450 = vld [vmem:[#allocation2 + $0x588] sm:$0xff]
          %v3451 = vld [vmem:[#allocation2 + $0x590] sm:$0xff]
          %v3452 = vld [vmem:[#allocation2 + $0x598] sm:$0xff]
          %v3453 = vld [vmem:[#allocation2 + $0x5a0] sm:$0xff]
          %v3454 = vld [vmem:[#allocation2 + $0x5a8] sm:$0xff]
          %v3455 = vld [vmem:[#allocation2 + $0x5b0] sm:$0xff]
          %v3456 = vld [vmem:[#allocation2 + $0x5b8] sm:$0xff]
          %v3457 = vld [vmem:[#allocation2 + $0x5c0] sm:$0xff]
          %v3458 = vld [vmem:[#allocation2 + $0x5c8] sm:$0xff]
          %v3459 = vld [vmem:[#allocation2 + $0x5d0] sm:$0xff]
          %v3460 = vld [vmem:[#allocation2 + $0x5d8] sm:$0xff]
          %v3461 = vld [vmem:[#allocation2 + $0x5e0] sm:$0xff]
          %v3462 = vld [vmem:[#allocation2 + $0x5e8] sm:$0xff]
          %v3463 = vld [vmem:[#allocation2 + $0x5f0] sm:$0xff]
          %v3464 = vld [vmem:[#allocation2 + $0x5f8] sm:$0xff]
          %v3465 = vld [vmem:[#allocation2 + $0x600] sm:$0xff]
          %v3466 = vld [vmem:[#allocation2 + $0x608] sm:$0xff]
          %v3467 = vld [vmem:[#allocation2 + $0x610] sm:$0xff]
          %v3468 = vld [vmem:[#allocation2 + $0x618] sm:$0xff]
          %v3469 = vld [vmem:[#allocation2 + $0x620] sm:$0xff]
          %v3470 = vld [vmem:[#allocation2 + $0x628] sm:$0xff]
          %v3471 = vld [vmem:[#allocation2 + $0x630] sm:$0xff]
          %v3472 = vld [vmem:[#allocation2 + $0x638] sm:$0xff]
          %v3473 = vld [vmem:[#allocation2 + $0x640] sm:$0xff]
          %v3474 = vld [vmem:[#allocation2 + $0x648] sm:$0xff]
          %v3475 = vld [vmem:[#allocation2 + $0x650] sm:$0xff]
          %v3476 = vld [vmem:[#allocation2 + $0x658] sm:$0xff]
          %v3477 = vld [vmem:[#allocation2 + $0x660] sm:$0xff]
          %v3478 = vld [vmem:[#allocation2 + $0x668] sm:$0xff]
          %v3479 = vld [vmem:[#allocation2 + $0x670] sm:$0xff]
          %v3480 = vld [vmem:[#allocation2 + $0x678] sm:$0xff]
          %v3481 = vld [vmem:[#allocation2 + $0x680] sm:$0xff]
          %v3482 = vld [vmem:[#allocation2 + $0x688] sm:$0xff]
          %v3483 = vld [vmem:[#allocation2 + $0x690] sm:$0xff]
          %v3484 = vld [vmem:[#allocation2 + $0x698] sm:$0xff]
          %v3485 = vld [vmem:[#allocation2 + $0x6a0] sm:$0xff]
          %v3486 = vld [vmem:[#allocation2 + $0x6a8] sm:$0xff]
          %v3487 = vld [vmem:[#allocation2 + $0x6b0] sm:$0xff]
          %v3488 = vld [vmem:[#allocation2 + $0x6b8] sm:$0xff]
          %v3489 = vld [vmem:[#allocation2 + $0x6c0] sm:$0xff]
          %v3490 = vld [vmem:[#allocation2 + $0x6c8] sm:$0xff]
          %v3491 = vld [vmem:[#allocation2 + $0x6d0] sm:$0xff]
          %v3492 = vld [vmem:[#allocation2 + $0x6d8] sm:$0xff]
          %v3493 = vld [vmem:[#allocation2 + $0x6e0] sm:$0xff]
          %v3494 = vld [vmem:[#allocation2 + $0x6e8] sm:$0xff]
          %v3495 = vld [vmem:[#allocation2 + $0x6f0] sm:$0xff]
          %v3496 = vld [vmem:[#allocation2 + $0x6f8] sm:$0xff]
          %v3497 = vld [vmem:[#allocation2 + $0x700] sm:$0xff]
          %v3498 = vld [vmem:[#allocation2 + $0x708] sm:$0xff]
          %v3499 = vld [vmem:[#allocation2 + $0x710] sm:$0xff]
          %v3500 = vld [vmem:[#allocation2 + $0x718] sm:$0xff]
          %v3501 = vld [vmem:[#allocation2 + $0x720] sm:$0xff]
          %v3502 = vld [vmem:[#allocation2 + $0x728] sm:$0xff]
          %v3503 = vld [vmem:[#allocation2 + $0x730] sm:$0xff]
          %v3504 = vld [vmem:[#allocation2 + $0x738] sm:$0xff]
          %v3505 = vld [vmem:[#allocation2 + $0x740] sm:$0xff]
          %v3506 = vld [vmem:[#allocation2 + $0x748] sm:$0xff]
          %v3507 = vld [vmem:[#allocation2 + $0x750] sm:$0xff]
          %v3508 = vld [vmem:[#allocation2 + $0x758] sm:$0xff]
          %v3509 = vld [vmem:[#allocation2 + $0x760] sm:$0xff]
          %v3510 = vld [vmem:[#allocation2 + $0x768] sm:$0xff]
          %v3511 = vld [vmem:[#allocation2 + $0x770] sm:$0xff]
          %v3512 = vld [vmem:[#allocation2 + $0x778] sm:$0xff]
          %v3513 = vld [vmem:[#allocation2 + $0x780] sm:$0xff]
          %v3514 = vld [vmem:[#allocation2 + $0x788] sm:$0xff]
          %v3515 = vld [vmem:[#allocation2 + $0x790] sm:$0xff]
          %v3516 = vld [vmem:[#allocation2 + $0x798] sm:$0xff]
          %v3517 = vld [vmem:[#allocation2 + $0x7a0] sm:$0xff]
          %v3518 = vld [vmem:[#allocation2 + $0x7a8] sm:$0xff]
          %v3519 = vld [vmem:[#allocation2 + $0x7b0] sm:$0xff]
          %v3520 = vld [vmem:[#allocation2 + $0x7b8] sm:$0xff]
          %v3521 = vld [vmem:[#allocation2 + $0x7c0] sm:$0xff]
          %v3522 = vld [vmem:[#allocation2 + $0x7c8] sm:$0xff]
          %v3523 = vld [vmem:[#allocation2 + $0x7d0] sm:$0xff]
          %v3524 = vld [vmem:[#allocation2 + $0x7d8] sm:$0xff]
          %v3525 = vld [vmem:[#allocation2 + $0x7e0] sm:$0xff]
          %v3526 = vld [vmem:[#allocation2 + $0x7e8] sm:$0xff]
          %v3527 = vld [vmem:[#allocation2 + $0x7f0] sm:$0xff]
          %v3528 = vld [vmem:[#allocation2 + $0x7f8] sm:$0xff]
          %v3529 = vld [vmem:[#allocation2 + $0x800] sm:$0xff]
          %v3530 = vld [vmem:[#allocation2 + $0x808] sm:$0xff]
          %v3531 = vld [vmem:[#allocation2 + $0x810] sm:$0xff]
          %v3532 = vld [vmem:[#allocation2 + $0x818] sm:$0xff]
          %v3533 = vld [vmem:[#allocation2 + $0x820] sm:$0xff]
          %v3534 = vld [vmem:[#allocation2 + $0x828] sm:$0xff]
          %v3535 = vld [vmem:[#allocation2 + $0x830] sm:$0xff]
          %v3536 = vld [vmem:[#allocation2 + $0x838] sm:$0xff]
          %v3537 = vld [vmem:[#allocation2 + $0x840] sm:$0xff]
          %v3538 = vld [vmem:[#allocation2 + $0x848] sm:$0xff]
          %v3539 = vld [vmem:[#allocation2 + $0x850] sm:$0xff]
          %v3540 = vld [vmem:[#allocation2 + $0x858] sm:$0xff]
          %v3541 = vld [vmem:[#allocation2 + $0x860] sm:$0xff]
          %v3542 = vld [vmem:[#allocation2 + $0x868] sm:$0xff]
          %v3543 = vld [vmem:[#allocation2 + $0x870] sm:$0xff]
          %v3544 = vld [vmem:[#allocation2 + $0x878] sm:$0xff]
          %v3545 = vld [vmem:[#allocation2 + $0x880] sm:$0xff]
          %v3546 = vld [vmem:[#allocation2 + $0x888] sm:$0xff]
          %v3547 = vld [vmem:[#allocation2 + $0x890] sm:$0xff]
          %v3548 = vld [vmem:[#allocation2 + $0x898] sm:$0xff]
          %v3549 = vld [vmem:[#allocation2 + $0x8a0] sm:$0xff]
          %v3550 = vld [vmem:[#allocation2 + $0x8a8] sm:$0xff]
          %v3551 = vld [vmem:[#allocation2 + $0x8b0] sm:$0xff]
          %v3552 = vld [vmem:[#allocation2 + $0x8b8] sm:$0xff]
          %v3553 = vld [vmem:[#allocation2 + $0x8c0] sm:$0xff]
          %v3554 = vld [vmem:[#allocation2 + $0x8c8] sm:$0xff]
          %v3555 = vld [vmem:[#allocation2 + $0x8d0] sm:$0xff]
          %v3556 = vld [vmem:[#allocation2 + $0x8d8] sm:$0xff]
          %v3557 = vld [vmem:[#allocation2 + $0x8e0] sm:$0xff]
          %v3558 = vld [vmem:[#allocation2 + $0x8e8] sm:$0xff]
          %v3559 = vld [vmem:[#allocation2 + $0x8f0] sm:$0xff]
          %v3560 = vld [vmem:[#allocation2 + $0x8f8] sm:$0xff]
          %v3561 = vld [vmem:[#allocation2 + $0x900] sm:$0xff]
          %v3562 = vld [vmem:[#allocation2 + $0x908] sm:$0xff]
          %v3563 = vld [vmem:[#allocation2 + $0x910] sm:$0xff]
          %v3564 = vld [vmem:[#allocation2 + $0x918] sm:$0xff]
          %v3565 = vld [vmem:[#allocation2 + $0x920] sm:$0xff]
          %v3566 = vld [vmem:[#allocation2 + $0x928] sm:$0xff]
          %v3567 = vld [vmem:[#allocation2 + $0x930] sm:$0xff]
          %v3568 = vld [vmem:[#allocation2 + $0x938] sm:$0xff]
          %v3569 = vld [vmem:[#allocation2 + $0x940] sm:$0xff]
          %v3570 = vld [vmem:[#allocation2 + $0x948] sm:$0xff]
          %v3571 = vld [vmem:[#allocation2 + $0x950] sm:$0xff]
          %v3572 = vld [vmem:[#allocation2 + $0x958] sm:$0xff]
          %v3573 = vld [vmem:[#allocation2 + $0x960] sm:$0xff]
          %v3574 = vld [vmem:[#allocation2 + $0x968] sm:$0xff]
          %v3575 = vld [vmem:[#allocation2 + $0x970] sm:$0xff]
          %v3576 = vld [vmem:[#allocation2 + $0x978] sm:$0xff]
          %v3577 = vld [vmem:[#allocation2 + $0x980] sm:$0xff]
          %v3578 = vld [vmem:[#allocation2 + $0x988] sm:$0xff]
          %v3579 = vld [vmem:[#allocation2 + $0x990] sm:$0xff]
          %v3580 = vld [vmem:[#allocation2 + $0x998] sm:$0xff]
          %v3581 = vld [vmem:[#allocation2 + $0x9a0] sm:$0xff]
          %v3582 = vld [vmem:[#allocation2 + $0x9a8] sm:$0xff]
          %v3583 = vld [vmem:[#allocation2 + $0x9b0] sm:$0xff]
          %v3584 = vld [vmem:[#allocation2 + $0x9b8] sm:$0xff]
          %v3585 = vld [vmem:[#allocation2 + $0x9c0] sm:$0xff]
          %v3586 = vld [vmem:[#allocation2 + $0x9c8] sm:$0xff]
          %v3587 = vld [vmem:[#allocation2 + $0x9d0] sm:$0xff]
          %v3588 = vld [vmem:[#allocation2 + $0x9d8] sm:$0xff]
          %v3589 = vld [vmem:[#allocation2 + $0x9e0] sm:$0xff]
          %v3590 = vld [vmem:[#allocation2 + $0x9e8] sm:$0xff]
          %v3591 = vld [vmem:[#allocation2 + $0x9f0] sm:$0xff]
          %v3592 = vld [vmem:[#allocation2 + $0x9f8] sm:$0xff]
          %v3593 = vld [vmem:[#allocation2 + $0xa00] sm:$0xff]
          %v3594 = vld [vmem:[#allocation2 + $0xa08] sm:$0xff]
          %v3595 = vld [vmem:[#allocation2 + $0xa10] sm:$0xff]
          %v3596 = vld [vmem:[#allocation2 + $0xa18] sm:$0xff]
          %v3597 = vld [vmem:[#allocation2 + $0xa20] sm:$0xff]
          %v3598 = vld [vmem:[#allocation2 + $0xa28] sm:$0xff]
          %v3599 = vld [vmem:[#allocation2 + $0xa30] sm:$0xff]
          %v3600 = vld [vmem:[#allocation2 + $0xa38] sm:$0xff]
          %v3601 = vld [vmem:[#allocation2 + $0xa40] sm:$0xff]
          %v3602 = vld [vmem:[#allocation2 + $0xa48] sm:$0xff]
          %v3603 = vld [vmem:[#allocation2 + $0xa50] sm:$0xff]
          %v3604 = vld [vmem:[#allocation2 + $0xa58] sm:$0xff]
          %v3605 = vld [vmem:[#allocation2 + $0xa60] sm:$0xff]
          %v3606 = vld [vmem:[#allocation2 + $0xa68] sm:$0xff]
          %v3607 = vld [vmem:[#allocation2 + $0xa70] sm:$0xff]
          %v3608 = vld [vmem:[#allocation2 + $0xa78] sm:$0xff]
          %v3609 = vld [vmem:[#allocation2 + $0xa80] sm:$0xff]
          %v3610 = vld [vmem:[#allocation2 + $0xa88] sm:$0xff]
          %v3611 = vld [vmem:[#allocation2 + $0xa90] sm:$0xff]
          %v3612 = vld [vmem:[#allocation2 + $0xa98] sm:$0xff]
          %v3613 = vld [vmem:[#allocation2 + $0xaa0] sm:$0xff]
          %v3614 = vld [vmem:[#allocation2 + $0xaa8] sm:$0xff]
          %v3615 = vld [vmem:[#allocation2 + $0xab0] sm:$0xff]
          %v3616 = vld [vmem:[#allocation2 + $0xab8] sm:$0xff]
          %v3617 = vld [vmem:[#allocation2 + $0xac0] sm:$0xff]
          %v3618 = vld [vmem:[#allocation2 + $0xac8] sm:$0xff]
          %v3619 = vld [vmem:[#allocation2 + $0xad0] sm:$0xff]
          %v3620 = vld [vmem:[#allocation2 + $0xad8] sm:$0xff]
          %v3621 = vld [vmem:[#allocation2 + $0xae0] sm:$0xff]
          %v3622 = vld [vmem:[#allocation2 + $0xae8] sm:$0xff]
          %v3623 = vld [vmem:[#allocation2 + $0xaf0] sm:$0xff]
          %v3624 = vld [vmem:[#allocation2 + $0xaf8] sm:$0xff]
          %v3625 = vld [vmem:[#allocation2 + $0xb00] sm:$0xff]
          %v3626 = vld [vmem:[#allocation2 + $0xb08] sm:$0xff]
          %v3627 = vld [vmem:[#allocation2 + $0xb10] sm:$0xff]
          %v3628 = vld [vmem:[#allocation2 + $0xb18] sm:$0xff]
          %v3629 = vld [vmem:[#allocation2 + $0xb20] sm:$0xff]
          %v3630 = vld [vmem:[#allocation2 + $0xb28] sm:$0xff]
          %v3631 = vld [vmem:[#allocation2 + $0xb30] sm:$0xff]
          %v3632 = vld [vmem:[#allocation2 + $0xb38] sm:$0xff]
          %v3633 = vld [vmem:[#allocation2 + $0xb40] sm:$0xff]
          %v3634 = vld [vmem:[#allocation2 + $0xb48] sm:$0xff]
          %v3635 = vld [vmem:[#allocation2 + $0xb50] sm:$0xff]
          %v3636 = vld [vmem:[#allocation2 + $0xb58] sm:$0xff]
          %v3637 = vld [vmem:[#allocation2 + $0xb60] sm:$0xff]
          %v3638 = vld [vmem:[#allocation2 + $0xb68] sm:$0xff]
          %v3639 = vld [vmem:[#allocation2 + $0xb70] sm:$0xff]
          %v3640 = vld [vmem:[#allocation2 + $0xb78] sm:$0xff]
          %v3641 = vld [vmem:[#allocation2 + $0xb80] sm:$0xff]
          %v3642 = vld [vmem:[#allocation2 + $0xb88] sm:$0xff]
          %v3643 = vld [vmem:[#allocation2 + $0xb90] sm:$0xff]
          %v3644 = vld [vmem:[#allocation2 + $0xb98] sm:$0xff]
          %v3645 = vld [vmem:[#allocation2 + $0xba0] sm:$0xff]
          %v3646 = vld [vmem:[#allocation2 + $0xba8] sm:$0xff]
          %v3647 = vld [vmem:[#allocation2 + $0xbb0] sm:$0xff]
          %v3648 = vld [vmem:[#allocation2 + $0xbb8] sm:$0xff]
          %v3649 = vld [vmem:[#allocation2 + $0xbc0] sm:$0xff]
          %v3650 = vld [vmem:[#allocation2 + $0xbc8] sm:$0xff]
          %v3651 = vld [vmem:[#allocation2 + $0xbd0] sm:$0xff]
          %v3652 = vld [vmem:[#allocation2 + $0xbd8] sm:$0xff]
          %v3653 = vld [vmem:[#allocation2 + $0xbe0] sm:$0xff]
          %v3654 = vld [vmem:[#allocation2 + $0xbe8] sm:$0xff]
          %v3655 = vld [vmem:[#allocation2 + $0xbf0] sm:$0xff]
          %v3656 = vld [vmem:[#allocation2 + $0xbf8] sm:$0xff]
          %v3657 = vld [vmem:[#allocation8] sm:$0x3f]
          %v3659 = vlaneseq
          %v3660 = vshrl.u32 %v3659, 7
          %v3661 = vsub.s32 0, %v3660
          %v3662 = vrot.slane %v3657, %v3661
          %v3663 = vlaneseq
          %v3664 = vshrl.u32 %v3663, 7
          %v3665 = vsub.s32 1, %v3664
          %v3666 = vrot.slane %v3657, %v3665
          %v3667 = vlaneseq
          %v3668 = vshrl.u32 %v3667, 7
          %v3669 = vsub.s32 2, %v3668
          %v3670 = vrot.slane %v3657, %v3669
          %v3671 = vlaneseq
          %v3672 = vshrl.u32 %v3671, 7
          %v3673 = vsub.s32 3, %v3672
          %v3674 = vrot.slane %v3657, %v3673
          %v3675 = vlaneseq
          %v3676 = vshrl.u32 %v3675, 7
          %v3677 = vsub.s32 4, %v3676
          %v3678 = vrot.slane %v3657, %v3677
          %v3679 = vlaneseq
          %v3680 = vshrl.u32 %v3679, 7
          %v3681 = vsub.s32 5, %v3680
          %v3682 = vrot.slane %v3657, %v3681
          %v3689 = vadd.f32 %v3273, %v3662
          %v3690 = vadd.f32 %v3274, %v3666
          %v3691 = vadd.f32 %v3275, %v3670
          %v3692 = vadd.f32 %v3276, %v3674
          %v3693 = vadd.f32 %v3277, %v3678
          %v3694 = vadd.f32 %v3278, %v3682
          %v3695 = vadd.f32 %v3279, %v3662
          %v3696 = vadd.f32 %v3280, %v3666
          %v3697 = vadd.f32 %v3281, %v3670
          %v3698 = vadd.f32 %v3282, %v3674
          %v3699 = vadd.f32 %v3283, %v3678
          %v3700 = vadd.f32 %v3284, %v3682
          %v3701 = vadd.f32 %v3285, %v3662
          %v3702 = vadd.f32 %v3286, %v3666
          %v3703 = vadd.f32 %v3287, %v3670
          %v3704 = vadd.f32 %v3288, %v3674
          %v3705 = vadd.f32 %v3289, %v3678
          %v3706 = vadd.f32 %v3290, %v3682
          %v3707 = vadd.f32 %v3291, %v3662
          %v3708 = vadd.f32 %v3292, %v3666
          %v3709 = vadd.f32 %v3293, %v3670
          %v3710 = vadd.f32 %v3294, %v3674
          %v3711 = vadd.f32 %v3295, %v3678
          %v3712 = vadd.f32 %v3296, %v3682
          %v3713 = vadd.f32 %v3297, %v3662
          %v3714 = vadd.f32 %v3298, %v3666
          %v3715 = vadd.f32 %v3299, %v3670
          %v3716 = vadd.f32 %v3300, %v3674
          %v3717 = vadd.f32 %v3301, %v3678
          %v3718 = vadd.f32 %v3302, %v3682
          %v3719 = vadd.f32 %v3303, %v3662
          %v3720 = vadd.f32 %v3304, %v3666
          %v3721 = vadd.f32 %v3305, %v3670
          %v3722 = vadd.f32 %v3306, %v3674
          %v3723 = vadd.f32 %v3307, %v3678
          %v3724 = vadd.f32 %v3308, %v3682
          %v3725 = vadd.f32 %v3309, %v3662
          %v3726 = vadd.f32 %v3310, %v3666
          %v3727 = vadd.f32 %v3311, %v3670
          %v3728 = vadd.f32 %v3312, %v3674
          %v3729 = vadd.f32 %v3313, %v3678
          %v3730 = vadd.f32 %v3314, %v3682
          %v3731 = vadd.f32 %v3315, %v3662
          %v3732 = vadd.f32 %v3316, %v3666
          %v3733 = vadd.f32 %v3317, %v3670
          %v3734 = vadd.f32 %v3318, %v3674
          %v3735 = vadd.f32 %v3319, %v3678
          %v3736 = vadd.f32 %v3320, %v3682
          %v3737 = vadd.f32 %v3321, %v3662
          %v3738 = vadd.f32 %v3322, %v3666
          %v3739 = vadd.f32 %v3323, %v3670
          %v3740 = vadd.f32 %v3324, %v3674
          %v3741 = vadd.f32 %v3325, %v3678
          %v3742 = vadd.f32 %v3326, %v3682
          %v3743 = vadd.f32 %v3327, %v3662
          %v3744 = vadd.f32 %v3328, %v3666
          %v3745 = vadd.f32 %v3329, %v3670
          %v3746 = vadd.f32 %v3330, %v3674
          %v3747 = vadd.f32 %v3331, %v3678
          %v3748 = vadd.f32 %v3332, %v3682
          %v3749 = vadd.f32 %v3333, %v3662
          %v3750 = vadd.f32 %v3334, %v3666
          %v3751 = vadd.f32 %v3335, %v3670
          %v3752 = vadd.f32 %v3336, %v3674
          %v3753 = vadd.f32 %v3337, %v3678
          %v3754 = vadd.f32 %v3338, %v3682
          %v3755 = vadd.f32 %v3339, %v3662
          %v3756 = vadd.f32 %v3340, %v3666
          %v3757 = vadd.f32 %v3341, %v3670
          %v3758 = vadd.f32 %v3342, %v3674
          %v3759 = vadd.f32 %v3343, %v3678
          %v3760 = vadd.f32 %v3344, %v3682
          %v3761 = vadd.f32 %v3345, %v3662
          %v3762 = vadd.f32 %v3346, %v3666
          %v3763 = vadd.f32 %v3347, %v3670
          %v3764 = vadd.f32 %v3348, %v3674
          %v3765 = vadd.f32 %v3349, %v3678
          %v3766 = vadd.f32 %v3350, %v3682
          %v3767 = vadd.f32 %v3351, %v3662
          %v3768 = vadd.f32 %v3352, %v3666
          %v3769 = vadd.f32 %v3353, %v3670
          %v3770 = vadd.f32 %v3354, %v3674
          %v3771 = vadd.f32 %v3355, %v3678
          %v3772 = vadd.f32 %v3356, %v3682
          %v3773 = vadd.f32 %v3357, %v3662
          %v3774 = vadd.f32 %v3358, %v3666
          %v3775 = vadd.f32 %v3359, %v3670
          %v3776 = vadd.f32 %v3360, %v3674
          %v3777 = vadd.f32 %v3361, %v3678
          %v3778 = vadd.f32 %v3362, %v3682
          %v3779 = vadd.f32 %v3363, %v3662
          %v3780 = vadd.f32 %v3364, %v3666
          %v3781 = vadd.f32 %v3365, %v3670
          %v3782 = vadd.f32 %v3366, %v3674
          %v3783 = vadd.f32 %v3367, %v3678
          %v3784 = vadd.f32 %v3368, %v3682
          %v3785 = vadd.f32 %v3369, %v3662
          %v3786 = vadd.f32 %v3370, %v3666
          %v3787 = vadd.f32 %v3371, %v3670
          %v3788 = vadd.f32 %v3372, %v3674
          %v3789 = vadd.f32 %v3373, %v3678
          %v3790 = vadd.f32 %v3374, %v3682
          %v3791 = vadd.f32 %v3375, %v3662
          %v3792 = vadd.f32 %v3376, %v3666
          %v3793 = vadd.f32 %v3377, %v3670
          %v3794 = vadd.f32 %v3378, %v3674
          %v3795 = vadd.f32 %v3379, %v3678
          %v3796 = vadd.f32 %v3380, %v3682
          %v3797 = vadd.f32 %v3381, %v3662
          %v3798 = vadd.f32 %v3382, %v3666
          %v3799 = vadd.f32 %v3383, %v3670
          %v3800 = vadd.f32 %v3384, %v3674
          %v3801 = vadd.f32 %v3385, %v3678
          %v3802 = vadd.f32 %v3386, %v3682
          %v3803 = vadd.f32 %v3387, %v3662
          %v3804 = vadd.f32 %v3388, %v3666
          %v3805 = vadd.f32 %v3389, %v3670
          %v3806 = vadd.f32 %v3390, %v3674
          %v3807 = vadd.f32 %v3391, %v3678
          %v3808 = vadd.f32 %v3392, %v3682
          %v3809 = vadd.f32 %v3393, %v3662
          %v3810 = vadd.f32 %v3394, %v3666
          %v3811 = vadd.f32 %v3395, %v3670
          %v3812 = vadd.f32 %v3396, %v3674
          %v3813 = vadd.f32 %v3397, %v3678
          %v3814 = vadd.f32 %v3398, %v3682
          %v3815 = vadd.f32 %v3399, %v3662
          %v3816 = vadd.f32 %v3400, %v3666
          %v3817 = vadd.f32 %v3401, %v3670
          %v3818 = vadd.f32 %v3402, %v3674
          %v3819 = vadd.f32 %v3403, %v3678
          %v3820 = vadd.f32 %v3404, %v3682
          %v3821 = vadd.f32 %v3405, %v3662
          %v3822 = vadd.f32 %v3406, %v3666
          %v3823 = vadd.f32 %v3407, %v3670
          %v3824 = vadd.f32 %v3408, %v3674
          %v3825 = vadd.f32 %v3409, %v3678
          %v3826 = vadd.f32 %v3410, %v3682
          %v3827 = vadd.f32 %v3411, %v3662
          %v3828 = vadd.f32 %v3412, %v3666
          %v3829 = vadd.f32 %v3413, %v3670
          %v3830 = vadd.f32 %v3414, %v3674
          %v3831 = vadd.f32 %v3415, %v3678
          %v3832 = vadd.f32 %v3416, %v3682
          %v3833 = vadd.f32 %v3417, %v3662
          %v3834 = vadd.f32 %v3418, %v3666
          %v3835 = vadd.f32 %v3419, %v3670
          %v3836 = vadd.f32 %v3420, %v3674
          %v3837 = vadd.f32 %v3421, %v3678
          %v3838 = vadd.f32 %v3422, %v3682
          %v3839 = vadd.f32 %v3423, %v3662
          %v3840 = vadd.f32 %v3424, %v3666
          %v3841 = vadd.f32 %v3425, %v3670
          %v3842 = vadd.f32 %v3426, %v3674
          %v3843 = vadd.f32 %v3427, %v3678
          %v3844 = vadd.f32 %v3428, %v3682
          %v3845 = vadd.f32 %v3429, %v3662
          %v3846 = vadd.f32 %v3430, %v3666
          %v3847 = vadd.f32 %v3431, %v3670
          %v3848 = vadd.f32 %v3432, %v3674
          %v3849 = vadd.f32 %v3433, %v3678
          %v3850 = vadd.f32 %v3434, %v3682
          %v3851 = vadd.f32 %v3435, %v3662
          %v3852 = vadd.f32 %v3436, %v3666
          %v3853 = vadd.f32 %v3437, %v3670
          %v3854 = vadd.f32 %v3438, %v3674
          %v3855 = vadd.f32 %v3439, %v3678
          %v3856 = vadd.f32 %v3440, %v3682
          %v3857 = vadd.f32 %v3441, %v3662
          %v3858 = vadd.f32 %v3442, %v3666
          %v3859 = vadd.f32 %v3443, %v3670
          %v3860 = vadd.f32 %v3444, %v3674
          %v3861 = vadd.f32 %v3445, %v3678
          %v3862 = vadd.f32 %v3446, %v3682
          %v3863 = vadd.f32 %v3447, %v3662
          %v3864 = vadd.f32 %v3448, %v3666
          %v3865 = vadd.f32 %v3449, %v3670
          %v3866 = vadd.f32 %v3450, %v3674
          %v3867 = vadd.f32 %v3451, %v3678
          %v3868 = vadd.f32 %v3452, %v3682
          %v3869 = vadd.f32 %v3453, %v3662
          %v3870 = vadd.f32 %v3454, %v3666
          %v3871 = vadd.f32 %v3455, %v3670
          %v3872 = vadd.f32 %v3456, %v3674
          %v3873 = vadd.f32 %v3457, %v3678
          %v3874 = vadd.f32 %v3458, %v3682
          %v3875 = vadd.f32 %v3459, %v3662
          %v3876 = vadd.f32 %v3460, %v3666
          %v3877 = vadd.f32 %v3461, %v3670
          %v3878 = vadd.f32 %v3462, %v3674
          %v3879 = vadd.f32 %v3463, %v3678
          %v3880 = vadd.f32 %v3464, %v3682
          %v3881 = vadd.f32 %v3465, %v3662
          %v3882 = vadd.f32 %v3466, %v3666
          %v3883 = vadd.f32 %v3467, %v3670
          %v3884 = vadd.f32 %v3468, %v3674
          %v3885 = vadd.f32 %v3469, %v3678
          %v3886 = vadd.f32 %v3470, %v3682
          %v3887 = vadd.f32 %v3471, %v3662
          %v3888 = vadd.f32 %v3472, %v3666
          %v3889 = vadd.f32 %v3473, %v3670
          %v3890 = vadd.f32 %v3474, %v3674
          %v3891 = vadd.f32 %v3475, %v3678
          %v3892 = vadd.f32 %v3476, %v3682
          %v3893 = vadd.f32 %v3477, %v3662
          %v3894 = vadd.f32 %v3478, %v3666
          %v3895 = vadd.f32 %v3479, %v3670
          %v3896 = vadd.f32 %v3480, %v3674
          %v3897 = vadd.f32 %v3481, %v3678
          %v3898 = vadd.f32 %v3482, %v3682
          %v3899 = vadd.f32 %v3483, %v3662
          %v3900 = vadd.f32 %v3484, %v3666
          %v3901 = vadd.f32 %v3485, %v3670
          %v3902 = vadd.f32 %v3486, %v3674
          %v3903 = vadd.f32 %v3487, %v3678
          %v3904 = vadd.f32 %v3488, %v3682
          %v3905 = vadd.f32 %v3489, %v3662
          %v3906 = vadd.f32 %v3490, %v3666
          %v3907 = vadd.f32 %v3491, %v3670
          %v3908 = vadd.f32 %v3492, %v3674
          %v3909 = vadd.f32 %v3493, %v3678
          %v3910 = vadd.f32 %v3494, %v3682
          %v3911 = vadd.f32 %v3495, %v3662
          %v3912 = vadd.f32 %v3496, %v3666
          %v3913 = vadd.f32 %v3497, %v3670
          %v3914 = vadd.f32 %v3498, %v3674
          %v3915 = vadd.f32 %v3499, %v3678
          %v3916 = vadd.f32 %v3500, %v3682
          %v3917 = vadd.f32 %v3501, %v3662
          %v3918 = vadd.f32 %v3502, %v3666
          %v3919 = vadd.f32 %v3503, %v3670
          %v3920 = vadd.f32 %v3504, %v3674
          %v3921 = vadd.f32 %v3505, %v3678
          %v3922 = vadd.f32 %v3506, %v3682
          %v3923 = vadd.f32 %v3507, %v3662
          %v3924 = vadd.f32 %v3508, %v3666
          %v3925 = vadd.f32 %v3509, %v3670
          %v3926 = vadd.f32 %v3510, %v3674
          %v3927 = vadd.f32 %v3511, %v3678
          %v3928 = vadd.f32 %v3512, %v3682
          %v3929 = vadd.f32 %v3513, %v3662
          %v3930 = vadd.f32 %v3514, %v3666
          %v3931 = vadd.f32 %v3515, %v3670
          %v3932 = vadd.f32 %v3516, %v3674
          %v3933 = vadd.f32 %v3517, %v3678
          %v3934 = vadd.f32 %v3518, %v3682
          %v3935 = vadd.f32 %v3519, %v3662
          %v3936 = vadd.f32 %v3520, %v3666
          %v3937 = vadd.f32 %v3521, %v3670
          %v3938 = vadd.f32 %v3522, %v3674
          %v3939 = vadd.f32 %v3523, %v3678
          %v3940 = vadd.f32 %v3524, %v3682
          %v3941 = vadd.f32 %v3525, %v3662
          %v3942 = vadd.f32 %v3526, %v3666
          %v3943 = vadd.f32 %v3527, %v3670
          %v3944 = vadd.f32 %v3528, %v3674
          %v3945 = vadd.f32 %v3529, %v3678
          %v3946 = vadd.f32 %v3530, %v3682
          %v3947 = vadd.f32 %v3531, %v3662
          %v3948 = vadd.f32 %v3532, %v3666
          %v3949 = vadd.f32 %v3533, %v3670
          %v3950 = vadd.f32 %v3534, %v3674
          %v3951 = vadd.f32 %v3535, %v3678
          %v3952 = vadd.f32 %v3536, %v3682
          %v3953 = vadd.f32 %v3537, %v3662
          %v3954 = vadd.f32 %v3538, %v3666
          %v3955 = vadd.f32 %v3539, %v3670
          %v3956 = vadd.f32 %v3540, %v3674
          %v3957 = vadd.f32 %v3541, %v3678
          %v3958 = vadd.f32 %v3542, %v3682
          %v3959 = vadd.f32 %v3543, %v3662
          %v3960 = vadd.f32 %v3544, %v3666
          %v3961 = vadd.f32 %v3545, %v3670
          %v3962 = vadd.f32 %v3546, %v3674
          %v3963 = vadd.f32 %v3547, %v3678
          %v3964 = vadd.f32 %v3548, %v3682
          %v3965 = vadd.f32 %v3549, %v3662
          %v3966 = vadd.f32 %v3550, %v3666
          %v3967 = vadd.f32 %v3551, %v3670
          %v3968 = vadd.f32 %v3552, %v3674
          %v3969 = vadd.f32 %v3553, %v3678
          %v3970 = vadd.f32 %v3554, %v3682
          %v3971 = vadd.f32 %v3555, %v3662
          %v3972 = vadd.f32 %v3556, %v3666
          %v3973 = vadd.f32 %v3557, %v3670
          %v3974 = vadd.f32 %v3558, %v3674
          %v3975 = vadd.f32 %v3559, %v3678
          %v3976 = vadd.f32 %v3560, %v3682
          %v3977 = vadd.f32 %v3561, %v3662
          %v3978 = vadd.f32 %v3562, %v3666
          %v3979 = vadd.f32 %v3563, %v3670
          %v3980 = vadd.f32 %v3564, %v3674
          %v3981 = vadd.f32 %v3565, %v3678
          %v3982 = vadd.f32 %v3566, %v3682
          %v3983 = vadd.f32 %v3567, %v3662
          %v3984 = vadd.f32 %v3568, %v3666
          %v3985 = vadd.f32 %v3569, %v3670
          %v3986 = vadd.f32 %v3570, %v3674
          %v3987 = vadd.f32 %v3571, %v3678
          %v3988 = vadd.f32 %v3572, %v3682
          %v3989 = vadd.f32 %v3573, %v3662
          %v3990 = vadd.f32 %v3574, %v3666
          %v3991 = vadd.f32 %v3575, %v3670
          %v3992 = vadd.f32 %v3576, %v3674
          %v3993 = vadd.f32 %v3577, %v3678
          %v3994 = vadd.f32 %v3578, %v3682
          %v3995 = vadd.f32 %v3579, %v3662
          %v3996 = vadd.f32 %v3580, %v3666
          %v3997 = vadd.f32 %v3581, %v3670
          %v3998 = vadd.f32 %v3582, %v3674
          %v3999 = vadd.f32 %v3583, %v3678
          %v4000 = vadd.f32 %v3584, %v3682
          %v4001 = vadd.f32 %v3585, %v3662
          %v4002 = vadd.f32 %v3586, %v3666
          %v4003 = vadd.f32 %v3587, %v3670
          %v4004 = vadd.f32 %v3588, %v3674
          %v4005 = vadd.f32 %v3589, %v3678
          %v4006 = vadd.f32 %v3590, %v3682
          %v4007 = vadd.f32 %v3591, %v3662
          %v4008 = vadd.f32 %v3592, %v3666
          %v4009 = vadd.f32 %v3593, %v3670
          %v4010 = vadd.f32 %v3594, %v3674
          %v4011 = vadd.f32 %v3595, %v3678
          %v4012 = vadd.f32 %v3596, %v3682
          %v4013 = vadd.f32 %v3597, %v3662
          %v4014 = vadd.f32 %v3598, %v3666
          %v4015 = vadd.f32 %v3599, %v3670
          %v4016 = vadd.f32 %v3600, %v3674
          %v4017 = vadd.f32 %v3601, %v3678
          %v4018 = vadd.f32 %v3602, %v3682
          %v4019 = vadd.f32 %v3603, %v3662
          %v4020 = vadd.f32 %v3604, %v3666
          %v4021 = vadd.f32 %v3605, %v3670
          %v4022 = vadd.f32 %v3606, %v3674
          %v4023 = vadd.f32 %v3607, %v3678
          %v4024 = vadd.f32 %v3608, %v3682
          %v4025 = vadd.f32 %v3609, %v3662
          %v4026 = vadd.f32 %v3610, %v3666
          %v4027 = vadd.f32 %v3611, %v3670
          %v4028 = vadd.f32 %v3612, %v3674
          %v4029 = vadd.f32 %v3613, %v3678
          %v4030 = vadd.f32 %v3614, %v3682
          %v4031 = vadd.f32 %v3615, %v3662
          %v4032 = vadd.f32 %v3616, %v3666
          %v4033 = vadd.f32 %v3617, %v3670
          %v4034 = vadd.f32 %v3618, %v3674
          %v4035 = vadd.f32 %v3619, %v3678
          %v4036 = vadd.f32 %v3620, %v3682
          %v4037 = vadd.f32 %v3621, %v3662
          %v4038 = vadd.f32 %v3622, %v3666
          %v4039 = vadd.f32 %v3623, %v3670
          %v4040 = vadd.f32 %v3624, %v3674
          %v4041 = vadd.f32 %v3625, %v3678
          %v4042 = vadd.f32 %v3626, %v3682
          %v4043 = vadd.f32 %v3627, %v3662
          %v4044 = vadd.f32 %v3628, %v3666
          %v4045 = vadd.f32 %v3629, %v3670
          %v4046 = vadd.f32 %v3630, %v3674
          %v4047 = vadd.f32 %v3631, %v3678
          %v4048 = vadd.f32 %v3632, %v3682
          %v4049 = vadd.f32 %v3633, %v3662
          %v4050 = vadd.f32 %v3634, %v3666
          %v4051 = vadd.f32 %v3635, %v3670
          %v4052 = vadd.f32 %v3636, %v3674
          %v4053 = vadd.f32 %v3637, %v3678
          %v4054 = vadd.f32 %v3638, %v3682
          %v4055 = vadd.f32 %v3639, %v3662
          %v4056 = vadd.f32 %v3640, %v3666
          %v4057 = vadd.f32 %v3641, %v3670
          %v4058 = vadd.f32 %v3642, %v3674
          %v4059 = vadd.f32 %v3643, %v3678
          %v4060 = vadd.f32 %v3644, %v3682
          %v4061 = vadd.f32 %v3645, %v3662
          %v4062 = vadd.f32 %v3646, %v3666
          %v4063 = vadd.f32 %v3647, %v3670
          %v4064 = vadd.f32 %v3648, %v3674
          %v4065 = vadd.f32 %v3649, %v3678
          %v4066 = vadd.f32 %v3650, %v3682
          %v4067 = vadd.f32 %v3651, %v3662
          %v4068 = vadd.f32 %v3652, %v3666
          %v4069 = vadd.f32 %v3653, %v3670
          %v4070 = vadd.f32 %v3654, %v3674
          %v4071 = vadd.f32 %v3655, %v3678
          %v4072 = vadd.f32 %v3656, %v3682
          %4073 = vst [vmem:[%s278] sm:$0xff] %v3689
          %4074 = vst [vmem:[%s278 + $0x8] sm:$0xff] %v3690
          %4075 = vst [vmem:[%s278 + $0x10] sm:$0xff] %v3691
          %4076 = vst [vmem:[%s278 + $0x18] sm:$0xff] %v3692
          %4077 = vst [vmem:[%s278 + $0x20] sm:$0xff] %v3693
          %4078 = vst [vmem:[%s278 + $0x28] sm:$0xff] %v3694
          %4079 = vst [vmem:[%s278 + $0x30] sm:$0xff] %v3695
          %4080 = vst [vmem:[%s278 + $0x38] sm:$0xff] %v3696
          %4081 = vst [vmem:[%s278 + $0x40] sm:$0xff] %v3697
          %4082 = vst [vmem:[%s278 + $0x48] sm:$0xff] %v3698
          %4083 = vst [vmem:[%s278 + $0x50] sm:$0xff] %v3699
          %4084 = vst [vmem:[%s278 + $0x58] sm:$0xff] %v3700
          %4085 = vst [vmem:[%s278 + $0x60] sm:$0xff] %v3701
          %4086 = vst [vmem:[%s278 + $0x68] sm:$0xff] %v3702
          %4087 = vst [vmem:[%s278 + $0x70] sm:$0xff] %v3703
          %4088 = vst [vmem:[%s278 + $0x78] sm:$0xff] %v3704
          %4089 = vst [vmem:[%s278 + $0x80] sm:$0xff] %v3705
          %4090 = vst [vmem:[%s278 + $0x88] sm:$0xff] %v3706
          %4091 = vst [vmem:[%s278 + $0x90] sm:$0xff] %v3707
          %4092 = vst [vmem:[%s278 + $0x98] sm:$0xff] %v3708
          %4093 = vst [vmem:[%s278 + $0xa0] sm:$0xff] %v3709
          %4094 = vst [vmem:[%s278 + $0xa8] sm:$0xff] %v3710
          %4095 = vst [vmem:[%s278 + $0xb0] sm:$0xff] %v3711
          %4096 = vst [vmem:[%s278 + $0xb8] sm:$0xff] %v3712
          %4097 = vst [vmem:[%s278 + $0xc0] sm:$0xff] %v3713
          %4098 = vst [vmem:[%s278 + $0xc8] sm:$0xff] %v3714
          %4099 = vst [vmem:[%s278 + $0xd0] sm:$0xff] %v3715
          %4100 = vst [vmem:[%s278 + $0xd8] sm:$0xff] %v3716
          %4101 = vst [vmem:[%s278 + $0xe0] sm:$0xff] %v3717
          %4102 = vst [vmem:[%s278 + $0xe8] sm:$0xff] %v3718
          %4103 = vst [vmem:[%s278 + $0xf0] sm:$0xff] %v3719
          %4104 = vst [vmem:[%s278 + $0xf8] sm:$0xff] %v3720
          %4105 = vst [vmem:[%s278 + $0x100] sm:$0xff] %v3721
          %4106 = vst [vmem:[%s278 + $0x108] sm:$0xff] %v3722
          %4107 = vst [vmem:[%s278 + $0x110] sm:$0xff] %v3723
          %4108 = vst [vmem:[%s278 + $0x118] sm:$0xff] %v3724
          %4109 = vst [vmem:[%s278 + $0x120] sm:$0xff] %v3725
          %4110 = vst [vmem:[%s278 + $0x128] sm:$0xff] %v3726
          %4111 = vst [vmem:[%s278 + $0x130] sm:$0xff] %v3727
          %4112 = vst [vmem:[%s278 + $0x138] sm:$0xff] %v3728
          %4113 = vst [vmem:[%s278 + $0x140] sm:$0xff] %v3729
          %4114 = vst [vmem:[%s278 + $0x148] sm:$0xff] %v3730
          %4115 = vst [vmem:[%s278 + $0x150] sm:$0xff] %v3731
          %4116 = vst [vmem:[%s278 + $0x158] sm:$0xff] %v3732
          %4117 = vst [vmem:[%s278 + $0x160] sm:$0xff] %v3733
          %4118 = vst [vmem:[%s278 + $0x168] sm:$0xff] %v3734
          %4119 = vst [vmem:[%s278 + $0x170] sm:$0xff] %v3735
          %4120 = vst [vmem:[%s278 + $0x178] sm:$0xff] %v3736
          %4121 = vst [vmem:[%s278 + $0x180] sm:$0xff] %v3737
          %4122 = vst [vmem:[%s278 + $0x188] sm:$0xff] %v3738
          %4123 = vst [vmem:[%s278 + $0x190] sm:$0xff] %v3739
          %4124 = vst [vmem:[%s278 + $0x198] sm:$0xff] %v3740
          %4125 = vst [vmem:[%s278 + $0x1a0] sm:$0xff] %v3741
          %4126 = vst [vmem:[%s278 + $0x1a8] sm:$0xff] %v3742
          %4127 = vst [vmem:[%s278 + $0x1b0] sm:$0xff] %v3743
          %4128 = vst [vmem:[%s278 + $0x1b8] sm:$0xff] %v3744
          %4129 = vst [vmem:[%s278 + $0x1c0] sm:$0xff] %v3745
          %4130 = vst [vmem:[%s278 + $0x1c8] sm:$0xff] %v3746
          %4131 = vst [vmem:[%s278 + $0x1d0] sm:$0xff] %v3747
          %4132 = vst [vmem:[%s278 + $0x1d8] sm:$0xff] %v3748
          %4133 = vst [vmem:[%s278 + $0x1e0] sm:$0xff] %v3749
          %4134 = vst [vmem:[%s278 + $0x1e8] sm:$0xff] %v3750
          %4135 = vst [vmem:[%s278 + $0x1f0] sm:$0xff] %v3751
          %4136 = vst [vmem:[%s278 + $0x1f8] sm:$0xff] %v3752
          %4137 = vst [vmem:[%s278 + $0x200] sm:$0xff] %v3753
          %4138 = vst [vmem:[%s278 + $0x208] sm:$0xff] %v3754
          %4139 = vst [vmem:[%s278 + $0x210] sm:$0xff] %v3755
          %4140 = vst [vmem:[%s278 + $0x218] sm:$0xff] %v3756
          %4141 = vst [vmem:[%s278 + $0x220] sm:$0xff] %v3757
          %4142 = vst [vmem:[%s278 + $0x228] sm:$0xff] %v3758
          %4143 = vst [vmem:[%s278 + $0x230] sm:$0xff] %v3759
          %4144 = vst [vmem:[%s278 + $0x238] sm:$0xff] %v3760
          %4145 = vst [vmem:[%s278 + $0x240] sm:$0xff] %v3761
          %4146 = vst [vmem:[%s278 + $0x248] sm:$0xff] %v3762
          %4147 = vst [vmem:[%s278 + $0x250] sm:$0xff] %v3763
          %4148 = vst [vmem:[%s278 + $0x258] sm:$0xff] %v3764
          %4149 = vst [vmem:[%s278 + $0x260] sm:$0xff] %v3765
          %4150 = vst [vmem:[%s278 + $0x268] sm:$0xff] %v3766
          %4151 = vst [vmem:[%s278 + $0x270] sm:$0xff] %v3767
          %4152 = vst [vmem:[%s278 + $0x278] sm:$0xff] %v3768
          %4153 = vst [vmem:[%s278 + $0x280] sm:$0xff] %v3769
          %4154 = vst [vmem:[%s278 + $0x288] sm:$0xff] %v3770
          %4155 = vst [vmem:[%s278 + $0x290] sm:$0xff] %v3771
          %4156 = vst [vmem:[%s278 + $0x298] sm:$0xff] %v3772
          %4157 = vst [vmem:[%s278 + $0x2a0] sm:$0xff] %v3773
          %4158 = vst [vmem:[%s278 + $0x2a8] sm:$0xff] %v3774
          %4159 = vst [vmem:[%s278 + $0x2b0] sm:$0xff] %v3775
          %4160 = vst [vmem:[%s278 + $0x2b8] sm:$0xff] %v3776
          %4161 = vst [vmem:[%s278 + $0x2c0] sm:$0xff] %v3777
          %4162 = vst [vmem:[%s278 + $0x2c8] sm:$0xff] %v3778
          %4163 = vst [vmem:[%s278 + $0x2d0] sm:$0xff] %v3779
          %4164 = vst [vmem:[%s278 + $0x2d8] sm:$0xff] %v3780
          %4165 = vst [vmem:[%s278 + $0x2e0] sm:$0xff] %v3781
          %4166 = vst [vmem:[%s278 + $0x2e8] sm:$0xff] %v3782
          %4167 = vst [vmem:[%s278 + $0x2f0] sm:$0xff] %v3783
          %4168 = vst [vmem:[%s278 + $0x2f8] sm:$0xff] %v3784
          %4169 = vst [vmem:[%s278 + $0x300] sm:$0xff] %v3785
          %4170 = vst [vmem:[%s278 + $0x308] sm:$0xff] %v3786
          %4171 = vst [vmem:[%s278 + $0x310] sm:$0xff] %v3787
          %4172 = vst [vmem:[%s278 + $0x318] sm:$0xff] %v3788
          %4173 = vst [vmem:[%s278 + $0x320] sm:$0xff] %v3789
          %4174 = vst [vmem:[%s278 + $0x328] sm:$0xff] %v3790
          %4175 = vst [vmem:[%s278 + $0x330] sm:$0xff] %v3791
          %4176 = vst [vmem:[%s278 + $0x338] sm:$0xff] %v3792
          %4177 = vst [vmem:[%s278 + $0x340] sm:$0xff] %v3793
          %4178 = vst [vmem:[%s278 + $0x348] sm:$0xff] %v3794
          %4179 = vst [vmem:[%s278 + $0x350] sm:$0xff] %v3795
          %4180 = vst [vmem:[%s278 + $0x358] sm:$0xff] %v3796
          %4181 = vst [vmem:[%s278 + $0x360] sm:$0xff] %v3797
          %4182 = vst [vmem:[%s278 + $0x368] sm:$0xff] %v3798
          %4183 = vst [vmem:[%s278 + $0x370] sm:$0xff] %v3799
          %4184 = vst [vmem:[%s278 + $0x378] sm:$0xff] %v3800
          %4185 = vst [vmem:[%s278 + $0x380] sm:$0xff] %v3801
          %4186 = vst [vmem:[%s278 + $0x388] sm:$0xff] %v3802
          %4187 = vst [vmem:[%s278 + $0x390] sm:$0xff] %v3803
          %4188 = vst [vmem:[%s278 + $0x398] sm:$0xff] %v3804
          %4189 = vst [vmem:[%s278 + $0x3a0] sm:$0xff] %v3805
          %4190 = vst [vmem:[%s278 + $0x3a8] sm:$0xff] %v3806
          %4191 = vst [vmem:[%s278 + $0x3b0] sm:$0xff] %v3807
          %4192 = vst [vmem:[%s278 + $0x3b8] sm:$0xff] %v3808
          %4193 = vst [vmem:[%s278 + $0x3c0] sm:$0xff] %v3809
          %4194 = vst [vmem:[%s278 + $0x3c8] sm:$0xff] %v3810
          %4195 = vst [vmem:[%s278 + $0x3d0] sm:$0xff] %v3811
          %4196 = vst [vmem:[%s278 + $0x3d8] sm:$0xff] %v3812
          %4197 = vst [vmem:[%s278 + $0x3e0] sm:$0xff] %v3813
          %4198 = vst [vmem:[%s278 + $0x3e8] sm:$0xff] %v3814
          %4199 = vst [vmem:[%s278 + $0x3f0] sm:$0xff] %v3815
          %4200 = vst [vmem:[%s278 + $0x3f8] sm:$0xff] %v3816
          %4201 = vst [vmem:[%s278 + $0x400] sm:$0xff] %v3817
          %4202 = vst [vmem:[%s278 + $0x408] sm:$0xff] %v3818
          %4203 = vst [vmem:[%s278 + $0x410] sm:$0xff] %v3819
          %4204 = vst [vmem:[%s278 + $0x418] sm:$0xff] %v3820
          %4205 = vst [vmem:[%s278 + $0x420] sm:$0xff] %v3821
          %4206 = vst [vmem:[%s278 + $0x428] sm:$0xff] %v3822
          %4207 = vst [vmem:[%s278 + $0x430] sm:$0xff] %v3823
          %4208 = vst [vmem:[%s278 + $0x438] sm:$0xff] %v3824
          %4209 = vst [vmem:[%s278 + $0x440] sm:$0xff] %v3825
          %4210 = vst [vmem:[%s278 + $0x448] sm:$0xff] %v3826
          %4211 = vst [vmem:[%s278 + $0x450] sm:$0xff] %v3827
          %4212 = vst [vmem:[%s278 + $0x458] sm:$0xff] %v3828
          %4213 = vst [vmem:[%s278 + $0x460] sm:$0xff] %v3829
          %4214 = vst [vmem:[%s278 + $0x468] sm:$0xff] %v3830
          %4215 = vst [vmem:[%s278 + $0x470] sm:$0xff] %v3831
          %4216 = vst [vmem:[%s278 + $0x478] sm:$0xff] %v3832
          %4217 = vst [vmem:[%s278 + $0x480] sm:$0xff] %v3833
          %4218 = vst [vmem:[%s278 + $0x488] sm:$0xff] %v3834
          %4219 = vst [vmem:[%s278 + $0x490] sm:$0xff] %v3835
          %4220 = vst [vmem:[%s278 + $0x498] sm:$0xff] %v3836
          %4221 = vst [vmem:[%s278 + $0x4a0] sm:$0xff] %v3837
          %4222 = vst [vmem:[%s278 + $0x4a8] sm:$0xff] %v3838
          %4223 = vst [vmem:[%s278 + $0x4b0] sm:$0xff] %v3839
          %4224 = vst [vmem:[%s278 + $0x4b8] sm:$0xff] %v3840
          %4225 = vst [vmem:[%s278 + $0x4c0] sm:$0xff] %v3841
          %4226 = vst [vmem:[%s278 + $0x4c8] sm:$0xff] %v3842
          %4227 = vst [vmem:[%s278 + $0x4d0] sm:$0xff] %v3843
          %4228 = vst [vmem:[%s278 + $0x4d8] sm:$0xff] %v3844
          %4229 = vst [vmem:[%s278 + $0x4e0] sm:$0xff] %v3845
          %4230 = vst [vmem:[%s278 + $0x4e8] sm:$0xff] %v3846
          %4231 = vst [vmem:[%s278 + $0x4f0] sm:$0xff] %v3847
          %4232 = vst [vmem:[%s278 + $0x4f8] sm:$0xff] %v3848
          %4233 = vst [vmem:[%s278 + $0x500] sm:$0xff] %v3849
          %4234 = vst [vmem:[%s278 + $0x508] sm:$0xff] %v3850
          %4235 = vst [vmem:[%s278 + $0x510] sm:$0xff] %v3851
          %4236 = vst [vmem:[%s278 + $0x518] sm:$0xff] %v3852
          %4237 = vst [vmem:[%s278 + $0x520] sm:$0xff] %v3853
          %4238 = vst [vmem:[%s278 + $0x528] sm:$0xff] %v3854
          %4239 = vst [vmem:[%s278 + $0x530] sm:$0xff] %v3855
          %4240 = vst [vmem:[%s278 + $0x538] sm:$0xff] %v3856
          %4241 = vst [vmem:[%s278 + $0x540] sm:$0xff] %v3857
          %4242 = vst [vmem:[%s278 + $0x548] sm:$0xff] %v3858
          %4243 = vst [vmem:[%s278 + $0x550] sm:$0xff] %v3859
          %4244 = vst [vmem:[%s278 + $0x558] sm:$0xff] %v3860
          %4245 = vst [vmem:[%s278 + $0x560] sm:$0xff] %v3861
          %4246 = vst [vmem:[%s278 + $0x568] sm:$0xff] %v3862
          %4247 = vst [vmem:[%s278 + $0x570] sm:$0xff] %v3863
          %4248 = vst [vmem:[%s278 + $0x578] sm:$0xff] %v3864
          %4249 = vst [vmem:[%s278 + $0x580] sm:$0xff] %v3865
          %4250 = vst [vmem:[%s278 + $0x588] sm:$0xff] %v3866
          %4251 = vst [vmem:[%s278 + $0x590] sm:$0xff] %v3867
          %4252 = vst [vmem:[%s278 + $0x598] sm:$0xff] %v3868
          %4253 = vst [vmem:[%s278 + $0x5a0] sm:$0xff] %v3869
          %4254 = vst [vmem:[%s278 + $0x5a8] sm:$0xff] %v3870
          %4255 = vst [vmem:[%s278 + $0x5b0] sm:$0xff] %v3871
          %4256 = vst [vmem:[%s278 + $0x5b8] sm:$0xff] %v3872
          %4257 = vst [vmem:[%s278 + $0x5c0] sm:$0xff] %v3873
          %4258 = vst [vmem:[%s278 + $0x5c8] sm:$0xff] %v3874
          %4259 = vst [vmem:[%s278 + $0x5d0] sm:$0xff] %v3875
          %4260 = vst [vmem:[%s278 + $0x5d8] sm:$0xff] %v3876
          %4261 = vst [vmem:[%s278 + $0x5e0] sm:$0xff] %v3877
          %4262 = vst [vmem:[%s278 + $0x5e8] sm:$0xff] %v3878
          %4263 = vst [vmem:[%s278 + $0x5f0] sm:$0xff] %v3879
          %4264 = vst [vmem:[%s278 + $0x5f8] sm:$0xff] %v3880
          %4265 = vst [vmem:[%s278 + $0x600] sm:$0xff] %v3881
          %4266 = vst [vmem:[%s278 + $0x608] sm:$0xff] %v3882
          %4267 = vst [vmem:[%s278 + $0x610] sm:$0xff] %v3883
          %4268 = vst [vmem:[%s278 + $0x618] sm:$0xff] %v3884
          %4269 = vst [vmem:[%s278 + $0x620] sm:$0xff] %v3885
          %4270 = vst [vmem:[%s278 + $0x628] sm:$0xff] %v3886
          %4271 = vst [vmem:[%s278 + $0x630] sm:$0xff] %v3887
          %4272 = vst [vmem:[%s278 + $0x638] sm:$0xff] %v3888
          %4273 = vst [vmem:[%s278 + $0x640] sm:$0xff] %v3889
          %4274 = vst [vmem:[%s278 + $0x648] sm:$0xff] %v3890
          %4275 = vst [vmem:[%s278 + $0x650] sm:$0xff] %v3891
          %4276 = vst [vmem:[%s278 + $0x658] sm:$0xff] %v3892
          %4277 = vst [vmem:[%s278 + $0x660] sm:$0xff] %v3893
          %4278 = vst [vmem:[%s278 + $0x668] sm:$0xff] %v3894
          %4279 = vst [vmem:[%s278 + $0x670] sm:$0xff] %v3895
          %4280 = vst [vmem:[%s278 + $0x678] sm:$0xff] %v3896
          %4281 = vst [vmem:[%s278 + $0x680] sm:$0xff] %v3897
          %4282 = vst [vmem:[%s278 + $0x688] sm:$0xff] %v3898
          %4283 = vst [vmem:[%s278 + $0x690] sm:$0xff] %v3899
          %4284 = vst [vmem:[%s278 + $0x698] sm:$0xff] %v3900
          %4285 = vst [vmem:[%s278 + $0x6a0] sm:$0xff] %v3901
          %4286 = vst [vmem:[%s278 + $0x6a8] sm:$0xff] %v3902
          %4287 = vst [vmem:[%s278 + $0x6b0] sm:$0xff] %v3903
          %4288 = vst [vmem:[%s278 + $0x6b8] sm:$0xff] %v3904
          %4289 = vst [vmem:[%s278 + $0x6c0] sm:$0xff] %v3905
          %4290 = vst [vmem:[%s278 + $0x6c8] sm:$0xff] %v3906
          %4291 = vst [vmem:[%s278 + $0x6d0] sm:$0xff] %v3907
          %4292 = vst [vmem:[%s278 + $0x6d8] sm:$0xff] %v3908
          %4293 = vst [vmem:[%s278 + $0x6e0] sm:$0xff] %v3909
          %4294 = vst [vmem:[%s278 + $0x6e8] sm:$0xff] %v3910
          %4295 = vst [vmem:[%s278 + $0x6f0] sm:$0xff] %v3911
          %4296 = vst [vmem:[%s278 + $0x6f8] sm:$0xff] %v3912
          %4297 = vst [vmem:[%s278 + $0x700] sm:$0xff] %v3913
          %4298 = vst [vmem:[%s278 + $0x708] sm:$0xff] %v3914
          %4299 = vst [vmem:[%s278 + $0x710] sm:$0xff] %v3915
          %4300 = vst [vmem:[%s278 + $0x718] sm:$0xff] %v3916
          %4301 = vst [vmem:[%s278 + $0x720] sm:$0xff] %v3917
          %4302 = vst [vmem:[%s278 + $0x728] sm:$0xff] %v3918
          %4303 = vst [vmem:[%s278 + $0x730] sm:$0xff] %v3919
          %4304 = vst [vmem:[%s278 + $0x738] sm:$0xff] %v3920
          %4305 = vst [vmem:[%s278 + $0x740] sm:$0xff] %v3921
          %4306 = vst [vmem:[%s278 + $0x748] sm:$0xff] %v3922
          %4307 = vst [vmem:[%s278 + $0x750] sm:$0xff] %v3923
          %4308 = vst [vmem:[%s278 + $0x758] sm:$0xff] %v3924
          %4309 = vst [vmem:[%s278 + $0x760] sm:$0xff] %v3925
          %4310 = vst [vmem:[%s278 + $0x768] sm:$0xff] %v3926
          %4311 = vst [vmem:[%s278 + $0x770] sm:$0xff] %v3927
          %4312 = vst [vmem:[%s278 + $0x778] sm:$0xff] %v3928
          %4313 = vst [vmem:[%s278 + $0x780] sm:$0xff] %v3929
          %4314 = vst [vmem:[%s278 + $0x788] sm:$0xff] %v3930
          %4315 = vst [vmem:[%s278 + $0x790] sm:$0xff] %v3931
          %4316 = vst [vmem:[%s278 + $0x798] sm:$0xff] %v3932
          %4317 = vst [vmem:[%s278 + $0x7a0] sm:$0xff] %v3933
          %4318 = vst [vmem:[%s278 + $0x7a8] sm:$0xff] %v3934
          %4319 = vst [vmem:[%s278 + $0x7b0] sm:$0xff] %v3935
          %4320 = vst [vmem:[%s278 + $0x7b8] sm:$0xff] %v3936
          %4321 = vst [vmem:[%s278 + $0x7c0] sm:$0xff] %v3937
          %4322 = vst [vmem:[%s278 + $0x7c8] sm:$0xff] %v3938
          %4323 = vst [vmem:[%s278 + $0x7d0] sm:$0xff] %v3939
          %4324 = vst [vmem:[%s278 + $0x7d8] sm:$0xff] %v3940
          %4325 = vst [vmem:[%s278 + $0x7e0] sm:$0xff] %v3941
          %4326 = vst [vmem:[%s278 + $0x7e8] sm:$0xff] %v3942
          %4327 = vst [vmem:[%s278 + $0x7f0] sm:$0xff] %v3943
          %4328 = vst [vmem:[%s278 + $0x7f8] sm:$0xff] %v3944
          %4329 = vst [vmem:[%s278 + $0x800] sm:$0xff] %v3945
          %4330 = vst [vmem:[%s278 + $0x808] sm:$0xff] %v3946
          %4331 = vst [vmem:[%s278 + $0x810] sm:$0xff] %v3947
          %4332 = vst [vmem:[%s278 + $0x818] sm:$0xff] %v3948
          %4333 = vst [vmem:[%s278 + $0x820] sm:$0xff] %v3949
          %4334 = vst [vmem:[%s278 + $0x828] sm:$0xff] %v3950
          %4335 = vst [vmem:[%s278 + $0x830] sm:$0xff] %v3951
          %4336 = vst [vmem:[%s278 + $0x838] sm:$0xff] %v3952
          %4337 = vst [vmem:[%s278 + $0x840] sm:$0xff] %v3953
          %4338 = vst [vmem:[%s278 + $0x848] sm:$0xff] %v3954
          %4339 = vst [vmem:[%s278 + $0x850] sm:$0xff] %v3955
          %4340 = vst [vmem:[%s278 + $0x858] sm:$0xff] %v3956
          %4341 = vst [vmem:[%s278 + $0x860] sm:$0xff] %v3957
          %4342 = vst [vmem:[%s278 + $0x868] sm:$0xff] %v3958
          %4343 = vst [vmem:[%s278 + $0x870] sm:$0xff] %v3959
          %4344 = vst [vmem:[%s278 + $0x878] sm:$0xff] %v3960
          %4345 = vst [vmem:[%s278 + $0x880] sm:$0xff] %v3961
          %4346 = vst [vmem:[%s278 + $0x888] sm:$0xff] %v3962
          %4347 = vst [vmem:[%s278 + $0x890] sm:$0xff] %v3963
          %4348 = vst [vmem:[%s278 + $0x898] sm:$0xff] %v3964
          %4349 = vst [vmem:[%s278 + $0x8a0] sm:$0xff] %v3965
          %4350 = vst [vmem:[%s278 + $0x8a8] sm:$0xff] %v3966
          %4351 = vst [vmem:[%s278 + $0x8b0] sm:$0xff] %v3967
          %4352 = vst [vmem:[%s278 + $0x8b8] sm:$0xff] %v3968
          %4353 = vst [vmem:[%s278 + $0x8c0] sm:$0xff] %v3969
          %4354 = vst [vmem:[%s278 + $0x8c8] sm:$0xff] %v3970
          %4355 = vst [vmem:[%s278 + $0x8d0] sm:$0xff] %v3971
          %4356 = vst [vmem:[%s278 + $0x8d8] sm:$0xff] %v3972
          %4357 = vst [vmem:[%s278 + $0x8e0] sm:$0xff] %v3973
          %4358 = vst [vmem:[%s278 + $0x8e8] sm:$0xff] %v3974
          %4359 = vst [vmem:[%s278 + $0x8f0] sm:$0xff] %v3975
          %4360 = vst [vmem:[%s278 + $0x8f8] sm:$0xff] %v3976
          %4361 = vst [vmem:[%s278 + $0x900] sm:$0xff] %v3977
          %4362 = vst [vmem:[%s278 + $0x908] sm:$0xff] %v3978
          %4363 = vst [vmem:[%s278 + $0x910] sm:$0xff] %v3979
          %4364 = vst [vmem:[%s278 + $0x918] sm:$0xff] %v3980
          %4365 = vst [vmem:[%s278 + $0x920] sm:$0xff] %v3981
          %4366 = vst [vmem:[%s278 + $0x928] sm:$0xff] %v3982
          %4367 = vst [vmem:[%s278 + $0x930] sm:$0xff] %v3983
          %4368 = vst [vmem:[%s278 + $0x938] sm:$0xff] %v3984
          %4369 = vst [vmem:[%s278 + $0x940] sm:$0xff] %v3985
          %4370 = vst [vmem:[%s278 + $0x948] sm:$0xff] %v3986
          %4371 = vst [vmem:[%s278 + $0x950] sm:$0xff] %v3987
          %4372 = vst [vmem:[%s278 + $0x958] sm:$0xff] %v3988
          %4373 = vst [vmem:[%s278 + $0x960] sm:$0xff] %v3989
          %4374 = vst [vmem:[%s278 + $0x968] sm:$0xff] %v3990
          %4375 = vst [vmem:[%s278 + $0x970] sm:$0xff] %v3991
          %4376 = vst [vmem:[%s278 + $0x978] sm:$0xff] %v3992
          %4377 = vst [vmem:[%s278 + $0x980] sm:$0xff] %v3993
          %4378 = vst [vmem:[%s278 + $0x988] sm:$0xff] %v3994
          %4379 = vst [vmem:[%s278 + $0x990] sm:$0xff] %v3995
          %4380 = vst [vmem:[%s278 + $0x998] sm:$0xff] %v3996
          %4381 = vst [vmem:[%s278 + $0x9a0] sm:$0xff] %v3997
          %4382 = vst [vmem:[%s278 + $0x9a8] sm:$0xff] %v3998
          %4383 = vst [vmem:[%s278 + $0x9b0] sm:$0xff] %v3999
          %4384 = vst [vmem:[%s278 + $0x9b8] sm:$0xff] %v4000
          %4385 = vst [vmem:[%s278 + $0x9c0] sm:$0xff] %v4001
          %4386 = vst [vmem:[%s278 + $0x9c8] sm:$0xff] %v4002
          %4387 = vst [vmem:[%s278 + $0x9d0] sm:$0xff] %v4003
          %4388 = vst [vmem:[%s278 + $0x9d8] sm:$0xff] %v4004
          %4389 = vst [vmem:[%s278 + $0x9e0] sm:$0xff] %v4005
          %4390 = vst [vmem:[%s278 + $0x9e8] sm:$0xff] %v4006
          %4391 = vst [vmem:[%s278 + $0x9f0] sm:$0xff] %v4007
          %4392 = vst [vmem:[%s278 + $0x9f8] sm:$0xff] %v4008
          %4393 = vst [vmem:[%s278 + $0xa00] sm:$0xff] %v4009
          %4394 = vst [vmem:[%s278 + $0xa08] sm:$0xff] %v4010
          %4395 = vst [vmem:[%s278 + $0xa10] sm:$0xff] %v4011
          %4396 = vst [vmem:[%s278 + $0xa18] sm:$0xff] %v4012
          %4397 = vst [vmem:[%s278 + $0xa20] sm:$0xff] %v4013
          %4398 = vst [vmem:[%s278 + $0xa28] sm:$0xff] %v4014
          %4399 = vst [vmem:[%s278 + $0xa30] sm:$0xff] %v4015
          %4400 = vst [vmem:[%s278 + $0xa38] sm:$0xff] %v4016
          %4401 = vst [vmem:[%s278 + $0xa40] sm:$0xff] %v4017
          %4402 = vst [vmem:[%s278 + $0xa48] sm:$0xff] %v4018
          %4403 = vst [vmem:[%s278 + $0xa50] sm:$0xff] %v4019
          %4404 = vst [vmem:[%s278 + $0xa58] sm:$0xff] %v4020
          %4405 = vst [vmem:[%s278 + $0xa60] sm:$0xff] %v4021
          %4406 = vst [vmem:[%s278 + $0xa68] sm:$0xff] %v4022
          %4407 = vst [vmem:[%s278 + $0xa70] sm:$0xff] %v4023
          %4408 = vst [vmem:[%s278 + $0xa78] sm:$0xff] %v4024
          %4409 = vst [vmem:[%s278 + $0xa80] sm:$0xff] %v4025
          %4410 = vst [vmem:[%s278 + $0xa88] sm:$0xff] %v4026
          %4411 = vst [vmem:[%s278 + $0xa90] sm:$0xff] %v4027
          %4412 = vst [vmem:[%s278 + $0xa98] sm:$0xff] %v4028
          %4413 = vst [vmem:[%s278 + $0xaa0] sm:$0xff] %v4029
          %4414 = vst [vmem:[%s278 + $0xaa8] sm:$0xff] %v4030
          %4415 = vst [vmem:[%s278 + $0xab0] sm:$0xff] %v4031
          %4416 = vst [vmem:[%s278 + $0xab8] sm:$0xff] %v4032
          %4417 = vst [vmem:[%s278 + $0xac0] sm:$0xff] %v4033
          %4418 = vst [vmem:[%s278 + $0xac8] sm:$0xff] %v4034
          %4419 = vst [vmem:[%s278 + $0xad0] sm:$0xff] %v4035
          %4420 = vst [vmem:[%s278 + $0xad8] sm:$0xff] %v4036
          %4421 = vst [vmem:[%s278 + $0xae0] sm:$0xff] %v4037
          %4422 = vst [vmem:[%s278 + $0xae8] sm:$0xff] %v4038
          %4423 = vst [vmem:[%s278 + $0xaf0] sm:$0xff] %v4039
          %4424 = vst [vmem:[%s278 + $0xaf8] sm:$0xff] %v4040
          %4425 = vst [vmem:[%s278 + $0xb00] sm:$0xff] %v4041
          %4426 = vst [vmem:[%s278 + $0xb08] sm:$0xff] %v4042
          %4427 = vst [vmem:[%s278 + $0xb10] sm:$0xff] %v4043
          %4428 = vst [vmem:[%s278 + $0xb18] sm:$0xff] %v4044
          %4429 = vst [vmem:[%s278 + $0xb20] sm:$0xff] %v4045
          %4430 = vst [vmem:[%s278 + $0xb28] sm:$0xff] %v4046
          %4431 = vst [vmem:[%s278 + $0xb30] sm:$0xff] %v4047
          %4432 = vst [vmem:[%s278 + $0xb38] sm:$0xff] %v4048
          %4433 = vst [vmem:[%s278 + $0xb40] sm:$0xff] %v4049
          %4434 = vst [vmem:[%s278 + $0xb48] sm:$0xff] %v4050
          %4435 = vst [vmem:[%s278 + $0xb50] sm:$0xff] %v4051
          %4436 = vst [vmem:[%s278 + $0xb58] sm:$0xff] %v4052
          %4437 = vst [vmem:[%s278 + $0xb60] sm:$0xff] %v4053
          %4438 = vst [vmem:[%s278 + $0xb68] sm:$0xff] %v4054
          %4439 = vst [vmem:[%s278 + $0xb70] sm:$0xff] %v4055
          %4440 = vst [vmem:[%s278 + $0xb78] sm:$0xff] %v4056
          %4441 = vst [vmem:[%s278 + $0xb80] sm:$0xff] %v4057
          %4442 = vst [vmem:[%s278 + $0xb88] sm:$0xff] %v4058
          %4443 = vst [vmem:[%s278 + $0xb90] sm:$0xff] %v4059
          %4444 = vst [vmem:[%s278 + $0xb98] sm:$0xff] %v4060
          %4445 = vst [vmem:[%s278 + $0xba0] sm:$0xff] %v4061
          %4446 = vst [vmem:[%s278 + $0xba8] sm:$0xff] %v4062
          %4447 = vst [vmem:[%s278 + $0xbb0] sm:$0xff] %v4063
          %4448 = vst [vmem:[%s278 + $0xbb8] sm:$0xff] %v4064
          %4449 = vst [vmem:[%s278 + $0xbc0] sm:$0xff] %v4065
          %4450 = vst [vmem:[%s278 + $0xbc8] sm:$0xff] %v4066
          %4451 = vst [vmem:[%s278 + $0xbd0] sm:$0xff] %v4067
          %4452 = vst [vmem:[%s278 + $0xbd8] sm:$0xff] %v4068
          %4453 = vst [vmem:[%s278 + $0xbe0] sm:$0xff] %v4069
          %4454 = vst [vmem:[%s278 + $0xbe8] sm:$0xff] %v4070
          %4455 = vst [vmem:[%s278 + $0xbf0] sm:$0xff] %v4071
          %4456 = vst [vmem:[%s278 + $0xbf8] sm:$0xff] %v4072
        $region52: #{tpu_custom_call.1} parent=31 // pred_fallthru
          _
        %s4457 = sand.u32 %s134, 1
        %s4458 = scalar_lea.sflag [#allocation5], %s4457
        %s4459 = sand.u32 %s134, 1
        %s4460 = smul.addr %s4459, 3072
        %s4461 = scalar_lea.vmem [#allocation9], %s4460
        // Predicated region
        $region53: #{tpu_custom_call.1} parent=31 // pred_check
          %p4462 = pneg %p144
        $region54: #{tpu_custom_call.1} parent=31 // pred_check_branch
          %4464 = sbr.rel (%p4462) target = $region56
        $region55: #{tpu_custom_call.1} parent=31 // pred_region
          %s4465 = smul.u32 64, %s28
          %s4466 = smul.u32 6, %s29
          %s4468 = ssub.s32 49152, 49152
          %4469 = vsyncadd %s4458, %s4468
          %s4470 = smul.addr %s4465, 6
          %s4471 = sadd.s32 %s4466, %s4470
          %s4472 = smul.addr %s4471, 128
          %s4473 = scalar_lea.hbm %s3, %s4472
          %s4474 = sshll.u32 %s4461, 4
          %s4475 = int_to_ptr.vmem [resolvable:$true] %s4474
          %4480 = dma.vmem_to_hbm [thread:$0]  %s4475, 49152, %s4473, %s4458, 768, 768, 48
        $region56: #{tpu_custom_call.1} parent=31 // pred_fallthru
          _
      $region32: #{tpu_custom_call.1} parent=5 // pred_fallthru
        _
      %p4481 = scmp.le.s32.totalorder 2, %s18
      // Predicated region
      $region57: #{tpu_custom_call.1} parent=5 // pred_check
        %p4482 = pneg %p4481
      $region58: #{tpu_custom_call.1} parent=5 // pred_check_branch
        %4484 = sbr.rel (%p4482) target = $region60
      $region59: #{tpu_custom_call.1} parent=5 // pred_region
        %s4485 = ssub.s32 %s18, 2
        // Predicated region
        $region61: #{tpu_custom_call.1} parent=59 // pred_check
          %p4486 = pneg %p150
        $region62: #{tpu_custom_call.1} parent=59 // pred_check_branch
          %4488 = sbr.rel (%p4486) target = $region64
        $region63: #{tpu_custom_call.1} parent=59 // pred_region
          %s4489 = sand.u32 %s135, 1
          %s4490 = scalar_lea.sflag [#allocation5], %s4489
          %s4491 = sand.u32 %s135, 1
          %s4492 = smul.addr %s4491, 3072
          %s4493 = scalar_lea.vmem [#allocation9], %s4492
          %4494 = dma.done %s4490, 49152
        $region64: #{tpu_custom_call.1} parent=59 // pred_fallthru
          _
      $region60: #{tpu_custom_call.1} parent=5 // pred_fallthru
        _
    $region6: #{tpu_custom_call.1} parent=1 // loop_footer
      %s22 = sadd.s32 1, %s18
    $region7: #{tpu_custom_call.1} parent=1 // loop_footer_branch
      %17 = sbr.rel target = $region3
    $region8: #{tpu_custom_call.1} parent=1 // loop_exit
      _
    %4495 = vsyncpa [#allocation4], 1
    %s4496 = scalar_lea.sflag [#allocation4], 1
    %4497 = vsyncpa %s4496, 1
    %4498 = vsyncpa [#allocation7], 1
    %s4499 = scalar_lea.sflag [#allocation7], 1
    %4500 = vsyncpa %s4499, 1
    %4501 = vsyncpa [#allocation5], 1
    %s4502 = scalar_lea.sflag [#allocation5], 1
    %4503 = vsyncpa %s4502, 1

</llo_original>
